<compile_context>
chip_gen: v7x
topology: tpu7x:2x2x1
jax: 0.10.0
libtpu: 0.0.40
codegen_flags: <defaults>
</compile_context>

<pallas_src>
import functools

import jax
import jax.numpy as jnp
import numpy as np
from jax.experimental import pallas as pl
from jax.experimental.pallas import tpu as pltpu


WINDOW_SIZE_LIST = [7, 15, 31, 63, 127]
INIT_K = 0.2
INIT_R = 0.5


# ----------------------------------------------------------------------------- helpers
def _get_max_size(window_size_list):
    mh, mw = 0, 0
    for hw in window_size_list:
        if isinstance(hw, int):
            h = w = hw
        else:
            h, w = hw[:2]
        mh = max(h, mh)
        mw = max(w, mw)
    return mh, mw


def _window_offsets(window_size_list, H, W, H_p, W_p, max_wh, max_ww):
    """Per-window (top, left, bot, right) corner offsets into the padded integral
    image -- exact reproduction of the torch index arithmetic."""
    offs = []
    for hw in window_size_list:
        if isinstance(hw, int):
            height = width = hw
        else:
            height, width = hw[:2]
        top = max_wh // 2 - height // 2
        bot = top + height
        left = max_ww // 2 - width // 2
        right = left + width
        top_0 = (-max_wh) // 2 - height // 2 - 1
        left_0 = (-max_ww) // 2 - width // 2 - 1
        # torch slices ii[top:top_0], ii[left:left_0] must have exactly H / W elements.
        assert (H_p + top_0) - top == H, "unsupported (non-square / even) window config"
        assert (W_p + left_0) - left == W, "unsupported (non-square / even) window config"
        assert top >= 0 and left >= 0 and bot + H <= H_p and right + W <= W_p
        offs.append((top, left, bot, right))
    return tuple(offs)


def _vmem_capacity_bytes():
    """Per-TensorCore VMEM capacity (generation aware); conservative fallback."""
    try:
        cap = int(getattr(pltpu.get_tpu_info(), "vmem_capacity_bytes", 0))
        if cap > 0:
            return cap
    except Exception:      # off-TPU / older jax: assume the smallest (v7x per-core)
        pass
    return 64 << 20


def _pick_batch_tile(B, per_b_scratch_bytes, scratch_budget_bytes):
    """Largest batch tile whose two integral-image scratch slabs fit the budget,
    keeping >= 2 steps on the parallel axis and preferring an EVEN number of
    parallel steps (v7x: 2 TensorCores per chip)."""
    cap = max(1, scratch_budget_bytes // max(1, per_b_scratch_bytes))
    bt = max(1, min(B, 8, cap))
    if B >= 2:
        bt = min(bt, -(-B // 2))
    for cand in range(bt, 0, -1):
        if (-(-B // cand)) % 2 == 0:
            return cand
    return bt


def _vmem_limit_bytes(bt, H, WC, H_p, W_pC, vmem_cap):
    f32 = 4
    scratch = 2 * bt * H_p * W_pC * f32                    # persistent integral images
    blocks = 2 * f32 * (bt * H * WC                        # x tile (double buffered)
                        + WC * W_pC                        # column-integration matrix
                        + H * WC                           # inv_cnt plane
                        + bt * H * WC)                     # out tile
    temps = 12 * bt * H * W_pC * f32                       # build / window-step temps
    est = int(1.5 * (scratch + blocks + temps)) + (8 << 20)
    hi = vmem_cap - (8 << 20)                              # leave headroom per core
    return int(max(16 << 20, min(est, hi)))


# ----------------------------------------------------------------------------- kernel
def _sauvola_kernel(c0_ref, c1_ref, x_ref, cmat_ref, invcnt_ref, out_ref,
                    xii_ref, x2ii_ref, *, offsets, H, W, C, pad_h):
    """One (batch-tile, window) grid step.

    c0_ref, c1_ref : (n_wins,) f32 SMEM        -- 1-k and k/R (scalar prefetch)
    x_ref          : (bt, H, W*C) f32          -- channel-interleaved pixels
    cmat_ref       : (W*C, W_p*C) f32          -- Kron(col staircase, I_C)
    invcnt_ref     : (1, H, W*C) f32           -- 1 / window pixel count (this window)
    out_ref        : (bt, 1, H, W*C) f32
    xii_ref/x2ii_ref : (bt, H_p, W_p*C) f32 VMEM scratch, persistent across windows
    """
    w = pl.program_id(1)
    WC = W * C

    # Build padded integral images for this batch tile once (window step 0) on the
    # MXU; later window steps reuse them from VMEM scratch.
    @pl.when(w == 0)
    def _build_integral_images():
        H_p = xii_ref.shape[1]
        # Row-integration "staircase" generated in-kernel (no HBM stream, no VMEM
        # double-buffer):  A[p, h] = 1  iff  h <= p - pad_h.
        p_idx = jax.lax.broadcasted_iota(jnp.int32, (H_p, H), 0)
        h_idx = jax.lax.broadcasted_iota(jnp.int32, (H_p, H), 1)
        a_mat = jnp.where(h_idx <= p_idx - pad_h, jnp.float32(1.0), jnp.float32(0.0))
        cmat = cmat_ref[...]                                  # (WC, W_pC)

        def body(b, carry):                                   # fori_loop, not Python unroll
            xb = x_ref[b]                                     # (H, WC)
            s1 = jnp.dot(xb, cmat, preferred_element_type=jnp.float32)
            xii_ref[b] = jnp.dot(a_mat, s1, preferred_element_type=jnp.float32)
            xb2 = xb * xb
            s2 = jnp.dot(xb2, cmat, preferred_element_type=jnp.float32)
            x2ii_ref[b] = jnp.dot(a_mat, s2, preferred_element_type=jnp.float32)
            return carry

        jax.lax.fori_loop(0, x_ref.shape[0], body, 0)

    inv_cnt = invcnt_ref[0]                                   # (H, WC)

    # Static dispatch on the window grid index -> every slice offset stays static.
    for i, (top, left, bot, right) in enumerate(offsets):

        @pl.when(w == i)
        def _one_window(top=top, left=left, bot=bot, right=right, i=i):
            base = left * C
            off = (right - left) * C
            base_al = (base // 128) * 128        # lane-aligned load start
            lo = base - base_al
            span = lo + off + WC                 # only the columns actually needed

            # Row difference (sublane-shifted slices), trimmed to the used columns...
            rd_x = (xii_ref[:, pl.ds(bot, H), pl.ds(base_al, span)]
                    - xii_ref[:, pl.ds(top, H), pl.ds(base_al, span)])
            rd_x2 = (x2ii_ref[:, pl.ds(bot, H), pl.ds(base_al, span)]
                     - x2ii_ref[:, pl.ds(top, H), pl.ds(base_al, span)])
            # ...then column difference (static lane slices).
            s_x = rd_x[:, :, lo + off:lo + off + WC] - rd_x[:, :, lo:lo + WC]
            s_x2 = rd_x2[:, :, lo + off:lo + off + WC] - rd_x2[:, :, lo:lo + WC]

            e_x = s_x * inv_cnt                  # no divides: counts inverted on host
            e_x2 = s_x2 * inv_cnt
            dev = jnp.sqrt(jnp.maximum(e_x2 - e_x * e_x, jnp.float32(1e-6)))
            # T = E_x*(1 + k*(dev/R - 1)) = E_x * ((1-k) + (k/R)*dev)
            out_ref[:, 0, :, :] = e_x * (c0_ref[i] + dev * c1_ref[i])


# ----------------------------------------------------------------------------- wrapper
def sauvola_multi_window(x_nhwc, k_param, r_param,
                         window_size_list=WINDOW_SIZE_LIST, batch_tile=None):
    B, H, W, C = x_nhwc.shape
    n_wins = len(window_size_list)
    max_wh, max_ww = _get_max_size(window_size_list)
    # torch F.pad([0,0, wh,wh, ww,ww, 0,0]) on NHWC pads W by max_wh//2+1 and H by
    # max_ww//2+1 (swapped in the torch code, kept verbatim; identical for the
    # square default windows).
    pad_h = max_ww // 2 + 1
    pad_w = max_wh // 2 + 1
    H_p, W_p = H + 2 * pad_h, W + 2 * pad_w
    WC, W_pC = W * C, W_p * C
    offsets = _window_offsets(window_size_list, H, W, H_p, W_p, max_wh, max_ww)

    # ---- shape-only constants (numpy -> folded at trace time) ---------------------
    # Column-integration matrix, channel-interleaved: x_flat @ Kron(S, I_C) performs
    # an independent zero-padded column prefix sum per channel.
    S = (np.arange(W)[:, None] <= (np.arange(W_p)[None, :] - pad_w)).astype(np.float32)
    CMAT = np.kron(S, np.eye(C, dtype=np.float32))            # (W*C, W_p*C)

    # Per-window inverse pixel counts: exact in float64 (counts are small integers),
    # channel-interleaved so one broadcast multiply covers all channels.
    ones_pad = np.zeros((H_p, W_p), np.float64)
    ones_pad[pad_h:pad_h + H, pad_w:pad_w + W] = 1.0
    cii = np.cumsum(np.cumsum(ones_pad, axis=0), axis=1)
    inv_cnt = np.stack([
        1.0 / (cii[top:top + H, left:left + W] + cii[bot:bot + H, right:right + W]
               - cii[top:top + H, right:right + W] - cii[bot:bot + H, left:left + W])
        for (top, left, bot, right) in offsets
    ]).astype(np.float32)                                      # (n_wins, H, W)
    inv_cnt = np.repeat(inv_cnt, C, axis=-1)                   # (n_wins, H, W*C)

    # ---- fold Sauvola parameters:  T = E_x*(1-k) + E_x*dev*(k/R) ------------------
    k = k_param.reshape(n_wins).astype(jnp.float32)
    r = r_param.reshape(n_wins).astype(jnp.float32)
    c0 = 1.0 - k
    c1 = k / r

    # ---- (B, H, W, C) -> (B, H, W*C): free reshape, channels stay on lanes --------
    x = x_nhwc.astype(jnp.float32).reshape(B, H, WC)

    vmem_cap = _vmem_capacity_bytes()
    per_b_scratch = 2 * H_p * W_pC * 4
    if batch_tile is None:
        batch_tile = _pick_batch_tile(B, per_b_scratch,
                                      max(8 << 20, int(0.4 * vmem_cap)))
    n_b = -(-B // batch_tile)
    B_pad = n_b * batch_tile
    if B_pad != B:
        # TODO(synk): padded batch rows are computed and written then sliced off.
        x = jnp.pad(x, ((0, B_pad - B), (0, 0), (0, 0)))

    kernel = functools.partial(_sauvola_kernel, offsets=offsets, H=H, W=W, C=C,
                               pad_h=pad_h)

    grid_spec = pltpu.PrefetchScalarGridSpec(
        num_scalar_prefetch=2,                  # c0, c1 -> SMEM
        grid=(n_b, n_wins),                     # window axis innermost (reuses scratch)
        in_specs=[
            pl.BlockSpec((batch_tile, H, WC), lambda b, w, c0r, c1r: (b, 0, 0)),  # x
            pl.BlockSpec((WC, W_pC), lambda b, w, c0r, c1r: (0, 0)),              # CMAT
            pl.BlockSpec((1, H, WC), lambda b, w, c0r, c1r: (w, 0, 0)),           # 1/cnt
        ],
        out_specs=pl.BlockSpec((batch_tile, 1, H, WC),
                               lambda b, w, c0r, c1r: (b, w, 0, 0)),
        scratch_shapes=[
            pltpu.VMEM((batch_tile, H_p, W_pC), jnp.float32),   # integral image of x
            pltpu.VMEM((batch_tile, H_p, W_pC), jnp.float32),   # integral image of x^2
        ],
    )

    build_flops = 4 * B_pad * (H * WC * W_pC + H_p * H * W_pC)
    window_flops = 12 * n_wins * B_pad * H * WC
    cost = pl.CostEstimate(
        flops=int(build_flops + window_flops),
        transcendentals=int(n_wins * B_pad * H * WC),
        bytes_accessed=int(4 * (B_pad * H * WC + WC * W_pC + n_wins * H * WC
                                + n_wins * B_pad * H * WC)),
    )

    out = pl.pallas_call(
        kernel,
        out_shape=jax.ShapeDtypeStruct((B_pad, n_wins, H, WC), jnp.float32),
        grid_spec=grid_spec,
        compiler_params=pltpu.CompilerParams(
            dimension_semantics=("parallel", "arbitrary"),
            vmem_limit_bytes=_vmem_limit_bytes(batch_tile, H, WC, H_p, W_pC, vmem_cap),
        ),
        cost_estimate=cost,
    )(c0, c1, x, jnp.asarray(CMAT), jnp.asarray(inv_cnt))

    # (B_pad, n_wins, H, W*C) -> (B, n_wins, H, W, C): slice + free reshape only.
    return out[:B].reshape(B, n_wins, H, W, C)


# ----------------------------------------------------------------------------- pure-jnp reference
def _sauvola_reference_nhwc(x, window_size_list, k_param, r_param):
    """Direct jnp port of the torch forward (f32 instead of f64)."""
    max_wh, max_ww = _get_max_size(window_size_list)
    ph = max_ww // 2 + 1
    pw = max_wh // 2 + 1
    x = x.astype(jnp.float32)

    def integral(z):
        zp = jnp.pad(z, ((0, 0), (ph, ph), (pw, pw), (0, 0)))
        return jnp.cumsum(jnp.cumsum(zp, axis=1), axis=2)

    def all_sizes(z):
        z_ii = integral(z)
        c_ii = integral(jnp.ones_like(z[:1, ..., :1]))
        outs = []
        for hw in window_size_list:
            if isinstance(hw, int):
                height = width = hw
            else:
                height, width = hw[:2]
            top = max_wh // 2 - height // 2
            bot = top + height
            left = max_ww // 2 - width // 2
            right = left + width
            top_0 = (-max_wh) // 2 - height // 2 - 1
            bot_0 = top_0 + height
            left_0 = (-max_ww) // 2 - width // 2 - 1
            right_0 = left_0 + width

            def box(a):
                return (a[:, top:top_0, left:left_0]
                        + a[:, bot:bot_0, right:right_0]
                        - a[:, top:top_0, right:right_0]
                        - a[:, bot:bot_0, left:left_0])

            outs.append(box(z_ii) / box(c_ii))
        return jnp.stack(outs, axis=1)

    E_x = all_sizes(x)
    E_x2 = all_sizes(x * x)
    dev = jnp.sqrt(jnp.maximum(E_x2 - E_x ** 2, jnp.float32(1e-6)))
    return (E_x * (1.0 + k_param * (dev / r_param - 1.0))).astype(jnp.float32)


# ----------------------------------------------------------------------------- main
if __name__ == "__main__":
    key = jax.random.PRNGKey(0)
    B, H, W, C = 2, 16, 16, 4
    # "normalized image" in [0, 1), matching the module's assumption
    x = jax.random.uniform(key, (B, H, W, C), dtype=jnp.float32)

    n_wins = len(WINDOW_SIZE_LIST)
    # deterministic parameter init: k and R as in the torch module __init__
    k_param = jnp.full((1, n_wins, 1, 1, 1), INIT_K, dtype=jnp.float32)
    r_param = jnp.full((1, n_wins, 1, 1, 1), INIT_R, dtype=jnp.float32)

    fn = jax.jit(functools.partial(sauvola_multi_window,
                                   window_size_list=WINDOW_SIZE_LIST))
    out = jax.block_until_ready(fn(x, k_param, r_param))

    assert out.shape == (B, n_wins, H, W, C), out.shape
    assert out.dtype == jnp.float32, out.dtype

    ref = jax.block_until_ready(
        _sauvola_reference_nhwc(x, WINDOW_SIZE_LIST, k_param, r_param))
    np.testing.assert_allclose(np.asarray(out), np.asarray(ref),
                               rtol=2e-4, atol=2e-4)

    print("KERNEL_OK")
</pallas_src>

<mosaic_0001>
module attributes {stable_mosaic.version = 11 : i64} {
  func.func @_sauvola_kernel(%arg0: i32, %arg1: i32, %arg2: memref<5xf32, #tpu.memory_space<smem>>, %arg3: memref<5xf32, #tpu.memory_space<smem>>, %arg4: memref<1x16x64xf32, #tpu.memory_space<vmem>>, %arg5: memref<64x576xf32, #tpu.memory_space<vmem>>, %arg6: memref<1x16x64xf32, #tpu.memory_space<vmem>>, %arg7: memref<1x1x16x64xf32, #tpu.memory_space<vmem>>, %arg8: memref<1x144x576xf32, #tpu.memory_space<vmem>>, %arg9: memref<1x144x576xf32, #tpu.memory_space<vmem>>) attributes {dimension_semantics = [#tpu.dimension_semantics<parallel>, #tpu.dimension_semantics<arbitrary>], iteration_bounds = array<i64: 2, 5>, scalar_prefetch = 2 : i64, scratch_operands = 2 : i64, tpu.core_type = #tpu.core_type<tc>, window_params = [{transform_indices = @transform_0, window_bounds = array<i64: 1, 16, 64>}, {pipeline_mode = #tpu.pipeline_mode<synchronous>, transform_indices = @transform_1, window_bounds = array<i64: 64, 576>}, {transform_indices = @transform_2, window_bounds = array<i64: 1, 16, 64>}, {transform_indices = @transform_3, window_bounds = array<i64: 1, 1, 16, 64>}]} {
    %c0_i32 = arith.constant 0 : i32
    %0 = arith.cmpi eq, %arg1, %c0_i32 : i32
    %1 = arith.extui %0 : i1 to i32
    %c0_i32_0 = arith.constant 0 : i32
    %2 = arith.cmpi ne, %1, %c0_i32_0 : i32
    scf.if %2 {
      %20 = tpu.iota {dimensions = array<i32: 0>} : vector<144x16xi32>
      %21 = tpu.iota {dimensions = array<i32: 1>} : vector<144x16xi32>
      %c64_i32 = arith.constant 64 : i32
      %22 = vector.broadcast %c64_i32 : i32 to vector<144x16xi32>
      %23 = arith.subi %20, %22 : vector<144x16xi32>
      %24 = arith.cmpi sle, %21, %23 : vector<144x16xi32>
      %cst = arith.constant 1.000000e+00 : f32
      %cst_9 = arith.constant 0.000000e+00 : f32
      %25 = vector.broadcast %cst : f32 to vector<144x16xf32>
      %26 = vector.broadcast %cst_9 : f32 to vector<144x16xf32>
      %27 = arith.select %24, %25, %26 : vector<144x16xi1>, vector<144x16xf32>
      %c0_10 = arith.constant 0 : index
      %c0_11 = arith.constant 0 : index
      %28 = vector.load %arg5[%c0_10, %c0_11] : memref<64x576xf32, #tpu.memory_space<vmem>>, vector<64x576xf32>
      %c0_i32_12 = arith.constant 0 : i32
      %29 = arith.index_cast %c0_i32_12 : i32 to index
      %c0_13 = arith.constant 0 : index
      %c0_14 = arith.constant 0 : index
      %30 = vector.load %arg4[%29, %c0_13, %c0_14] : memref<1x16x64xf32, #tpu.memory_space<vmem>>, vector<1x16x64xf32>
      %31 = vector.shape_cast %30 : vector<1x16x64xf32> to vector<16x64xf32>
      %cst_15 = arith.constant dense<0.000000e+00> : vector<16x576xf32>
      %32 = tpu.matmul %31, %28, %cst_15 {dimension_numbers = #tpu.dot_dimension_numbers<[1], [0], [0], [1], [0, 0, 1, 1], [], []>} : vector<16x64xf32>, vector<64x576xf32>, vector<16x576xf32> -> vector<16x576xf32>
      %cst_16 = arith.constant dense<0.000000e+00> : vector<144x576xf32>
      %33 = tpu.matmul %27, %32, %cst_16 {dimension_numbers = #tpu.dot_dimension_numbers<[1], [0], [0], [1], [0, 0, 1, 1], [], []>} : vector<144x16xf32>, vector<16x576xf32>, vector<144x576xf32> -> vector<144x576xf32>
      %34 = arith.index_cast %c0_i32_12 : i32 to index
      %c0_17 = arith.constant 0 : index
      %c0_18 = arith.constant 0 : index
      %35 = vector.load %arg8[%34, %c0_17, %c0_18] : memref<1x144x576xf32, #tpu.memory_space<vmem>>, vector<1x144x576xf32>
      %36 = vector.shape_cast %35 : vector<1x144x576xf32> to vector<144x576xf32>
      %37 = vector.shape_cast %33 : vector<144x576xf32> to vector<1x144x576xf32>
      tpu.vector_store %arg8[%34, %c0_17, %c0_18], %37 {strides = array<i32>} : memref<1x144x576xf32, #tpu.memory_space<vmem>>, vector<1x144x576xf32>,
      %38 = arith.mulf %31, %31 : vector<16x64xf32>
      %cst_19 = arith.constant dense<0.000000e+00> : vector<16x576xf32>
      %39 = tpu.matmul %38, %28, %cst_19 {dimension_numbers = #tpu.dot_dimension_numbers<[1], [0], [0], [1], [0, 0, 1, 1], [], []>} : vector<16x64xf32>, vector<64x576xf32>, vector<16x576xf32> -> vector<16x576xf32>
      %cst_20 = arith.constant dense<0.000000e+00> : vector<144x576xf32>
      %40 = tpu.matmul %27, %39, %cst_20 {dimension_numbers = #tpu.dot_dimension_numbers<[1], [0], [0], [1], [0, 0, 1, 1], [], []>} : vector<144x16xf32>, vector<16x576xf32>, vector<144x576xf32> -> vector<144x576xf32>
      %41 = arith.index_cast %c0_i32_12 : i32 to index
      %c0_21 = arith.constant 0 : index
      %c0_22 = arith.constant 0 : index
      %42 = vector.load %arg9[%41, %c0_21, %c0_22] : memref<1x144x576xf32, #tpu.memory_space<vmem>>, vector<1x144x576xf32>
      %43 = vector.shape_cast %42 : vector<1x144x576xf32> to vector<144x576xf32>
      %44 = vector.shape_cast %40 : vector<144x576xf32> to vector<1x144x576xf32>
      tpu.vector_store %arg9[%41, %c0_21, %c0_22], %44 {strides = array<i32>} : memref<1x144x576xf32, #tpu.memory_space<vmem>>, vector<1x144x576xf32>,
      %c1_i32_23 = arith.constant 1 : i32
    } else {
    }
    %c0 = arith.constant 0 : index
    %c0_1 = arith.constant 0 : index
    %c0_2 = arith.constant 0 : index
    %3 = vector.load %arg6[%c0, %c0_1, %c0_2] : memref<1x16x64xf32, #tpu.memory_space<vmem>>, vector<1x16x64xf32>
    %4 = vector.shape_cast %3 : vector<1x16x64xf32> to vector<16x64xf32>
    %c0_i32_3 = arith.constant 0 : i32
    %5 = arith.cmpi eq, %arg1, %c0_i32_3 : i32
    %6 = arith.extui %5 : i1 to i32
    %c0_i32_4 = arith.constant 0 : i32
    %7 = arith.cmpi ne, %6, %c0_i32_4 : i32
    scf.if %7 {
      %c0_9 = arith.constant 0 : index
      %c67 = arith.constant 67 : index
      %c128 = arith.constant 128 : index
      %20 = vector.load %arg8[%c0_9, %c67, %c128] : memref<1x144x576xf32, #tpu.memory_space<vmem>>, vector<1x16x204xf32>
      %c0_10 = arith.constant 0 : index
      %c60 = arith.constant 60 : index
      %c128_11 = arith.constant 128 : index
      %21 = vector.load %arg8[%c0_10, %c60, %c128_11] : memref<1x144x576xf32, #tpu.memory_space<vmem>>, vector<1x16x204xf32>
      %22 = arith.subf %20, %21 : vector<1x16x204xf32>
      %c0_12 = arith.constant 0 : index
      %c67_13 = arith.constant 67 : index
      %c128_14 = arith.constant 128 : index
      %23 = vector.load %arg9[%c0_12, %c67_13, %c128_14] : memref<1x144x576xf32, #tpu.memory_space<vmem>>, vector<1x16x204xf32>
      %c0_15 = arith.constant 0 : index
      %c60_16 = arith.constant 60 : index
      %c128_17 = arith.constant 128 : index
      %24 = vector.load %arg9[%c0_15, %c60_16, %c128_17] : memref<1x144x576xf32, #tpu.memory_space<vmem>>, vector<1x16x204xf32>
      %25 = arith.subf %23, %24 : vector<1x16x204xf32>
      %26 = vector.extract_strided_slice %22 {offsets = [0, 0, 140], sizes = [1, 16, 64], strides = [1, 1, 1]} : vector<1x16x204xf32> to vector<1x16x64xf32>
      %27 = vector.extract_strided_slice %22 {offsets = [0, 0, 112], sizes = [1, 16, 64], strides = [1, 1, 1]} : vector<1x16x204xf32> to vector<1x16x64xf32>
      %28 = arith.subf %26, %27 : vector<1x16x64xf32>
      %29 = vector.extract_strided_slice %25 {offsets = [0, 0, 140], sizes = [1, 16, 64], strides = [1, 1, 1]} : vector<1x16x204xf32> to vector<1x16x64xf32>
      %30 = vector.extract_strided_slice %25 {offsets = [0, 0, 112], sizes = [1, 16, 64], strides = [1, 1, 1]} : vector<1x16x204xf32> to vector<1x16x64xf32>
      %31 = arith.subf %29, %30 : vector<1x16x64xf32>
      %32 = vector.shape_cast %4 : vector<16x64xf32> to vector<1x16x64xf32>
      %33 = arith.mulf %28, %32 : vector<1x16x64xf32>
      %34 = vector.shape_cast %4 : vector<16x64xf32> to vector<1x16x64xf32>
      %35 = arith.mulf %31, %34 : vector<1x16x64xf32>
      %36 = arith.mulf %33, %33 : vector<1x16x64xf32>
      %37 = arith.subf %35, %36 : vector<1x16x64xf32>
      %cst = arith.constant 9.99999997E-7 : f32
      %38 = vector.broadcast %cst : f32 to vector<1x16x64xf32>
      %39 = arith.maximumf %37, %38 : vector<1x16x64xf32>
      %40 = math.sqrt %39 : vector<1x16x64xf32>
      %c0_18 = arith.constant 0 : index
      %41 = memref.load %arg2[%c0_18] : memref<5xf32, #tpu.memory_space<smem>>
      %c0_19 = arith.constant 0 : index
      %42 = memref.load %arg3[%c0_19] : memref<5xf32, #tpu.memory_space<smem>>
      %43 = vector.broadcast %42 : f32 to vector<1x16x64xf32>
      %44 = arith.mulf %40, %43 : vector<1x16x64xf32>
      %45 = vector.broadcast %41 : f32 to vector<1x16x64xf32>
      %46 = arith.addf %45, %44 : vector<1x16x64xf32>
      %47 = arith.mulf %33, %46 : vector<1x16x64xf32>
      %c0_20 = arith.constant 0 : index
      %c0_21 = arith.constant 0 : index
      %c0_22 = arith.constant 0 : index
      %c0_23 = arith.constant 0 : index
      %48 = vector.load %arg7[%c0_20, %c0_21, %c0_22, %c0_23] : memref<1x1x16x64xf32, #tpu.memory_space<vmem>>, vector<1x1x16x64xf32>
      %49 = vector.shape_cast %48 : vector<1x1x16x64xf32> to vector<1x16x64xf32>
      %50 = vector.shape_cast %47 : vector<1x16x64xf32> to vector<1x1x16x64xf32>
      tpu.vector_store %arg7[%c0_20, %c0_21, %c0_22, %c0_23], %50 {strides = array<i32>} : memref<1x1x16x64xf32, #tpu.memory_space<vmem>>, vector<1x1x16x64xf32>,
    } else {
    }
    %c1_i32 = arith.constant 1 : i32
    %8 = arith.cmpi eq, %arg1, %c1_i32 : i32
    %9 = arith.extui %8 : i1 to i32
    %c0_i32_5 = arith.constant 0 : i32
    %10 = arith.cmpi ne, %9, %c0_i32_5 : i32
    scf.if %10 {
      %c0_9 = arith.constant 0 : index
      %c71 = arith.constant 71 : index
      %c128 = arith.constant 128 : index
      %20 = vector.load %arg8[%c0_9, %c71, %c128] : memref<1x144x576xf32, #tpu.memory_space<vmem>>, vector<1x16x220xf32>
      %c0_10 = arith.constant 0 : index
      %c56 = arith.constant 56 : index
      %c128_11 = arith.constant 128 : index
      %21 = vector.load %arg8[%c0_10, %c56, %c128_11] : memref<1x144x576xf32, #tpu.memory_space<vmem>>, vector<1x16x220xf32>
      %22 = arith.subf %20, %21 : vector<1x16x220xf32>
      %c0_12 = arith.constant 0 : index
      %c71_13 = arith.constant 71 : index
      %c128_14 = arith.constant 128 : index
      %23 = vector.load %arg9[%c0_12, %c71_13, %c128_14] : memref<1x144x576xf32, #tpu.memory_space<vmem>>, vector<1x16x220xf32>
      %c0_15 = arith.constant 0 : index
      %c56_16 = arith.constant 56 : index
      %c128_17 = arith.constant 128 : index
      %24 = vector.load %arg9[%c0_15, %c56_16, %c128_17] : memref<1x144x576xf32, #tpu.memory_space<vmem>>, vector<1x16x220xf32>
      %25 = arith.subf %23, %24 : vector<1x16x220xf32>
      %26 = vector.extract_strided_slice %22 {offsets = [0, 0, 156], sizes = [1, 16, 64], strides = [1, 1, 1]} : vector<1x16x220xf32> to vector<1x16x64xf32>
      %27 = vector.extract_strided_slice %22 {offsets = [0, 0, 96], sizes = [1, 16, 64], strides = [1, 1, 1]} : vector<1x16x220xf32> to vector<1x16x64xf32>
      %28 = arith.subf %26, %27 : vector<1x16x64xf32>
      %29 = vector.extract_strided_slice %25 {offsets = [0, 0, 156], sizes = [1, 16, 64], strides = [1, 1, 1]} : vector<1x16x220xf32> to vector<1x16x64xf32>
      %30 = vector.extract_strided_slice %25 {offsets = [0, 0, 96], sizes = [1, 16, 64], strides = [1, 1, 1]} : vector<1x16x220xf32> to vector<1x16x64xf32>
      %31 = arith.subf %29, %30 : vector<1x16x64xf32>
      %32 = vector.shape_cast %4 : vector<16x64xf32> to vector<1x16x64xf32>
      %33 = arith.mulf %28, %32 : vector<1x16x64xf32>
      %34 = vector.shape_cast %4 : vector<16x64xf32> to vector<1x16x64xf32>
      %35 = arith.mulf %31, %34 : vector<1x16x64xf32>
      %36 = arith.mulf %33, %33 : vector<1x16x64xf32>
      %37 = arith.subf %35, %36 : vector<1x16x64xf32>
      %cst = arith.constant 9.99999997E-7 : f32
      %38 = vector.broadcast %cst : f32 to vector<1x16x64xf32>
      %39 = arith.maximumf %37, %38 : vector<1x16x64xf32>
      %40 = math.sqrt %39 : vector<1x16x64xf32>
      %c1 = arith.constant 1 : index
      %41 = memref.load %arg2[%c1] : memref<5xf32, #tpu.memory_space<smem>>
      %c1_18 = arith.constant 1 : index
      %42 = memref.load %arg3[%c1_18] : memref<5xf32, #tpu.memory_space<smem>>
      %43 = vector.broadcast %42 : f32 to vector<1x16x64xf32>
      %44 = arith.mulf %40, %43 : vector<1x16x64xf32>
      %45 = vector.broadcast %41 : f32 to vector<1x16x64xf32>
      %46 = arith.addf %45, %44 : vector<1x16x64xf32>
      %47 = arith.mulf %33, %46 : vector<1x16x64xf32>
      %c0_19 = arith.constant 0 : index
      %c0_20 = arith.constant 0 : index
      %c0_21 = arith.constant 0 : index
      %c0_22 = arith.constant 0 : index
      %48 = vector.load %arg7[%c0_19, %c0_20, %c0_21, %c0_22] : memref<1x1x16x64xf32, #tpu.memory_space<vmem>>, vector<1x1x16x64xf32>
      %49 = vector.shape_cast %48 : vector<1x1x16x64xf32> to vector<1x16x64xf32>
      %50 = vector.shape_cast %47 : vector<1x16x64xf32> to vector<1x1x16x64xf32>
      tpu.vector_store %arg7[%c0_19, %c0_20, %c0_21, %c0_22], %50 {strides = array<i32>} : memref<1x1x16x64xf32, #tpu.memory_space<vmem>>, vector<1x1x16x64xf32>,
    } else {
    }
    %c2_i32 = arith.constant 2 : i32
    %11 = arith.cmpi eq, %arg1, %c2_i32 : i32
    %12 = arith.extui %11 : i1 to i32
    %c0_i32_6 = arith.constant 0 : i32
    %13 = arith.cmpi ne, %12, %c0_i32_6 : i32
    scf.if %13 {
      %c0_9 = arith.constant 0 : index
      %c79 = arith.constant 79 : index
      %c128 = arith.constant 128 : index
      %20 = vector.load %arg8[%c0_9, %c79, %c128] : memref<1x144x576xf32, #tpu.memory_space<vmem>>, vector<1x16x252xf32>
      %c0_10 = arith.constant 0 : index
      %c48 = arith.constant 48 : index
      %c128_11 = arith.constant 128 : index
      %21 = vector.load %arg8[%c0_10, %c48, %c128_11] : memref<1x144x576xf32, #tpu.memory_space<vmem>>, vector<1x16x252xf32>
      %22 = arith.subf %20, %21 : vector<1x16x252xf32>
      %c0_12 = arith.constant 0 : index
      %c79_13 = arith.constant 79 : index
      %c128_14 = arith.constant 128 : index
      %23 = vector.load %arg9[%c0_12, %c79_13, %c128_14] : memref<1x144x576xf32, #tpu.memory_space<vmem>>, vector<1x16x252xf32>
      %c0_15 = arith.constant 0 : index
      %c48_16 = arith.constant 48 : index
      %c128_17 = arith.constant 128 : index
      %24 = vector.load %arg9[%c0_15, %c48_16, %c128_17] : memref<1x144x576xf32, #tpu.memory_space<vmem>>, vector<1x16x252xf32>
      %25 = arith.subf %23, %24 : vector<1x16x252xf32>
      %26 = vector.extract_strided_slice %22 {offsets = [0, 0, 188], sizes = [1, 16, 64], strides = [1, 1, 1]} : vector<1x16x252xf32> to vector<1x16x64xf32>
      %27 = vector.extract_strided_slice %22 {offsets = [0, 0, 64], sizes = [1, 16, 64], strides = [1, 1, 1]} : vector<1x16x252xf32> to vector<1x16x64xf32>
      %28 = arith.subf %26, %27 : vector<1x16x64xf32>
      %29 = vector.extract_strided_slice %25 {offsets = [0, 0, 188], sizes = [1, 16, 64], strides = [1, 1, 1]} : vector<1x16x252xf32> to vector<1x16x64xf32>
      %30 = vector.extract_strided_slice %25 {offsets = [0, 0, 64], sizes = [1, 16, 64], strides = [1, 1, 1]} : vector<1x16x252xf32> to vector<1x16x64xf32>
      %31 = arith.subf %29, %30 : vector<1x16x64xf32>
      %32 = vector.shape_cast %4 : vector<16x64xf32> to vector<1x16x64xf32>
      %33 = arith.mulf %28, %32 : vector<1x16x64xf32>
      %34 = vector.shape_cast %4 : vector<16x64xf32> to vector<1x16x64xf32>
      %35 = arith.mulf %31, %34 : vector<1x16x64xf32>
      %36 = arith.mulf %33, %33 : vector<1x16x64xf32>
      %37 = arith.subf %35, %36 : vector<1x16x64xf32>
      %cst = arith.constant 9.99999997E-7 : f32
      %38 = vector.broadcast %cst : f32 to vector<1x16x64xf32>
      %39 = arith.maximumf %37, %38 : vector<1x16x64xf32>
      %40 = math.sqrt %39 : vector<1x16x64xf32>
      %c2 = arith.constant 2 : index
      %41 = memref.load %arg2[%c2] : memref<5xf32, #tpu.memory_space<smem>>
      %c2_18 = arith.constant 2 : index
      %42 = memref.load %arg3[%c2_18] : memref<5xf32, #tpu.memory_space<smem>>
      %43 = vector.broadcast %42 : f32 to vector<1x16x64xf32>
      %44 = arith.mulf %40, %43 : vector<1x16x64xf32>
      %45 = vector.broadcast %41 : f32 to vector<1x16x64xf32>
      %46 = arith.addf %45, %44 : vector<1x16x64xf32>
      %47 = arith.mulf %33, %46 : vector<1x16x64xf32>
      %c0_19 = arith.constant 0 : index
      %c0_20 = arith.constant 0 : index
      %c0_21 = arith.constant 0 : index
      %c0_22 = arith.constant 0 : index
      %48 = vector.load %arg7[%c0_19, %c0_20, %c0_21, %c0_22] : memref<1x1x16x64xf32, #tpu.memory_space<vmem>>, vector<1x1x16x64xf32>
      %49 = vector.shape_cast %48 : vector<1x1x16x64xf32> to vector<1x16x64xf32>
      %50 = vector.shape_cast %47 : vector<1x16x64xf32> to vector<1x1x16x64xf32>
      tpu.vector_store %arg7[%c0_19, %c0_20, %c0_21, %c0_22], %50 {strides = array<i32>} : memref<1x1x16x64xf32, #tpu.memory_space<vmem>>, vector<1x1x16x64xf32>,
    } else {
    }
    %c3_i32 = arith.constant 3 : i32
    %14 = arith.cmpi eq, %arg1, %c3_i32 : i32
    %15 = arith.extui %14 : i1 to i32
    %c0_i32_7 = arith.constant 0 : i32
    %16 = arith.cmpi ne, %15, %c0_i32_7 : i32
    scf.if %16 {
      %c0_9 = arith.constant 0 : index
      %c95 = arith.constant 95 : index
      %c128 = arith.constant 128 : index
      %20 = vector.load %arg8[%c0_9, %c95, %c128] : memref<1x144x576xf32, #tpu.memory_space<vmem>>, vector<1x16x316xf32>
      %c0_10 = arith.constant 0 : index
      %c32 = arith.constant 32 : index
      %c128_11 = arith.constant 128 : index
      %21 = vector.load %arg8[%c0_10, %c32, %c128_11] : memref<1x144x576xf32, #tpu.memory_space<vmem>>, vector<1x16x316xf32>
      %22 = arith.subf %20, %21 : vector<1x16x316xf32>
      %c0_12 = arith.constant 0 : index
      %c95_13 = arith.constant 95 : index
      %c128_14 = arith.constant 128 : index
      %23 = vector.load %arg9[%c0_12, %c95_13, %c128_14] : memref<1x144x576xf32, #tpu.memory_space<vmem>>, vector<1x16x316xf32>
      %c0_15 = arith.constant 0 : index
      %c32_16 = arith.constant 32 : index
      %c128_17 = arith.constant 128 : index
      %24 = vector.load %arg9[%c0_15, %c32_16, %c128_17] : memref<1x144x576xf32, #tpu.memory_space<vmem>>, vector<1x16x316xf32>
      %25 = arith.subf %23, %24 : vector<1x16x316xf32>
      %26 = vector.extract_strided_slice %22 {offsets = [0, 0, 252], sizes = [1, 16, 64], strides = [1, 1, 1]} : vector<1x16x316xf32> to vector<1x16x64xf32>
      %27 = vector.extract_strided_slice %22 {offsets = [0, 0, 0], sizes = [1, 16, 64], strides = [1, 1, 1]} : vector<1x16x316xf32> to vector<1x16x64xf32>
      %28 = arith.subf %26, %27 : vector<1x16x64xf32>
      %29 = vector.extract_strided_slice %25 {offsets = [0, 0, 252], sizes = [1, 16, 64], strides = [1, 1, 1]} : vector<1x16x316xf32> to vector<1x16x64xf32>
      %30 = vector.extract_strided_slice %25 {offsets = [0, 0, 0], sizes = [1, 16, 64], strides = [1, 1, 1]} : vector<1x16x316xf32> to vector<1x16x64xf32>
      %31 = arith.subf %29, %30 : vector<1x16x64xf32>
      %32 = vector.shape_cast %4 : vector<16x64xf32> to vector<1x16x64xf32>
      %33 = arith.mulf %28, %32 : vector<1x16x64xf32>
      %34 = vector.shape_cast %4 : vector<16x64xf32> to vector<1x16x64xf32>
      %35 = arith.mulf %31, %34 : vector<1x16x64xf32>
      %36 = arith.mulf %33, %33 : vector<1x16x64xf32>
      %37 = arith.subf %35, %36 : vector<1x16x64xf32>
      %cst = arith.constant 9.99999997E-7 : f32
      %38 = vector.broadcast %cst : f32 to vector<1x16x64xf32>
      %39 = arith.maximumf %37, %38 : vector<1x16x64xf32>
      %40 = math.sqrt %39 : vector<1x16x64xf32>
      %c3 = arith.constant 3 : index
      %41 = memref.load %arg2[%c3] : memref<5xf32, #tpu.memory_space<smem>>
      %c3_18 = arith.constant 3 : index
      %42 = memref.load %arg3[%c3_18] : memref<5xf32, #tpu.memory_space<smem>>
      %43 = vector.broadcast %42 : f32 to vector<1x16x64xf32>
      %44 = arith.mulf %40, %43 : vector<1x16x64xf32>
      %45 = vector.broadcast %41 : f32 to vector<1x16x64xf32>
      %46 = arith.addf %45, %44 : vector<1x16x64xf32>
      %47 = arith.mulf %33, %46 : vector<1x16x64xf32>
      %c0_19 = arith.constant 0 : index
      %c0_20 = arith.constant 0 : index
      %c0_21 = arith.constant 0 : index
      %c0_22 = arith.constant 0 : index
      %48 = vector.load %arg7[%c0_19, %c0_20, %c0_21, %c0_22] : memref<1x1x16x64xf32, #tpu.memory_space<vmem>>, vector<1x1x16x64xf32>
      %49 = vector.shape_cast %48 : vector<1x1x16x64xf32> to vector<1x16x64xf32>
      %50 = vector.shape_cast %47 : vector<1x16x64xf32> to vector<1x1x16x64xf32>
      tpu.vector_store %arg7[%c0_19, %c0_20, %c0_21, %c0_22], %50 {strides = array<i32>} : memref<1x1x16x64xf32, #tpu.memory_space<vmem>>, vector<1x1x16x64xf32>,
    } else {
    }
    %c4_i32 = arith.constant 4 : i32
    %17 = arith.cmpi eq, %arg1, %c4_i32 : i32
    %18 = arith.extui %17 : i1 to i32
    %c0_i32_8 = arith.constant 0 : i32
    %19 = arith.cmpi ne, %18, %c0_i32_8 : i32
    scf.if %19 {
      %c0_9 = arith.constant 0 : index
      %c127 = arith.constant 127 : index
      %c0_10 = arith.constant 0 : index
      %20 = vector.load %arg8[%c0_9, %c127, %c0_10] : memref<1x144x576xf32, #tpu.memory_space<vmem>>, vector<1x16x572xf32>
      %c0_11 = arith.constant 0 : index
      %c0_12 = arith.constant 0 : index
      %c0_13 = arith.constant 0 : index
      %21 = vector.load %arg8[%c0_11, %c0_12, %c0_13] : memref<1x144x576xf32, #tpu.memory_space<vmem>>, vector<1x16x572xf32>
      %22 = arith.subf %20, %21 : vector<1x16x572xf32>
      %c0_14 = arith.constant 0 : index
      %c127_15 = arith.constant 127 : index
      %c0_16 = arith.constant 0 : index
      %23 = vector.load %arg9[%c0_14, %c127_15, %c0_16] : memref<1x144x576xf32, #tpu.memory_space<vmem>>, vector<1x16x572xf32>
      %c0_17 = arith.constant 0 : index
      %c0_18 = arith.constant 0 : index
      %c0_19 = arith.constant 0 : index
      %24 = vector.load %arg9[%c0_17, %c0_18, %c0_19] : memref<1x144x576xf32, #tpu.memory_space<vmem>>, vector<1x16x572xf32>
      %25 = arith.subf %23, %24 : vector<1x16x572xf32>
      %26 = vector.extract_strided_slice %22 {offsets = [0, 0, 508], sizes = [1, 16, 64], strides = [1, 1, 1]} : vector<1x16x572xf32> to vector<1x16x64xf32>
      %27 = vector.extract_strided_slice %22 {offsets = [0, 0, 0], sizes = [1, 16, 64], strides = [1, 1, 1]} : vector<1x16x572xf32> to vector<1x16x64xf32>
      %28 = arith.subf %26, %27 : vector<1x16x64xf32>
      %29 = vector.extract_strided_slice %25 {offsets = [0, 0, 508], sizes = [1, 16, 64], strides = [1, 1, 1]} : vector<1x16x572xf32> to vector<1x16x64xf32>
      %30 = vector.extract_strided_slice %25 {offsets = [0, 0, 0], sizes = [1, 16, 64], strides = [1, 1, 1]} : vector<1x16x572xf32> to vector<1x16x64xf32>
      %31 = arith.subf %29, %30 : vector<1x16x64xf32>
      %32 = vector.shape_cast %4 : vector<16x64xf32> to vector<1x16x64xf32>
      %33 = arith.mulf %28, %32 : vector<1x16x64xf32>
      %34 = vector.shape_cast %4 : vector<16x64xf32> to vector<1x16x64xf32>
      %35 = arith.mulf %31, %34 : vector<1x16x64xf32>
      %36 = arith.mulf %33, %33 : vector<1x16x64xf32>
      %37 = arith.subf %35, %36 : vector<1x16x64xf32>
      %cst = arith.constant 9.99999997E-7 : f32
      %38 = vector.broadcast %cst : f32 to vector<1x16x64xf32>
      %39 = arith.maximumf %37, %38 : vector<1x16x64xf32>
      %40 = math.sqrt %39 : vector<1x16x64xf32>
      %c4 = arith.constant 4 : index
      %41 = memref.load %arg2[%c4] : memref<5xf32, #tpu.memory_space<smem>>
      %c4_20 = arith.constant 4 : index
      %42 = memref.load %arg3[%c4_20] : memref<5xf32, #tpu.memory_space<smem>>
      %43 = vector.broadcast %42 : f32 to vector<1x16x64xf32>
      %44 = arith.mulf %40, %43 : vector<1x16x64xf32>
      %45 = vector.broadcast %41 : f32 to vector<1x16x64xf32>
      %46 = arith.addf %45, %44 : vector<1x16x64xf32>
      %47 = arith.mulf %33, %46 : vector<1x16x64xf32>
      %c0_21 = arith.constant 0 : index
      %c0_22 = arith.constant 0 : index
      %c0_23 = arith.constant 0 : index
      %c0_24 = arith.constant 0 : index
      %48 = vector.load %arg7[%c0_21, %c0_22, %c0_23, %c0_24] : memref<1x1x16x64xf32, #tpu.memory_space<vmem>>, vector<1x1x16x64xf32>
      %49 = vector.shape_cast %48 : vector<1x1x16x64xf32> to vector<1x16x64xf32>
      %50 = vector.shape_cast %47 : vector<1x16x64xf32> to vector<1x1x16x64xf32>
      tpu.vector_store %arg7[%c0_21, %c0_22, %c0_23, %c0_24], %50 {strides = array<i32>} : memref<1x1x16x64xf32, #tpu.memory_space<vmem>>, vector<1x1x16x64xf32>,
    } else {
    }
    return
  }
  func.func @transform_0(%arg0: i32, %arg1: i32, %arg2: memref<5xf32, #tpu.memory_space<smem>>, %arg3: memref<5xf32, #tpu.memory_space<smem>>) -> (i32, i32, i32) {
    %c0_i32 = arith.constant 0 : i32
    %c0_i32_0 = arith.constant 0 : i32
    %c0_i32_1 = arith.constant 0 : i32
    return %arg0, %c0_i32, %c0_i32_0 : i32, i32, i32
  }
  func.func @transform_1(%arg0: i32, %arg1: i32, %arg2: memref<5xf32, #tpu.memory_space<smem>>, %arg3: memref<5xf32, #tpu.memory_space<smem>>) -> (i32, i32) {
    %c0_i32 = arith.constant 0 : i32
    %c0_i32_0 = arith.constant 0 : i32
    %c0_i32_1 = arith.constant 0 : i32
    return %c0_i32, %c0_i32_0 : i32, i32
  }
  func.func @transform_2(%arg0: i32, %arg1: i32, %arg2: memref<5xf32, #tpu.memory_space<smem>>, %arg3: memref<5xf32, #tpu.memory_space<smem>>) -> (i32, i32, i32) {
    %c0_i32 = arith.constant 0 : i32
    %c0_i32_0 = arith.constant 0 : i32
    %c0_i32_1 = arith.constant 0 : i32
    return %arg1, %c0_i32, %c0_i32_0 : i32, i32, i32
  }
  func.func @transform_3(%arg0: i32, %arg1: i32, %arg2: memref<5xf32, #tpu.memory_space<smem>>, %arg3: memref<5xf32, #tpu.memory_space<smem>>) -> (i32, i32, i32, i32) {
    %c0_i32 = arith.constant 0 : i32
    %c0_i32_0 = arith.constant 0 : i32
    %c0_i32_1 = arith.constant 0 : i32
    return %arg0, %arg1, %c0_i32, %c0_i32_0 : i32, i32, i32, i32
  }
}

</mosaic_0001>

<llo_original>
// kernel: sauvola_multi_window.1
$region0: #{sauvola_multi_window.1}
  #allocation0 [shape = 'u32[]', space=smem, size = 0x4, offset = 0x4, fixed_abs, tag = 'smem constant byte address 0x4 - core index']
  #allocation1 [shape = 'u32[144,128]{1,0:T(1,128)}', space=vmem, size = 0x12000, scoped, tag = 'internal scratch']
  #allocation2 [shape = 'f32[1,144,576]{2,1,0:T(8,128)}', space=vmem, size = 0x5a000, scoped, tag = 'scratch operand']
  #allocation3 [shape = 'f32[1,144,576]{2,1,0:T(8,128)}', space=vmem, size = 0x5a000, scoped, tag = 'scratch operand']
  #allocation4 [shape = 's32[1]{0}', space=sflag, size = 0x4, scoped, tag = 'scoped memory for sauvola_multi_window.1']
  #allocation5 [shape = 'u8[512]{0}', space=smem, size = 0x200, scoped, tag = 'prefetched SMEM operand 0']
  #allocation6 [shape = 'u8[512]{0}', space=smem, size = 0x200, scoped, tag = 'prefetched SMEM operand 1']
  %s0 = inlined_call_operand.vmem [shape: f32[5], index: 0, kind: input, shape index: {}]
  %s1 = inlined_call_operand.vmem [shape: f32[5], index: 1, kind: input, shape index: {}]
  %s2 = inlined_call_operand.vmem [shape: f32[2,16,64], index: 2, kind: input, shape index: {}]
  %s3 = inlined_call_operand.vmem [shape: f32[64,576], index: 3, kind: input, shape index: {}]
  %s4 = inlined_call_operand.vmem [shape: f32[5,16,64], index: 4, kind: input, shape index: {}]
  %s5 = inlined_call_operand.vmem [shape: f32[2,5,16,64], index: 5, kind: output, shape index: {}]
  %s6 = sld [smem:[#allocation0]]
  $region69: #{sauvola_multi_window.1} parent=0
    _
  %s8 = ssub.s32 1, %s6
  %s9 = scalar_select 0, %s8, %s6
  %s10 = sshll.u32 %s0, 4
  %s11 = int_to_ptr.vmem [resolvable:$true] %s10
  %13 = dma.vmem_to_smem %s11, 16, [#allocation5], [#allocation4]
  %s14 = sshll.u32 %s1, 4
  %s15 = int_to_ptr.vmem [resolvable:$true] %s14
  %17 = dma.vmem_to_smem %s15, 16, [#allocation6], [#allocation4]
  %18 = dma.done [#allocation4], 32
  %19 = sfence
  loop: start=0, step=1, limit=12
  $region2: #{sauvola_multi_window.1} parent=0 // loop_pre_header
    _
  $region3: #{sauvola_multi_window.1} parent=0 // loop_header
    %s21 = sphi 0, %s25
    %p22 = scmp.ge.s32.totalorder %s21, 12
    %s28 = sphi 0, %s40
    %s29 = sphi 0, %s36
    %s30 = sphi 0, %s28
    %s31 = sphi 0, %s29
    %s32 = sphi 0, %s30
    %s33 = sphi 0, %s31
    %s43 = sphi 0, %s45
    %s46 = sphi 0, %s43
    %s47 = sphi 0, %s46
    %s63 = sphi 0, %s47
    %s67 = sphi 0, %s67
    %s69 = sphi 0, %s67
    %s70 = sphi 0, %s69
    %s84 = sphi 0, %s70
    %s90 = sphi 0, %s92
    %s93 = sphi 0, %s90
    %s94 = sphi 0, %s93
    %s110 = sphi 0, %s94
    %s118 = sphi 0, %s120
    %s121 = sphi 0, %s118
    %s122 = sphi 0, %s121
    %s138 = sphi 0, %s122
  $region4: #{sauvola_multi_window.1} parent=0 // loop_header_branch
    %24 = sbr.rel (%p22) target = $region8
  $region5: #{sauvola_multi_window.1} parent=0 // loop_body
    %s26 = ssub.s32 %s21, 1
    %s27 = ssub.s32 %s21, 2
    %s34 = sadd.s32 1, %s29
    %p35 = scmp.ge.s32.totalorder %s34, 5
    %s36 = scalar_select %p35, 0, %s34
    %s37 = sadd.s32 1, %s28
    %s38 = scalar_select %p35, %s37, %s28
    %p39 = scmp.ge.s32.totalorder %s38, 2
    %s40 = scalar_select %p39, 0, %s38
    %s41 = ssub.s32 %s28, %s40
    %p42 = scmp.eq.s32.totalorder %s41, 0
    %s44 = sadd.s32 %s43, 1
    %s45 = scalar_select %p42, %s43, %s44
    %p48 = pneg %p42
    %p49 = scmp.eq.s32.totalorder %s21, 9
    %p50 = por %p48, %p49
    %p51 = scmp.ne.s32.totalorder %s43, %s46
    %p52 = scmp.eq.s32.totalorder %s21, 0
    %p53 = por %p51, %p52
    %p54 = scmp.ne.s32.totalorder %s43, %s46
    %p55 = scmp.eq.s32.totalorder %s26, 9
    %p56 = por %p54, %p55
    %p57 = scmp.ne.s32.totalorder %s46, %s47
    %p58 = scmp.eq.s32.totalorder %s26, 0
    %p59 = por %p57, %p58
    %p60 = scmp.ne.s32.totalorder %s46, %s47
    %p61 = scmp.eq.s32.totalorder %s27, 9
    %p62 = por %p60, %p61
    %p64 = scmp.ne.s32.totalorder %s47, %s63
    %p65 = scmp.eq.s32.totalorder %s27, 0
    %p66 = por %p64, %p65
    %s68 = sadd.s32 %s67, 1
    %p71 = scmp.eq.s32.totalorder %s21, 9
    %p72 = scmp.ne.s32.totalorder %s67, %s69
    %p73 = scmp.eq.s32.totalorder %s21, 0
    %p74 = por %p72, %p73
    %p75 = scmp.ne.s32.totalorder %s67, %s69
    %p76 = scmp.eq.s32.totalorder %s26, 9
    %p77 = por %p75, %p76
    %p78 = scmp.ne.s32.totalorder %s69, %s70
    %p79 = scmp.eq.s32.totalorder %s26, 0
    %p80 = por %p78, %p79
    %p81 = scmp.ne.s32.totalorder %s69, %s70
    %p82 = scmp.eq.s32.totalorder %s27, 9
    %p83 = por %p81, %p82
    %p85 = scmp.ne.s32.totalorder %s70, %s84
    %p86 = scmp.eq.s32.totalorder %s27, 0
    %p87 = por %p85, %p86
    %s88 = ssub.s32 %s29, %s36
    %p89 = scmp.eq.s32.totalorder %s88, 0
    %s91 = sadd.s32 %s90, 1
    %s92 = scalar_select %p89, %s90, %s91
    %p95 = pneg %p89
    %p96 = scmp.eq.s32.totalorder %s21, 9
    %p97 = por %p95, %p96
    %p98 = scmp.ne.s32.totalorder %s90, %s93
    %p99 = scmp.eq.s32.totalorder %s21, 0
    %p100 = por %p98, %p99
    %p101 = scmp.ne.s32.totalorder %s90, %s93
    %p102 = scmp.eq.s32.totalorder %s26, 9
    %p103 = por %p101, %p102
    %p104 = scmp.ne.s32.totalorder %s93, %s94
    %p105 = scmp.eq.s32.totalorder %s26, 0
    %p106 = por %p104, %p105
    %p107 = scmp.ne.s32.totalorder %s93, %s94
    %p108 = scmp.eq.s32.totalorder %s27, 9
    %p109 = por %p107, %p108
    %p111 = scmp.ne.s32.totalorder %s94, %s110
    %p112 = scmp.eq.s32.totalorder %s27, 0
    %p113 = por %p111, %p112
    %s114 = ssub.s32 %s28, %s40
    %s115 = ssub.s32 %s29, %s36
    %s116 = sor.u32 %s114, %s115
    %p117 = scmp.eq.s32.totalorder %s116, 0
    %s119 = sadd.s32 %s118, 1
    %s120 = scalar_select %p117, %s118, %s119
    %p123 = pneg %p117
    %p124 = scmp.eq.s32.totalorder %s21, 9
    %p125 = por %p123, %p124
    %p126 = scmp.ne.s32.totalorder %s118, %s121
    %p127 = scmp.eq.s32.totalorder %s21, 0
    %p128 = por %p126, %p127
    %p129 = scmp.ne.s32.totalorder %s118, %s121
    %p130 = scmp.eq.s32.totalorder %s26, 9
    %p131 = por %p129, %p130
    %p132 = scmp.ne.s32.totalorder %s121, %s122
    %p133 = scmp.eq.s32.totalorder %s26, 0
    %p134 = por %p132, %p133
    %p135 = scmp.ne.s32.totalorder %s121, %s122
    %p136 = scmp.eq.s32.totalorder %s27, 9
    %p137 = por %p135, %p136
    %p139 = scmp.ne.s32.totalorder %s122, %s138
    %p140 = scmp.eq.s32.totalorder %s27, 0
    %p141 = por %p139, %p140
    %p142 = scmp.le.s32.totalorder 1, %s21
    %p143 = scmp.lt.s32.totalorder %s21, 11
    %p144 = pnand %p142, %p143
    %p145 = pneg %p144
    // Predicated region
    $region9: #{sauvola_multi_window.1} parent=5 // pred_check
      _
    $region10: #{sauvola_multi_window.1} parent=5 // pred_check_branch
      %147 = sbr.rel (%p144) target = $region12
    $region11: #{sauvola_multi_window.1} parent=5 // pred_region
      %s148 = ssub.s32 %s21, 1
      // Predicated region
      $region13: #{sauvola_multi_window.1} parent=11 // pred_check
        %p149 = pneg %p80
      $region14: #{sauvola_multi_window.1} parent=11 // pred_check_branch
        %151 = sbr.rel (%p149) target = $region16
      $region15: #{sauvola_multi_window.1} parent=11 // pred_region
        _
      $region16: #{sauvola_multi_window.1} parent=11 // pred_fallthru
        _
    $region12: #{sauvola_multi_window.1} parent=5 // pred_fallthru
      _
    %p152 = scmp.lt.s32.totalorder %s21, 10
    // Predicated region
    $region17: #{sauvola_multi_window.1} parent=5 // pred_check
      %p153 = pneg %p152
    $region18: #{sauvola_multi_window.1} parent=5 // pred_check_branch
      %155 = sbr.rel (%p153) target = $region20
    $region19: #{sauvola_multi_window.1} parent=5 // pred_region
      // Predicated region
      $region21: #{sauvola_multi_window.1} parent=19 // pred_check
        %p156 = pneg %p53
      $region22: #{sauvola_multi_window.1} parent=19 // pred_check_branch
        %158 = sbr.rel (%p156) target = $region24
      $region23: #{sauvola_multi_window.1} parent=19 // pred_region
        %p159 = scmp.lt.s32.totalorder %s28, 1
        %s160 = scalar_select %p159, %s28, 1
        %s161 = smul.addr %s160, 2
        %s162 = smul.addr %s161, 8
        %s163 = scalar_lea.vmem %s2, %s162
      $region24: #{sauvola_multi_window.1} parent=19 // pred_fallthru
        _
      // Predicated region
      $region25: #{sauvola_multi_window.1} parent=19 // pred_check
        %p164 = pneg %p100
      $region26: #{sauvola_multi_window.1} parent=19 // pred_check_branch
        %166 = sbr.rel (%p164) target = $region28
      $region27: #{sauvola_multi_window.1} parent=19 // pred_region
        %p167 = scmp.lt.s32.totalorder %s29, 4
        %s168 = scalar_select %p167, %s29, 4
        %s169 = smul.addr %s168, 2
        %s170 = smul.addr %s169, 8
        %s171 = scalar_lea.vmem %s4, %s170
      $region28: #{sauvola_multi_window.1} parent=19 // pred_fallthru
        _
    $region20: #{sauvola_multi_window.1} parent=5 // pred_fallthru
      _
    %p172 = scmp.le.s32.totalorder 1, %s21
    %p173 = scmp.lt.s32.totalorder %s21, 11
    %p174 = pnand %p172, %p173
    %p175 = pneg %p174
    // Predicated region
    $region29: #{sauvola_multi_window.1} parent=5 // pred_check
      _
    $region30: #{sauvola_multi_window.1} parent=5 // pred_check_branch
      %177 = sbr.rel (%p174) target = $region32
    $region31: #{sauvola_multi_window.1} parent=5 // pred_region
      %s178 = ssub.s32 %s21, 1
      %p179 = scmp.lt.s32.totalorder %s30, 1
      %s180 = scalar_select %p179, %s30, 1
      %s181 = smul.addr %s180, 2
      %s182 = smul.addr %s181, 8
      %s183 = scalar_lea.vmem %s2, %s182
      %p184 = pneg %p59
      %p185 = pneg %p56
      %p186 = pneg %p80
      %p187 = pneg %p77
      %p188 = scmp.lt.s32.totalorder %s31, 4
      %s189 = scalar_select %p188, %s31, 4
      %s190 = smul.addr %s189, 2
      %s191 = smul.addr %s190, 8
      %s192 = scalar_lea.vmem %s4, %s191
      %p193 = pneg %p106
      %p194 = pneg %p103
      %p195 = pneg %p134
      %p196 = pneg %p131
      %p197 = scmp.lt.s32.totalorder %s30, 1
      %s198 = scalar_select %p197, %s30, 1
      %p199 = scmp.lt.s32.totalorder %s31, 4
      %s200 = scalar_select %p199, %s31, 4
      %s201 = smul.addr %s200, 2
      %s202 = smul.addr %s198, 10
      %s203 = sadd.s32 %s201, %s202
      %s204 = smul.addr %s203, 8
      %s205 = scalar_lea.vmem %s5, %s204
      %p206 = scmp.lt.s32.totalorder %s30, 1
      %s207 = scalar_select %p206, %s30, 1
      %s208 = smul.addr %s207, 2
      %s209 = smul.addr %s208, 8
      %s210 = scalar_lea.vmem %s2, %s209
      %p211 = scmp.lt.s32.totalorder %s31, 4
      %s212 = scalar_select %p211, %s31, 4
      %s213 = smul.addr %s212, 2
      %s214 = smul.addr %s213, 8
      %s215 = scalar_lea.vmem %s4, %s214
      %p216 = scmp.lt.s32.totalorder %s30, 1
      %s217 = scalar_select %p216, %s30, 1
      %p218 = scmp.lt.s32.totalorder %s31, 4
      %s219 = scalar_select %p218, %s31, 4
      %s220 = smul.addr %s219, 2
      %s221 = smul.addr %s217, 10
      %s222 = sadd.s32 %s220, %s221
      %s223 = smul.addr %s222, 8
      %s224 = scalar_lea.vmem %s5, %s223
      %p225 = scmp.eq.s32.totalorder %s31, 0
      // Predicated region
      $region33: #{sauvola_multi_window.1} parent=31 // pred_check
        %p226 = pneg %p225
      $region34: #{sauvola_multi_window.1} parent=31 // pred_check_branch
        %228 = sbr.rel (%p226) target = $region36
      $region35: #{sauvola_multi_window.1} parent=31 // pred_region
        %v229 = vlaneseq
        %v230 = vshrl.u32 %v229, 7
        %v231 = vadd.s32 %v230, 8
        %v232 = vadd.s32 %v230, 16
        %v233 = vadd.s32 %v230, 24
        %v234 = vadd.s32 %v230, 32
        %v235 = vadd.s32 %v230, 40
        %v236 = vadd.s32 %v230, 48
        %v237 = vadd.s32 %v230, 56
        %v238 = vadd.s32 %v230, 72
        %v239 = vadd.s32 %v230, 80
        %v240 = vadd.s32 %v230, 88
        %v241 = vadd.s32 %v230, 96
        %v242 = vadd.s32 %v230, 104
        %v243 = vadd.s32 %v230, 112
        %v244 = vadd.s32 %v230, 120
        %v245 = vadd.s32 %v230, 128
        %v246 = vadd.s32 %v230, 136
        %v247 = vlaneseq
        %v248 = vand.u32 %v247, 127
        %v249 = vsub.s32 %v230, 64
        %v250 = vsub.s32 %v231, 64
        %v251 = vsub.s32 %v232, 64
        %v252 = vsub.s32 %v233, 64
        %v253 = vsub.s32 %v234, 64
        %v254 = vsub.s32 %v235, 64
        %v255 = vsub.s32 %v236, 64
        %v256 = vsub.s32 %v237, 64
        %v257 = vsub.s32 %v238, 64
        %v258 = vsub.s32 %v239, 64
        %v259 = vsub.s32 %v240, 64
        %v260 = vsub.s32 %v241, 64
        %v261 = vsub.s32 %v242, 64
        %v262 = vsub.s32 %v243, 64
        %v263 = vsub.s32 %v244, 64
        %v264 = vsub.s32 %v245, 64
        %v265 = vsub.s32 %v246, 64
        %vm266 = vcmp.le.s32.totalorder %v248, %v249
        %vm267 = vcmp.le.s32.totalorder %v248, %v250
        %vm268 = vcmp.le.s32.totalorder %v248, %v251
        %vm269 = vcmp.le.s32.totalorder %v248, %v252
        %vm270 = vcmp.le.s32.totalorder %v248, %v253
        %vm271 = vcmp.le.s32.totalorder %v248, %v254
        %vm272 = vcmp.le.s32.totalorder %v248, %v255
        %vm273 = vcmp.le.s32.totalorder %v248, %v256
        %vm274 = vcmp.le.s32.totalorder %v248, %v230
        %vm275 = vcmp.le.s32.totalorder %v248, %v257
        %vm276 = vcmp.le.s32.totalorder %v248, %v258
        %vm277 = vcmp.le.s32.totalorder %v248, %v259
        %vm278 = vcmp.le.s32.totalorder %v248, %v260
        %vm279 = vcmp.le.s32.totalorder %v248, %v261
        %vm280 = vcmp.le.s32.totalorder %v248, %v262
        %vm281 = vcmp.le.s32.totalorder %v248, %v263
        %vm282 = vcmp.le.s32.totalorder %v248, %v264
        %vm283 = vcmp.le.s32.totalorder %v248, %v265
        %v284 = vsel %vm266, 1.0, 0.0
        %v285 = vsel %vm267, 1.0, 0.0
        %v286 = vsel %vm268, 1.0, 0.0
        %v287 = vsel %vm269, 1.0, 0.0
        %v288 = vsel %vm270, 1.0, 0.0
        %v289 = vsel %vm271, 1.0, 0.0
        %v290 = vsel %vm272, 1.0, 0.0
        %v291 = vsel %vm273, 1.0, 0.0
        %v292 = vsel %vm274, 1.0, 0.0
        %v293 = vsel %vm275, 1.0, 0.0
        %v294 = vsel %vm276, 1.0, 0.0
        %v295 = vsel %vm277, 1.0, 0.0
        %v296 = vsel %vm278, 1.0, 0.0
        %v297 = vsel %vm279, 1.0, 0.0
        %v298 = vsel %vm280, 1.0, 0.0
        %v299 = vsel %vm281, 1.0, 0.0
        %v300 = vsel %vm282, 1.0, 0.0
        %v301 = vsel %vm283, 1.0, 0.0
        %v302 = vld [vmem:[%s3] sm:$0xff]
        %v303 = vld [vmem:[%s3 + $0x8] sm:$0xff]
        %v304 = vld [vmem:[%s3 + $0x10] sm:$0xff]
        %v305 = vld [vmem:[%s3 + $0x18] sm:$0xff]
        %v306 = vld [vmem:[%s3 + $0x20] sm:$0xff]
        %v307 = vld [vmem:[%s3 + $0x28] sm:$0xff]
        %v308 = vld [vmem:[%s3 + $0x30] sm:$0xff]
        %v309 = vld [vmem:[%s3 + $0x38] sm:$0xff]
        %v310 = vld [vmem:[%s3 + $0x40] sm:$0xff]
        %v311 = vld [vmem:[%s3 + $0x48] sm:$0xff]
        %v312 = vld [vmem:[%s3 + $0x50] sm:$0xff]
        %v313 = vld [vmem:[%s3 + $0x58] sm:$0xff]
        %v314 = vld [vmem:[%s3 + $0x60] sm:$0xff]
        %v315 = vld [vmem:[%s3 + $0x68] sm:$0xff]
        %v316 = vld [vmem:[%s3 + $0x70] sm:$0xff]
        %v317 = vld [vmem:[%s3 + $0x78] sm:$0xff]
        %v318 = vld [vmem:[%s3 + $0x80] sm:$0xff]
        %v319 = vld [vmem:[%s3 + $0x88] sm:$0xff]
        %v320 = vld [vmem:[%s3 + $0x90] sm:$0xff]
        %v321 = vld [vmem:[%s3 + $0x98] sm:$0xff]
        %v322 = vld [vmem:[%s3 + $0xa0] sm:$0xff]
        %v323 = vld [vmem:[%s3 + $0xa8] sm:$0xff]
        %v324 = vld [vmem:[%s3 + $0xb0] sm:$0xff]
        %v325 = vld [vmem:[%s3 + $0xb8] sm:$0xff]
        %v326 = vld [vmem:[%s3 + $0xc0] sm:$0xff]
        %v327 = vld [vmem:[%s3 + $0xc8] sm:$0xff]
        %v328 = vld [vmem:[%s3 + $0xd0] sm:$0xff]
        %v329 = vld [vmem:[%s3 + $0xd8] sm:$0xff]
        %v330 = vld [vmem:[%s3 + $0xe0] sm:$0xff]
        %v331 = vld [vmem:[%s3 + $0xe8] sm:$0xff]
        %v332 = vld [vmem:[%s3 + $0xf0] sm:$0xff]
        %v333 = vld [vmem:[%s3 + $0xf8] sm:$0xff]
        %v334 = vld [vmem:[%s3 + $0x100] sm:$0xff]
        %v335 = vld [vmem:[%s3 + $0x108] sm:$0xff]
        %v336 = vld [vmem:[%s3 + $0x110] sm:$0xff]
        %v337 = vld [vmem:[%s3 + $0x118] sm:$0xff]
        %v338 = vld [vmem:[%s3 + $0x120] sm:$0xff]
        %v339 = vld [vmem:[%s3 + $0x128] sm:$0xff]
        %v340 = vld [vmem:[%s3 + $0x130] sm:$0xff]
        %v341 = vld [vmem:[%s3 + $0x138] sm:$0xff]
        %v342 = vld [vmem:[%s210] sm:$0xff]
        %v343 = vld [vmem:[%s210 + $0x8] sm:$0xff]
        %vm344 = vcmask 523264
        %v346 = vsel %vm344, %v342, 0
        %v349 = vsel %vm344, %v343, 0
        %351 = vmatprep.subr.mxu0 %v303
        %352 = vmatpush1.msra.mxu0 %v302
        %353 = vmatprep.subr.mxu0 %v308
        %354 = vmatpush1.msra.mxu0 %v307
        %355 = vmatprep.subr.mxu0 %v313
        %356 = vmatpush1.msra.mxu0 %v312
        %357 = vmatprep.subr.mxu0 %v318
        %358 = vmatpush1.msra.mxu0 %v317
        %359 = vmatprep.subr.mxu0 %v323
        %360 = vmatpush1.msra.mxu0 %v322
        %361 = vmatprep.subr.mxu0 %v328
        %362 = vmatpush1.msra.mxu0 %v327
        %363 = vmatprep.subr.mxu0 %v333
        %364 = vmatpush1.msra.mxu0 %v332
        %365 = vmatprep.subr.mxu0 %v338
        %366 = vmatpush1.msra.mxu0 %v337
        %367 = vmatprep.subr.mxu0 0.0
        %368 = vmatpush1.msra.mxu0 0.0
        %369 = vmatprep.subr.mxu0 0.0
        %370 = vmatpush1.msra.mxu0 0.0
        %371 = vmatprep.subr.mxu0 0.0
        %372 = vmatpush1.msra.mxu0 0.0
        %373 = vmatprep.subr.mxu0 0.0
        %374 = vmatpush1.msra.mxu0 0.0
        %375 = vmatprep.subr.mxu0 0.0
        %376 = vmatpush1.msra.mxu0 0.0
        %377 = vmatprep.subr.mxu0 0.0
        %378 = vmatpush1.msra.mxu0 0.0
        %379 = vmatprep.subr.mxu0 0.0
        %380 = vmatpush1.msra.mxu0 0.0
        %381 = vmatprep.subr.mxu0 0.0
        %382 = vmatpush1.msra.mxu0 0.0
        %383 = vmatprep.subr.mxu0 0.0
        %384 = vmatpush1.msra.mxu0 0.0
        %385 = vmatprep.subr.mxu0 0.0
        %386 = vmatpush1.msra.mxu0 0.0
        %387 = vmatprep.subr.mxu0 0.0
        %388 = vmatpush1.msra.mxu0 0.0
        %389 = vmatprep.subr.mxu0 0.0
        %390 = vmatpush1.msra.mxu0 0.0
        %391 = vmatprep.subr.mxu0 0.0
        %392 = vmatpush1.msra.mxu0 0.0
        %393 = vmatprep.subr.mxu0 0.0
        %394 = vmatpush1.msra.mxu0 0.0
        %395 = vmatprep.subr.mxu0 0.0
        %396 = vmatpush1.msra.mxu0 0.0
        %397 = vmatprep.subr.mxu0 0.0
        %398 = vmatpush1.msra.mxu0 0.0
        %399 = vmatprep.subr.mxu0 0.0
        %400 = vmatpush1.msra.mxu0 0.0
        %401 = vmatprep.subr.mxu0 0.0
        %402 = vmatpush1.msra.mxu0 0.0
        %403 = vmatprep.subr.mxu0 0.0
        %404 = vmatpush1.msra.mxu0 0.0
        %405 = vmatprep.subr.mxu0 0.0
        %406 = vmatpush1.msra.mxu0 0.0
        %407 = vmatprep.subr.mxu0 0.0
        %408 = vmatpush1.msra.mxu0 0.0
        %409 = vmatprep.subr.mxu0 0.0
        %410 = vmatpush1.msra.mxu0 0.0
        %411 = vmatprep.subr.mxu0 0.0
        %412 = vmatpush1.msra.mxu0 0.0
        %413 = vmatprep.subr.mxu0 0.0
        %414 = vmatpush1.msra.mxu0 0.0
        %415 = vmatprep.mubr.f32.mxu0 0.0
        %416 = vmatmul.mubr.f32.gmra.mrb[0].mxu0 %v346
        %v417 = vpop.f32.mrb[0].mxu0
        %v418 = vadd.f32 0.0, %v417
        %v419 = vpop.f32.mrb[0].mxu0
        %v420 = vadd.f32 0.0, %v419
        %421 = vmatprep.mubr.f32.mxu0 0.0
        %422 = vmatmul.mubr.f32.gmra.mrb[0].mxu0 %v349
        %v423 = vpop.f32.mrb[0].mxu0
        %v424 = vadd.f32 0.0, %v423
        %v425 = vpop.f32.mrb[0].mxu0
        %v426 = vadd.f32 0.0, %v425
        %427 = vdwg.mxu0
        %428 = vmatprep.subr.mxu0 %v305
        %429 = vmatpush1.msra.mxu0 %v304
        %430 = vmatprep.subr.mxu0 %v310
        %431 = vmatpush1.msra.mxu0 %v309
        %432 = vmatprep.subr.mxu0 %v315
        %433 = vmatpush1.msra.mxu0 %v314
        %434 = vmatprep.subr.mxu0 %v320
        %435 = vmatpush1.msra.mxu0 %v319
        %436 = vmatprep.subr.mxu0 %v325
        %437 = vmatpush1.msra.mxu0 %v324
        %438 = vmatprep.subr.mxu0 %v330
        %439 = vmatpush1.msra.mxu0 %v329
        %440 = vmatprep.subr.mxu0 %v335
        %441 = vmatpush1.msra.mxu0 %v334
        %442 = vmatprep.subr.mxu0 %v340
        %443 = vmatpush1.msra.mxu0 %v339
        %444 = vmatprep.subr.mxu0 0.0
        %445 = vmatpush1.msra.mxu0 0.0
        %446 = vmatprep.subr.mxu0 0.0
        %447 = vmatpush1.msra.mxu0 0.0
        %448 = vmatprep.subr.mxu0 0.0
        %449 = vmatpush1.msra.mxu0 0.0
        %450 = vmatprep.subr.mxu0 0.0
        %451 = vmatpush1.msra.mxu0 0.0
        %452 = vmatprep.subr.mxu0 0.0
        %453 = vmatpush1.msra.mxu0 0.0
        %454 = vmatprep.subr.mxu0 0.0
        %455 = vmatpush1.msra.mxu0 0.0
        %456 = vmatprep.subr.mxu0 0.0
        %457 = vmatpush1.msra.mxu0 0.0
        %458 = vmatprep.subr.mxu0 0.0
        %459 = vmatpush1.msra.mxu0 0.0
        %460 = vmatprep.subr.mxu0 0.0
        %461 = vmatpush1.msra.mxu0 0.0
        %462 = vmatprep.subr.mxu0 0.0
        %463 = vmatpush1.msra.mxu0 0.0
        %464 = vmatprep.subr.mxu0 0.0
        %465 = vmatpush1.msra.mxu0 0.0
        %466 = vmatprep.subr.mxu0 0.0
        %467 = vmatpush1.msra.mxu0 0.0
        %468 = vmatprep.subr.mxu0 0.0
        %469 = vmatpush1.msra.mxu0 0.0
        %470 = vmatprep.subr.mxu0 0.0
        %471 = vmatpush1.msra.mxu0 0.0
        %472 = vmatprep.subr.mxu0 0.0
        %473 = vmatpush1.msra.mxu0 0.0
        %474 = vmatprep.subr.mxu0 0.0
        %475 = vmatpush1.msra.mxu0 0.0
        %476 = vmatprep.subr.mxu0 0.0
        %477 = vmatpush1.msra.mxu0 0.0
        %478 = vmatprep.subr.mxu0 0.0
        %479 = vmatpush1.msra.mxu0 0.0
        %480 = vmatprep.subr.mxu0 0.0
        %481 = vmatpush1.msra.mxu0 0.0
        %482 = vmatprep.subr.mxu0 0.0
        %483 = vmatpush1.msra.mxu0 0.0
        %484 = vmatprep.subr.mxu0 0.0
        %485 = vmatpush1.msra.mxu0 0.0
        %486 = vmatprep.subr.mxu0 0.0
        %487 = vmatpush1.msra.mxu0 0.0
        %488 = vmatprep.subr.mxu0 0.0
        %489 = vmatpush1.msra.mxu0 0.0
        %490 = vmatprep.subr.mxu0 0.0
        %491 = vmatpush1.msra.mxu0 0.0
        %492 = vmatprep.mubr.f32.mxu0 0.0
        %493 = vmatmul.mubr.f32.gmra.mrb[0].mxu0 %v346
        %v494 = vpop.f32.mrb[0].mxu0
        %v495 = vadd.f32 0.0, %v494
        %v496 = vpop.f32.mrb[0].mxu0
        %v497 = vadd.f32 0.0, %v496
        %498 = vmatprep.mubr.f32.mxu0 0.0
        %499 = vmatmul.mubr.f32.gmra.mrb[0].mxu0 %v349
        %v500 = vpop.f32.mrb[0].mxu0
        %v501 = vadd.f32 0.0, %v500
        %v502 = vpop.f32.mrb[0].mxu0
        %v503 = vadd.f32 0.0, %v502
        %504 = vdwg.mxu0
        %505 = vmatprep.subr.mxu0 0.0
        %506 = vmatpush1.msra.mxu0 %v306
        %507 = vmatprep.subr.mxu0 0.0
        %508 = vmatpush1.msra.mxu0 %v311
        %509 = vmatprep.subr.mxu0 0.0
        %510 = vmatpush1.msra.mxu0 %v316
        %511 = vmatprep.subr.mxu0 0.0
        %512 = vmatpush1.msra.mxu0 %v321
        %513 = vmatprep.subr.mxu0 0.0
        %514 = vmatpush1.msra.mxu0 %v326
        %515 = vmatprep.subr.mxu0 0.0
        %516 = vmatpush1.msra.mxu0 %v331
        %517 = vmatprep.subr.mxu0 0.0
        %518 = vmatpush1.msra.mxu0 %v336
        %519 = vmatprep.subr.mxu0 0.0
        %520 = vmatpush1.msra.mxu0 %v341
        %521 = vmatprep.subr.mxu0 0.0
        %522 = vmatpush1.msra.mxu0 0.0
        %523 = vmatprep.subr.mxu0 0.0
        %524 = vmatpush1.msra.mxu0 0.0
        %525 = vmatprep.subr.mxu0 0.0
        %526 = vmatpush1.msra.mxu0 0.0
        %527 = vmatprep.subr.mxu0 0.0
        %528 = vmatpush1.msra.mxu0 0.0
        %529 = vmatprep.subr.mxu0 0.0
        %530 = vmatpush1.msra.mxu0 0.0
        %531 = vmatprep.subr.mxu0 0.0
        %532 = vmatpush1.msra.mxu0 0.0
        %533 = vmatprep.subr.mxu0 0.0
        %534 = vmatpush1.msra.mxu0 0.0
        %535 = vmatprep.subr.mxu0 0.0
        %536 = vmatpush1.msra.mxu0 0.0
        %537 = vmatprep.subr.mxu0 0.0
        %538 = vmatpush1.msra.mxu0 0.0
        %539 = vmatprep.subr.mxu0 0.0
        %540 = vmatpush1.msra.mxu0 0.0
        %541 = vmatprep.subr.mxu0 0.0
        %542 = vmatpush1.msra.mxu0 0.0
        %543 = vmatprep.subr.mxu0 0.0
        %544 = vmatpush1.msra.mxu0 0.0
        %545 = vmatprep.subr.mxu0 0.0
        %546 = vmatpush1.msra.mxu0 0.0
        %547 = vmatprep.subr.mxu0 0.0
        %548 = vmatpush1.msra.mxu0 0.0
        %549 = vmatprep.subr.mxu0 0.0
        %550 = vmatpush1.msra.mxu0 0.0
        %551 = vmatprep.subr.mxu0 0.0
        %552 = vmatpush1.msra.mxu0 0.0
        %553 = vmatprep.subr.mxu0 0.0
        %554 = vmatpush1.msra.mxu0 0.0
        %555 = vmatprep.subr.mxu0 0.0
        %556 = vmatpush1.msra.mxu0 0.0
        %557 = vmatprep.subr.mxu0 0.0
        %558 = vmatpush1.msra.mxu0 0.0
        %559 = vmatprep.subr.mxu0 0.0
        %560 = vmatpush1.msra.mxu0 0.0
        %561 = vmatprep.subr.mxu0 0.0
        %562 = vmatpush1.msra.mxu0 0.0
        %563 = vmatprep.subr.mxu0 0.0
        %564 = vmatpush1.msra.mxu0 0.0
        %565 = vmatprep.subr.mxu0 0.0
        %566 = vmatpush1.msra.mxu0 0.0
        %567 = vmatprep.subr.mxu0 0.0
        %568 = vmatpush1.msra.mxu0 0.0
        %569 = vmatprep.mubr.f32.mxu0 0.0
        %570 = vmatmul.mubr.f32.gmra.mrb[0].mxu0 %v346
        %v571 = vpop.f32.mrb[0].mxu0
        %v572 = vadd.f32 0.0, %v571
        %v573 = vpop.f32.mrb[0].mxu0
        %574 = vmatprep.mubr.f32.mxu0 0.0
        %575 = vmatmul.mubr.f32.gmra.mrb[0].mxu0 %v349
        %v576 = vpop.f32.mrb[0].mxu0
        %v577 = vadd.f32 0.0, %v576
        %v578 = vpop.f32.mrb[0].mxu0
        %579 = vdwg.mxu0
        %vm580 = vcmask 130048
        %v582 = vsel %vm580, %v284, 0
        %v585 = vsel %vm580, %v285, 0
        %v588 = vsel %vm580, %v286, 0
        %v591 = vsel %vm580, %v287, 0
        %v594 = vsel %vm580, %v288, 0
        %v597 = vsel %vm580, %v289, 0
        %v600 = vsel %vm580, %v290, 0
        %v603 = vsel %vm580, %v291, 0
        %v606 = vsel %vm580, %v292, 0
        %v609 = vsel %vm580, %v293, 0
        %v612 = vsel %vm580, %v294, 0
        %v615 = vsel %vm580, %v295, 0
        %v618 = vsel %vm580, %v296, 0
        %v621 = vsel %vm580, %v297, 0
        %v624 = vsel %vm580, %v298, 0
        %v627 = vsel %vm580, %v299, 0
        %v630 = vsel %vm580, %v300, 0
        %v633 = vsel %vm580, %v301, 0
        %635 = vmatprep.subr.mxu0 %v420
        %636 = vmatpush1.msra.mxu0 %v418
        %637 = vmatprep.subr.mxu0 %v426
        %638 = vmatpush1.msra.mxu0 %v424
        %639 = vmatprep.subr.mxu0 0.0
        %640 = vmatpush1.msra.mxu0 0.0
        %641 = vmatprep.subr.mxu0 0.0
        %642 = vmatpush1.msra.mxu0 0.0
        %643 = vmatprep.subr.mxu0 0.0
        %644 = vmatpush1.msra.mxu0 0.0
        %645 = vmatprep.subr.mxu0 0.0
        %646 = vmatpush1.msra.mxu0 0.0
        %647 = vmatprep.subr.mxu0 0.0
        %648 = vmatpush1.msra.mxu0 0.0
        %649 = vmatprep.subr.mxu0 0.0
        %650 = vmatpush1.msra.mxu0 0.0
        %651 = vmatprep.subr.mxu0 0.0
        %652 = vmatpush1.msra.mxu0 0.0
        %653 = vmatprep.subr.mxu0 0.0
        %654 = vmatpush1.msra.mxu0 0.0
        %655 = vmatprep.subr.mxu0 0.0
        %656 = vmatpush1.msra.mxu0 0.0
        %657 = vmatprep.subr.mxu0 0.0
        %658 = vmatpush1.msra.mxu0 0.0
        %659 = vmatprep.subr.mxu0 0.0
        %660 = vmatpush1.msra.mxu0 0.0
        %661 = vmatprep.subr.mxu0 0.0
        %662 = vmatpush1.msra.mxu0 0.0
        %663 = vmatprep.subr.mxu0 0.0
        %664 = vmatpush1.msra.mxu0 0.0
        %665 = vmatprep.subr.mxu0 0.0
        %666 = vmatpush1.msra.mxu0 0.0
        %667 = vmatprep.subr.mxu0 0.0
        %668 = vmatpush1.msra.mxu0 0.0
        %669 = vmatprep.subr.mxu0 0.0
        %670 = vmatpush1.msra.mxu0 0.0
        %671 = vmatprep.subr.mxu0 0.0
        %672 = vmatpush1.msra.mxu0 0.0
        %673 = vmatprep.subr.mxu0 0.0
        %674 = vmatpush1.msra.mxu0 0.0
        %675 = vmatprep.subr.mxu0 0.0
        %676 = vmatpush1.msra.mxu0 0.0
        %677 = vmatprep.subr.mxu0 0.0
        %678 = vmatpush1.msra.mxu0 0.0
        %679 = vmatprep.subr.mxu0 0.0
        %680 = vmatpush1.msra.mxu0 0.0
        %681 = vmatprep.subr.mxu0 0.0
        %682 = vmatpush1.msra.mxu0 0.0
        %683 = vmatprep.subr.mxu0 0.0
        %684 = vmatpush1.msra.mxu0 0.0
        %685 = vmatprep.subr.mxu0 0.0
        %686 = vmatpush1.msra.mxu0 0.0
        %687 = vmatprep.subr.mxu0 0.0
        %688 = vmatpush1.msra.mxu0 0.0
        %689 = vmatprep.subr.mxu0 0.0
        %690 = vmatpush1.msra.mxu0 0.0
        %691 = vmatprep.subr.mxu0 0.0
        %692 = vmatpush1.msra.mxu0 0.0
        %693 = vmatprep.subr.mxu0 0.0
        %694 = vmatpush1.msra.mxu0 0.0
        %695 = vmatprep.subr.mxu0 0.0
        %696 = vmatpush1.msra.mxu0 0.0
        %697 = vmatprep.subr.mxu0 0.0
        %698 = vmatpush1.msra.mxu0 0.0
        %699 = vmatprep.mubr.f32.mxu0 0.0
        %700 = vmatmul.mubr.f32.gmra.mrb[0].mxu0 %v582
        %v701 = vpop.f32.mrb[0].mxu0
        %v702 = vadd.f32 0.0, %v701
        %v703 = vpop.f32.mrb[0].mxu0
        %v704 = vadd.f32 0.0, %v703
        %705 = vmatprep.mubr.f32.mxu0 0.0
        %706 = vmatmul.mubr.f32.gmra.mrb[0].mxu0 %v585
        %v707 = vpop.f32.mrb[0].mxu0
        %v708 = vadd.f32 0.0, %v707
        %v709 = vpop.f32.mrb[0].mxu0
        %v710 = vadd.f32 0.0, %v709
        %711 = vmatprep.mubr.f32.mxu0 0.0
        %712 = vmatmul.mubr.f32.gmra.mrb[0].mxu0 %v588
        %v713 = vpop.f32.mrb[0].mxu0
        %v714 = vadd.f32 0.0, %v713
        %v715 = vpop.f32.mrb[0].mxu0
        %v716 = vadd.f32 0.0, %v715
        %717 = vmatprep.mubr.f32.mxu0 0.0
        %718 = vmatmul.mubr.f32.gmra.mrb[0].mxu0 %v591
        %v719 = vpop.f32.mrb[0].mxu0
        %v720 = vadd.f32 0.0, %v719
        %v721 = vpop.f32.mrb[0].mxu0
        %v722 = vadd.f32 0.0, %v721
        %723 = vmatprep.mubr.f32.mxu0 0.0
        %724 = vmatmul.mubr.f32.gmra.mrb[0].mxu0 %v594
        %v725 = vpop.f32.mrb[0].mxu0
        %v726 = vadd.f32 0.0, %v725
        %v727 = vpop.f32.mrb[0].mxu0
        %v728 = vadd.f32 0.0, %v727
        %729 = vmatprep.mubr.f32.mxu0 0.0
        %730 = vmatmul.mubr.f32.gmra.mrb[0].mxu0 %v597
        %v731 = vpop.f32.mrb[0].mxu0
        %v732 = vadd.f32 0.0, %v731
        %v733 = vpop.f32.mrb[0].mxu0
        %v734 = vadd.f32 0.0, %v733
        %735 = vmatprep.mubr.f32.mxu0 0.0
        %736 = vmatmul.mubr.f32.gmra.mrb[0].mxu0 %v600
        %v737 = vpop.f32.mrb[0].mxu0
        %v738 = vadd.f32 0.0, %v737
        %v739 = vpop.f32.mrb[0].mxu0
        %v740 = vadd.f32 0.0, %v739
        %741 = vmatprep.mubr.f32.mxu0 0.0
        %742 = vmatmul.mubr.f32.gmra.mrb[0].mxu0 %v603
        %v743 = vpop.f32.mrb[0].mxu0
        %v744 = vadd.f32 0.0, %v743
        %v745 = vpop.f32.mrb[0].mxu0
        %v746 = vadd.f32 0.0, %v745
        %747 = vmatprep.mubr.f32.mxu0 0.0
        %748 = vmatmul.mubr.f32.gmra.mrb[0].mxu0 %v606
        %v749 = vpop.f32.mrb[0].mxu0
        %v750 = vadd.f32 0.0, %v749
        %v751 = vpop.f32.mrb[0].mxu0
        %v752 = vadd.f32 0.0, %v751
        %753 = vmatprep.mubr.f32.mxu0 0.0
        %754 = vmatmul.mubr.f32.gmra.mrb[0].mxu0 %v609
        %v755 = vpop.f32.mrb[0].mxu0
        %v756 = vadd.f32 0.0, %v755
        %v757 = vpop.f32.mrb[0].mxu0
        %v758 = vadd.f32 0.0, %v757
        %759 = vmatprep.mubr.f32.mxu0 0.0
        %760 = vmatmul.mubr.f32.gmra.mrb[0].mxu0 %v612
        %v761 = vpop.f32.mrb[0].mxu0
        %v762 = vadd.f32 0.0, %v761
        %v763 = vpop.f32.mrb[0].mxu0
        %v764 = vadd.f32 0.0, %v763
        %765 = vmatprep.mubr.f32.mxu0 0.0
        %766 = vmatmul.mubr.f32.gmra.mrb[0].mxu0 %v615
        %v767 = vpop.f32.mrb[0].mxu0
        %v768 = vadd.f32 0.0, %v767
        %v769 = vpop.f32.mrb[0].mxu0
        %v770 = vadd.f32 0.0, %v769
        %771 = vmatprep.mubr.f32.mxu0 0.0
        %772 = vmatmul.mubr.f32.gmra.mrb[0].mxu0 %v618
        %v773 = vpop.f32.mrb[0].mxu0
        %v774 = vadd.f32 0.0, %v773
        %v775 = vpop.f32.mrb[0].mxu0
        %v776 = vadd.f32 0.0, %v775
        %777 = vmatprep.mubr.f32.mxu0 0.0
        %778 = vmatmul.mubr.f32.gmra.mrb[0].mxu0 %v621
        %v779 = vpop.f32.mrb[0].mxu0
        %v780 = vadd.f32 0.0, %v779
        %v781 = vpop.f32.mrb[0].mxu0
        %v782 = vadd.f32 0.0, %v781
        %783 = vmatprep.mubr.f32.mxu0 0.0
        %784 = vmatmul.mubr.f32.gmra.mrb[0].mxu0 %v624
        %v785 = vpop.f32.mrb[0].mxu0
        %v786 = vadd.f32 0.0, %v785
        %v787 = vpop.f32.mrb[0].mxu0
        %v788 = vadd.f32 0.0, %v787
        %789 = vmatprep.mubr.f32.mxu0 0.0
        %790 = vmatmul.mubr.f32.gmra.mrb[0].mxu0 %v627
        %v791 = vpop.f32.mrb[0].mxu0
        %v792 = vadd.f32 0.0, %v791
        %v793 = vpop.f32.mrb[0].mxu0
        %v794 = vadd.f32 0.0, %v793
        %795 = vmatprep.mubr.f32.mxu0 0.0
        %796 = vmatmul.mubr.f32.gmra.mrb[0].mxu0 %v630
        %v797 = vpop.f32.mrb[0].mxu0
        %v798 = vadd.f32 0.0, %v797
        %v799 = vpop.f32.mrb[0].mxu0
        %v800 = vadd.f32 0.0, %v799
        %801 = vmatprep.mubr.f32.mxu0 0.0
        %802 = vmatmul.mubr.f32.gmra.mrb[0].mxu0 %v633
        %v803 = vpop.f32.mrb[0].mxu0
        %v804 = vadd.f32 0.0, %v803
        %v805 = vpop.f32.mrb[0].mxu0
        %v806 = vadd.f32 0.0, %v805
        %807 = vdwg.mxu0
        %808 = vmatprep.subr.mxu0 %v497
        %809 = vmatpush1.msra.mxu0 %v495
        %810 = vmatprep.subr.mxu0 %v503
        %811 = vmatpush1.msra.mxu0 %v501
        %812 = vmatprep.subr.mxu0 0.0
        %813 = vmatpush1.msra.mxu0 0.0
        %814 = vmatprep.subr.mxu0 0.0
        %815 = vmatpush1.msra.mxu0 0.0
        %816 = vmatprep.subr.mxu0 0.0
        %817 = vmatpush1.msra.mxu0 0.0
        %818 = vmatprep.subr.mxu0 0.0
        %819 = vmatpush1.msra.mxu0 0.0
        %820 = vmatprep.subr.mxu0 0.0
        %821 = vmatpush1.msra.mxu0 0.0
        %822 = vmatprep.subr.mxu0 0.0
        %823 = vmatpush1.msra.mxu0 0.0
        %824 = vmatprep.subr.mxu0 0.0
        %825 = vmatpush1.msra.mxu0 0.0
        %826 = vmatprep.subr.mxu0 0.0
        %827 = vmatpush1.msra.mxu0 0.0
        %828 = vmatprep.subr.mxu0 0.0
        %829 = vmatpush1.msra.mxu0 0.0
        %830 = vmatprep.subr.mxu0 0.0
        %831 = vmatpush1.msra.mxu0 0.0
        %832 = vmatprep.subr.mxu0 0.0
        %833 = vmatpush1.msra.mxu0 0.0
        %834 = vmatprep.subr.mxu0 0.0
        %835 = vmatpush1.msra.mxu0 0.0
        %836 = vmatprep.subr.mxu0 0.0
        %837 = vmatpush1.msra.mxu0 0.0
        %838 = vmatprep.subr.mxu0 0.0
        %839 = vmatpush1.msra.mxu0 0.0
        %840 = vmatprep.subr.mxu0 0.0
        %841 = vmatpush1.msra.mxu0 0.0
        %842 = vmatprep.subr.mxu0 0.0
        %843 = vmatpush1.msra.mxu0 0.0
        %844 = vmatprep.subr.mxu0 0.0
        %845 = vmatpush1.msra.mxu0 0.0
        %846 = vmatprep.subr.mxu0 0.0
        %847 = vmatpush1.msra.mxu0 0.0
        %848 = vmatprep.subr.mxu0 0.0
        %849 = vmatpush1.msra.mxu0 0.0
        %850 = vmatprep.subr.mxu0 0.0
        %851 = vmatpush1.msra.mxu0 0.0
        %852 = vmatprep.subr.mxu0 0.0
        %853 = vmatpush1.msra.mxu0 0.0
        %854 = vmatprep.subr.mxu0 0.0
        %855 = vmatpush1.msra.mxu0 0.0
        %856 = vmatprep.subr.mxu0 0.0
        %857 = vmatpush1.msra.mxu0 0.0
        %858 = vmatprep.subr.mxu0 0.0
        %859 = vmatpush1.msra.mxu0 0.0
        %860 = vmatprep.subr.mxu0 0.0
        %861 = vmatpush1.msra.mxu0 0.0
        %862 = vmatprep.subr.mxu0 0.0
        %863 = vmatpush1.msra.mxu0 0.0
        %864 = vmatprep.subr.mxu0 0.0
        %865 = vmatpush1.msra.mxu0 0.0
        %866 = vmatprep.subr.mxu0 0.0
        %867 = vmatpush1.msra.mxu0 0.0
        %868 = vmatprep.subr.mxu0 0.0
        %869 = vmatpush1.msra.mxu0 0.0
        %870 = vmatprep.subr.mxu0 0.0
        %871 = vmatpush1.msra.mxu0 0.0
        %872 = vmatprep.mubr.f32.mxu0 0.0
        %873 = vmatmul.mubr.f32.gmra.mrb[0].mxu0 %v582
        %v874 = vpop.f32.mrb[0].mxu0
        %v875 = vadd.f32 0.0, %v874
        %v876 = vpop.f32.mrb[0].mxu0
        %v877 = vadd.f32 0.0, %v876
        %878 = vmatprep.mubr.f32.mxu0 0.0
        %879 = vmatmul.mubr.f32.gmra.mrb[0].mxu0 %v585
        %v880 = vpop.f32.mrb[0].mxu0
        %v881 = vadd.f32 0.0, %v880
        %v882 = vpop.f32.mrb[0].mxu0
        %v883 = vadd.f32 0.0, %v882
        %884 = vmatprep.mubr.f32.mxu0 0.0
        %885 = vmatmul.mubr.f32.gmra.mrb[0].mxu0 %v588
        %v886 = vpop.f32.mrb[0].mxu0
        %v887 = vadd.f32 0.0, %v886
        %v888 = vpop.f32.mrb[0].mxu0
        %v889 = vadd.f32 0.0, %v888
        %890 = vmatprep.mubr.f32.mxu0 0.0
        %891 = vmatmul.mubr.f32.gmra.mrb[0].mxu0 %v591
        %v892 = vpop.f32.mrb[0].mxu0
        %v893 = vadd.f32 0.0, %v892
        %v894 = vpop.f32.mrb[0].mxu0
        %v895 = vadd.f32 0.0, %v894
        %896 = vmatprep.mubr.f32.mxu0 0.0
        %897 = vmatmul.mubr.f32.gmra.mrb[0].mxu0 %v594
        %v898 = vpop.f32.mrb[0].mxu0
        %v899 = vadd.f32 0.0, %v898
        %v900 = vpop.f32.mrb[0].mxu0
        %v901 = vadd.f32 0.0, %v900
        %902 = vmatprep.mubr.f32.mxu0 0.0
        %903 = vmatmul.mubr.f32.gmra.mrb[0].mxu0 %v597
        %v904 = vpop.f32.mrb[0].mxu0
        %v905 = vadd.f32 0.0, %v904
        %v906 = vpop.f32.mrb[0].mxu0
        %v907 = vadd.f32 0.0, %v906
        %908 = vmatprep.mubr.f32.mxu0 0.0
        %909 = vmatmul.mubr.f32.gmra.mrb[0].mxu0 %v600
        %v910 = vpop.f32.mrb[0].mxu0
        %v911 = vadd.f32 0.0, %v910
        %v912 = vpop.f32.mrb[0].mxu0
        %v913 = vadd.f32 0.0, %v912
        %914 = vmatprep.mubr.f32.mxu0 0.0
        %915 = vmatmul.mubr.f32.gmra.mrb[0].mxu0 %v603
        %v916 = vpop.f32.mrb[0].mxu0
        %v917 = vadd.f32 0.0, %v916
        %v918 = vpop.f32.mrb[0].mxu0
        %v919 = vadd.f32 0.0, %v918
        %920 = vmatprep.mubr.f32.mxu0 0.0
        %921 = vmatmul.mubr.f32.gmra.mrb[0].mxu0 %v606
        %v922 = vpop.f32.mrb[0].mxu0
        %v923 = vadd.f32 0.0, %v922
        %v924 = vpop.f32.mrb[0].mxu0
        %v925 = vadd.f32 0.0, %v924
        %926 = vmatprep.mubr.f32.mxu0 0.0
        %927 = vmatmul.mubr.f32.gmra.mrb[0].mxu0 %v609
        %v928 = vpop.f32.mrb[0].mxu0
        %v929 = vadd.f32 0.0, %v928
        %v930 = vpop.f32.mrb[0].mxu0
        %v931 = vadd.f32 0.0, %v930
        %932 = vmatprep.mubr.f32.mxu0 0.0
        %933 = vmatmul.mubr.f32.gmra.mrb[0].mxu0 %v612
        %v934 = vpop.f32.mrb[0].mxu0
        %v935 = vadd.f32 0.0, %v934
        %v936 = vpop.f32.mrb[0].mxu0
        %v937 = vadd.f32 0.0, %v936
        %938 = vmatprep.mubr.f32.mxu0 0.0
        %939 = vmatmul.mubr.f32.gmra.mrb[0].mxu0 %v615
        %v940 = vpop.f32.mrb[0].mxu0
        %v941 = vadd.f32 0.0, %v940
        %v942 = vpop.f32.mrb[0].mxu0
        %v943 = vadd.f32 0.0, %v942
        %944 = vmatprep.mubr.f32.mxu0 0.0
        %945 = vmatmul.mubr.f32.gmra.mrb[0].mxu0 %v618
        %v946 = vpop.f32.mrb[0].mxu0
        %v947 = vadd.f32 0.0, %v946
        %v948 = vpop.f32.mrb[0].mxu0
        %v949 = vadd.f32 0.0, %v948
        %950 = vmatprep.mubr.f32.mxu0 0.0
        %951 = vmatmul.mubr.f32.gmra.mrb[0].mxu0 %v621
        %v952 = vpop.f32.mrb[0].mxu0
        %v953 = vadd.f32 0.0, %v952
        %v954 = vpop.f32.mrb[0].mxu0
        %v955 = vadd.f32 0.0, %v954
        %956 = vmatprep.mubr.f32.mxu0 0.0
        %957 = vmatmul.mubr.f32.gmra.mrb[0].mxu0 %v624
        %v958 = vpop.f32.mrb[0].mxu0
        %v959 = vadd.f32 0.0, %v958
        %v960 = vpop.f32.mrb[0].mxu0
        %v961 = vadd.f32 0.0, %v960
        %962 = vmatprep.mubr.f32.mxu0 0.0
        %963 = vmatmul.mubr.f32.gmra.mrb[0].mxu0 %v627
        %v964 = vpop.f32.mrb[0].mxu0
        %v965 = vadd.f32 0.0, %v964
        %v966 = vpop.f32.mrb[0].mxu0
        %v967 = vadd.f32 0.0, %v966
        %968 = vmatprep.mubr.f32.mxu0 0.0
        %969 = vmatmul.mubr.f32.gmra.mrb[0].mxu0 %v630
        %v970 = vpop.f32.mrb[0].mxu0
        %v971 = vadd.f32 0.0, %v970
        %v972 = vpop.f32.mrb[0].mxu0
        %v973 = vadd.f32 0.0, %v972
        %974 = vmatprep.mubr.f32.mxu0 0.0
        %975 = vmatmul.mubr.f32.gmra.mrb[0].mxu0 %v633
        %v976 = vpop.f32.mrb[0].mxu0
        %v977 = vadd.f32 0.0, %v976
        %v978 = vpop.f32.mrb[0].mxu0
        %v979 = vadd.f32 0.0, %v978
        %980 = vdwg.mxu0
        %981 = vmatprep.subr.mxu0 0.0
        %982 = vmatpush1.msra.mxu0 %v572
        %983 = vmatprep.subr.mxu0 0.0
        %984 = vmatpush1.msra.mxu0 %v577
        %985 = vmatprep.subr.mxu0 0.0
        %986 = vmatpush1.msra.mxu0 0.0
        %987 = vmatprep.subr.mxu0 0.0
        %988 = vmatpush1.msra.mxu0 0.0
        %989 = vmatprep.subr.mxu0 0.0
        %990 = vmatpush1.msra.mxu0 0.0
        %991 = vmatprep.subr.mxu0 0.0
        %992 = vmatpush1.msra.mxu0 0.0
        %993 = vmatprep.subr.mxu0 0.0
        %994 = vmatpush1.msra.mxu0 0.0
        %995 = vmatprep.subr.mxu0 0.0
        %996 = vmatpush1.msra.mxu0 0.0
        %997 = vmatprep.subr.mxu0 0.0
        %998 = vmatpush1.msra.mxu0 0.0
        %999 = vmatprep.subr.mxu0 0.0
        %1000 = vmatpush1.msra.mxu0 0.0
        %1001 = vmatprep.subr.mxu0 0.0
        %1002 = vmatpush1.msra.mxu0 0.0
        %1003 = vmatprep.subr.mxu0 0.0
        %1004 = vmatpush1.msra.mxu0 0.0
        %1005 = vmatprep.subr.mxu0 0.0
        %1006 = vmatpush1.msra.mxu0 0.0
        %1007 = vmatprep.subr.mxu0 0.0
        %1008 = vmatpush1.msra.mxu0 0.0
        %1009 = vmatprep.subr.mxu0 0.0
        %1010 = vmatpush1.msra.mxu0 0.0
        %1011 = vmatprep.subr.mxu0 0.0
        %1012 = vmatpush1.msra.mxu0 0.0
        %1013 = vmatprep.subr.mxu0 0.0
        %1014 = vmatpush1.msra.mxu0 0.0
        %1015 = vmatprep.subr.mxu0 0.0
        %1016 = vmatpush1.msra.mxu0 0.0
        %1017 = vmatprep.subr.mxu0 0.0
        %1018 = vmatpush1.msra.mxu0 0.0
        %1019 = vmatprep.subr.mxu0 0.0
        %1020 = vmatpush1.msra.mxu0 0.0
        %1021 = vmatprep.subr.mxu0 0.0
        %1022 = vmatpush1.msra.mxu0 0.0
        %1023 = vmatprep.subr.mxu0 0.0
        %1024 = vmatpush1.msra.mxu0 0.0
        %1025 = vmatprep.subr.mxu0 0.0
        %1026 = vmatpush1.msra.mxu0 0.0
        %1027 = vmatprep.subr.mxu0 0.0
        %1028 = vmatpush1.msra.mxu0 0.0
        %1029 = vmatprep.subr.mxu0 0.0
        %1030 = vmatpush1.msra.mxu0 0.0
        %1031 = vmatprep.subr.mxu0 0.0
        %1032 = vmatpush1.msra.mxu0 0.0
        %1033 = vmatprep.subr.mxu0 0.0
        %1034 = vmatpush1.msra.mxu0 0.0
        %1035 = vmatprep.subr.mxu0 0.0
        %1036 = vmatpush1.msra.mxu0 0.0
        %1037 = vmatprep.subr.mxu0 0.0
        %1038 = vmatpush1.msra.mxu0 0.0
        %1039 = vmatprep.subr.mxu0 0.0
        %1040 = vmatpush1.msra.mxu0 0.0
        %1041 = vmatprep.subr.mxu0 0.0
        %1042 = vmatpush1.msra.mxu0 0.0
        %1043 = vmatprep.subr.mxu0 0.0
        %1044 = vmatpush1.msra.mxu0 0.0
        %1045 = vmatprep.mubr.f32.mxu0 0.0
        %1046 = vmatmul.mubr.f32.gmra.mrb[0].mxu0 %v582
        %v1047 = vpop.f32.mrb[0].mxu0
        %v1048 = vadd.f32 0.0, %v1047
        %v1049 = vpop.f32.mrb[0].mxu0
        %1050 = vmatprep.mubr.f32.mxu0 0.0
        %1051 = vmatmul.mubr.f32.gmra.mrb[0].mxu0 %v585
        %v1052 = vpop.f32.mrb[0].mxu0
        %v1053 = vadd.f32 0.0, %v1052
        %v1054 = vpop.f32.mrb[0].mxu0
        %1055 = vmatprep.mubr.f32.mxu0 0.0
        %1056 = vmatmul.mubr.f32.gmra.mrb[0].mxu0 %v588
        %v1057 = vpop.f32.mrb[0].mxu0
        %v1058 = vadd.f32 0.0, %v1057
        %v1059 = vpop.f32.mrb[0].mxu0
        %1060 = vmatprep.mubr.f32.mxu0 0.0
        %1061 = vmatmul.mubr.f32.gmra.mrb[0].mxu0 %v591
        %v1062 = vpop.f32.mrb[0].mxu0
        %v1063 = vadd.f32 0.0, %v1062
        %v1064 = vpop.f32.mrb[0].mxu0
        %1065 = vmatprep.mubr.f32.mxu0 0.0
        %1066 = vmatmul.mubr.f32.gmra.mrb[0].mxu0 %v594
        %v1067 = vpop.f32.mrb[0].mxu0
        %v1068 = vadd.f32 0.0, %v1067
        %v1069 = vpop.f32.mrb[0].mxu0
        %1070 = vmatprep.mubr.f32.mxu0 0.0
        %1071 = vmatmul.mubr.f32.gmra.mrb[0].mxu0 %v597
        %v1072 = vpop.f32.mrb[0].mxu0
        %v1073 = vadd.f32 0.0, %v1072
        %v1074 = vpop.f32.mrb[0].mxu0
        %1075 = vmatprep.mubr.f32.mxu0 0.0
        %1076 = vmatmul.mubr.f32.gmra.mrb[0].mxu0 %v600
        %v1077 = vpop.f32.mrb[0].mxu0
        %v1078 = vadd.f32 0.0, %v1077
        %v1079 = vpop.f32.mrb[0].mxu0
        %1080 = vmatprep.mubr.f32.mxu0 0.0
        %1081 = vmatmul.mubr.f32.gmra.mrb[0].mxu0 %v603
        %v1082 = vpop.f32.mrb[0].mxu0
        %v1083 = vadd.f32 0.0, %v1082
        %v1084 = vpop.f32.mrb[0].mxu0
        %1085 = vmatprep.mubr.f32.mxu0 0.0
        %1086 = vmatmul.mubr.f32.gmra.mrb[0].mxu0 %v606
        %v1087 = vpop.f32.mrb[0].mxu0
        %v1088 = vadd.f32 0.0, %v1087
        %v1089 = vpop.f32.mrb[0].mxu0
        %1090 = vmatprep.mubr.f32.mxu0 0.0
        %1091 = vmatmul.mubr.f32.gmra.mrb[0].mxu0 %v609
        %v1092 = vpop.f32.mrb[0].mxu0
        %v1093 = vadd.f32 0.0, %v1092
        %v1094 = vpop.f32.mrb[0].mxu0
        %1095 = vmatprep.mubr.f32.mxu0 0.0
        %1096 = vmatmul.mubr.f32.gmra.mrb[0].mxu0 %v612
        %v1097 = vpop.f32.mrb[0].mxu0
        %v1098 = vadd.f32 0.0, %v1097
        %v1099 = vpop.f32.mrb[0].mxu0
        %1100 = vmatprep.mubr.f32.mxu0 0.0
        %1101 = vmatmul.mubr.f32.gmra.mrb[0].mxu0 %v615
        %v1102 = vpop.f32.mrb[0].mxu0
        %v1103 = vadd.f32 0.0, %v1102
        %v1104 = vpop.f32.mrb[0].mxu0
        %1105 = vmatprep.mubr.f32.mxu0 0.0
        %1106 = vmatmul.mubr.f32.gmra.mrb[0].mxu0 %v618
        %v1107 = vpop.f32.mrb[0].mxu0
        %v1108 = vadd.f32 0.0, %v1107
        %v1109 = vpop.f32.mrb[0].mxu0
        %1110 = vmatprep.mubr.f32.mxu0 0.0
        %1111 = vmatmul.mubr.f32.gmra.mrb[0].mxu0 %v621
        %v1112 = vpop.f32.mrb[0].mxu0
        %v1113 = vadd.f32 0.0, %v1112
        %v1114 = vpop.f32.mrb[0].mxu0
        %1115 = vmatprep.mubr.f32.mxu0 0.0
        %1116 = vmatmul.mubr.f32.gmra.mrb[0].mxu0 %v624
        %v1117 = vpop.f32.mrb[0].mxu0
        %v1118 = vadd.f32 0.0, %v1117
        %v1119 = vpop.f32.mrb[0].mxu0
        %1120 = vmatprep.mubr.f32.mxu0 0.0
        %1121 = vmatmul.mubr.f32.gmra.mrb[0].mxu0 %v627
        %v1122 = vpop.f32.mrb[0].mxu0
        %v1123 = vadd.f32 0.0, %v1122
        %v1124 = vpop.f32.mrb[0].mxu0
        %1125 = vmatprep.mubr.f32.mxu0 0.0
        %1126 = vmatmul.mubr.f32.gmra.mrb[0].mxu0 %v630
        %v1127 = vpop.f32.mrb[0].mxu0
        %v1128 = vadd.f32 0.0, %v1127
        %v1129 = vpop.f32.mrb[0].mxu0
        %1130 = vmatprep.mubr.f32.mxu0 0.0
        %1131 = vmatmul.mubr.f32.gmra.mrb[0].mxu0 %v633
        %v1132 = vpop.f32.mrb[0].mxu0
        %v1133 = vadd.f32 0.0, %v1132
        %v1134 = vpop.f32.mrb[0].mxu0
        %1135 = vdwg.mxu0
        %1136 = vst [vmem:[#allocation2] sm:$0xff] %v702
        %1137 = vst [vmem:[#allocation2 + $0x8] sm:$0xff] %v704
        %1138 = vst [vmem:[#allocation2 + $0x10] sm:$0xff] %v875
        %1139 = vst [vmem:[#allocation2 + $0x18] sm:$0xff] %v877
        %1140 = vst.msk [vmem:[#allocation2 + $0x20] sm:$0xff] %vm344, %v1048
        %1141 = vst [vmem:[#allocation2 + $0x28] sm:$0xff] %v708
        %1142 = vst [vmem:[#allocation2 + $0x30] sm:$0xff] %v710
        %1143 = vst [vmem:[#allocation2 + $0x38] sm:$0xff] %v881
        %1144 = vst [vmem:[#allocation2 + $0x40] sm:$0xff] %v883
        %1145 = vst.msk [vmem:[#allocation2 + $0x48] sm:$0xff] %vm344, %v1053
        %1146 = vst [vmem:[#allocation2 + $0x50] sm:$0xff] %v714
        %1147 = vst [vmem:[#allocation2 + $0x58] sm:$0xff] %v716
        %1148 = vst [vmem:[#allocation2 + $0x60] sm:$0xff] %v887
        %1149 = vst [vmem:[#allocation2 + $0x68] sm:$0xff] %v889
        %1150 = vst.msk [vmem:[#allocation2 + $0x70] sm:$0xff] %vm344, %v1058
        %1151 = vst [vmem:[#allocation2 + $0x78] sm:$0xff] %v720
        %1152 = vst [vmem:[#allocation2 + $0x80] sm:$0xff] %v722
        %1153 = vst [vmem:[#allocation2 + $0x88] sm:$0xff] %v893
        %1154 = vst [vmem:[#allocation2 + $0x90] sm:$0xff] %v895
        %1155 = vst.msk [vmem:[#allocation2 + $0x98] sm:$0xff] %vm344, %v1063
        %1156 = vst [vmem:[#allocation2 + $0xa0] sm:$0xff] %v726
        %1157 = vst [vmem:[#allocation2 + $0xa8] sm:$0xff] %v728
        %1158 = vst [vmem:[#allocation2 + $0xb0] sm:$0xff] %v899
        %1159 = vst [vmem:[#allocation2 + $0xb8] sm:$0xff] %v901
        %1160 = vst.msk [vmem:[#allocation2 + $0xc0] sm:$0xff] %vm344, %v1068
        %1161 = vst [vmem:[#allocation2 + $0xc8] sm:$0xff] %v732
        %1162 = vst [vmem:[#allocation2 + $0xd0] sm:$0xff] %v734
        %1163 = vst [vmem:[#allocation2 + $0xd8] sm:$0xff] %v905
        %1164 = vst [vmem:[#allocation2 + $0xe0] sm:$0xff] %v907
        %1165 = vst.msk [vmem:[#allocation2 + $0xe8] sm:$0xff] %vm344, %v1073
        %1166 = vst [vmem:[#allocation2 + $0xf0] sm:$0xff] %v738
        %1167 = vst [vmem:[#allocation2 + $0xf8] sm:$0xff] %v740
        %1168 = vst [vmem:[#allocation2 + $0x100] sm:$0xff] %v911
        %1169 = vst [vmem:[#allocation2 + $0x108] sm:$0xff] %v913
        %1170 = vst.msk [vmem:[#allocation2 + $0x110] sm:$0xff] %vm344, %v1078
        %1171 = vst [vmem:[#allocation2 + $0x118] sm:$0xff] %v744
        %1172 = vst [vmem:[#allocation2 + $0x120] sm:$0xff] %v746
        %1173 = vst [vmem:[#allocation2 + $0x128] sm:$0xff] %v917
        %1174 = vst [vmem:[#allocation2 + $0x130] sm:$0xff] %v919
        %1175 = vst.msk [vmem:[#allocation2 + $0x138] sm:$0xff] %vm344, %v1083
        %1176 = vst [vmem:[#allocation2 + $0x140] sm:$0xff] %v750
        %1177 = vst [vmem:[#allocation2 + $0x148] sm:$0xff] %v752
        %1178 = vst [vmem:[#allocation2 + $0x150] sm:$0xff] %v923
        %1179 = vst [vmem:[#allocation2 + $0x158] sm:$0xff] %v925
        %1180 = vst.msk [vmem:[#allocation2 + $0x160] sm:$0xff] %vm344, %v1088
        %1181 = vst [vmem:[#allocation2 + $0x168] sm:$0xff] %v756
        %1182 = vst [vmem:[#allocation2 + $0x170] sm:$0xff] %v758
        %1183 = vst [vmem:[#allocation2 + $0x178] sm:$0xff] %v929
        %1184 = vst [vmem:[#allocation2 + $0x180] sm:$0xff] %v931
        %1185 = vst.msk [vmem:[#allocation2 + $0x188] sm:$0xff] %vm344, %v1093
        %1186 = vst [vmem:[#allocation2 + $0x190] sm:$0xff] %v762
        %1187 = vst [vmem:[#allocation2 + $0x198] sm:$0xff] %v764
        %1188 = vst [vmem:[#allocation2 + $0x1a0] sm:$0xff] %v935
        %1189 = vst [vmem:[#allocation2 + $0x1a8] sm:$0xff] %v937
        %1190 = vst.msk [vmem:[#allocation2 + $0x1b0] sm:$0xff] %vm344, %v1098
        %1191 = vst [vmem:[#allocation2 + $0x1b8] sm:$0xff] %v768
        %1192 = vst [vmem:[#allocation2 + $0x1c0] sm:$0xff] %v770
        %1193 = vst [vmem:[#allocation2 + $0x1c8] sm:$0xff] %v941
        %1194 = vst [vmem:[#allocation2 + $0x1d0] sm:$0xff] %v943
        %1195 = vst.msk [vmem:[#allocation2 + $0x1d8] sm:$0xff] %vm344, %v1103
        %1196 = vst [vmem:[#allocation2 + $0x1e0] sm:$0xff] %v774
        %1197 = vst [vmem:[#allocation2 + $0x1e8] sm:$0xff] %v776
        %1198 = vst [vmem:[#allocation2 + $0x1f0] sm:$0xff] %v947
        %1199 = vst [vmem:[#allocation2 + $0x1f8] sm:$0xff] %v949
        %1200 = vst.msk [vmem:[#allocation2 + $0x200] sm:$0xff] %vm344, %v1108
        %1201 = vst [vmem:[#allocation2 + $0x208] sm:$0xff] %v780
        %1202 = vst [vmem:[#allocation2 + $0x210] sm:$0xff] %v782
        %1203 = vst [vmem:[#allocation2 + $0x218] sm:$0xff] %v953
        %1204 = vst [vmem:[#allocation2 + $0x220] sm:$0xff] %v955
        %1205 = vst.msk [vmem:[#allocation2 + $0x228] sm:$0xff] %vm344, %v1113
        %1206 = vst [vmem:[#allocation2 + $0x230] sm:$0xff] %v786
        %1207 = vst [vmem:[#allocation2 + $0x238] sm:$0xff] %v788
        %1208 = vst [vmem:[#allocation2 + $0x240] sm:$0xff] %v959
        %1209 = vst [vmem:[#allocation2 + $0x248] sm:$0xff] %v961
        %1210 = vst.msk [vmem:[#allocation2 + $0x250] sm:$0xff] %vm344, %v1118
        %1211 = vst [vmem:[#allocation2 + $0x258] sm:$0xff] %v792
        %1212 = vst [vmem:[#allocation2 + $0x260] sm:$0xff] %v794
        %1213 = vst [vmem:[#allocation2 + $0x268] sm:$0xff] %v965
        %1214 = vst [vmem:[#allocation2 + $0x270] sm:$0xff] %v967
        %1215 = vst.msk [vmem:[#allocation2 + $0x278] sm:$0xff] %vm344, %v1123
        %1216 = vst [vmem:[#allocation2 + $0x280] sm:$0xff] %v798
        %1217 = vst [vmem:[#allocation2 + $0x288] sm:$0xff] %v800
        %1218 = vst [vmem:[#allocation2 + $0x290] sm:$0xff] %v971
        %1219 = vst [vmem:[#allocation2 + $0x298] sm:$0xff] %v973
        %1220 = vst.msk [vmem:[#allocation2 + $0x2a0] sm:$0xff] %vm344, %v1128
        %1221 = vst [vmem:[#allocation2 + $0x2a8] sm:$0xff] %v804
        %1222 = vst [vmem:[#allocation2 + $0x2b0] sm:$0xff] %v806
        %1223 = vst [vmem:[#allocation2 + $0x2b8] sm:$0xff] %v977
        %1224 = vst [vmem:[#allocation2 + $0x2c0] sm:$0xff] %v979
        %1225 = vst.msk [vmem:[#allocation2 + $0x2c8] sm:$0xff] %vm344, %v1133
        %v1226 = vmul.f32 %v342, %v342
        %v1227 = vmul.f32 %v343, %v343
        %v1229 = vsel %vm344, %v1226, 0
        %v1232 = vsel %vm344, %v1227, 0
        %1234 = vmatprep.subr.mxu0 %v303
        %1235 = vmatpush1.msra.mxu0 %v302
        %1236 = vmatprep.subr.mxu0 %v308
        %1237 = vmatpush1.msra.mxu0 %v307
        %1238 = vmatprep.subr.mxu0 %v313
        %1239 = vmatpush1.msra.mxu0 %v312
        %1240 = vmatprep.subr.mxu0 %v318
        %1241 = vmatpush1.msra.mxu0 %v317
        %1242 = vmatprep.subr.mxu0 %v323
        %1243 = vmatpush1.msra.mxu0 %v322
        %1244 = vmatprep.subr.mxu0 %v328
        %1245 = vmatpush1.msra.mxu0 %v327
        %1246 = vmatprep.subr.mxu0 %v333
        %1247 = vmatpush1.msra.mxu0 %v332
        %1248 = vmatprep.subr.mxu0 %v338
        %1249 = vmatpush1.msra.mxu0 %v337
        %1250 = vmatprep.subr.mxu0 0.0
        %1251 = vmatpush1.msra.mxu0 0.0
        %1252 = vmatprep.subr.mxu0 0.0
        %1253 = vmatpush1.msra.mxu0 0.0
        %1254 = vmatprep.subr.mxu0 0.0
        %1255 = vmatpush1.msra.mxu0 0.0
        %1256 = vmatprep.subr.mxu0 0.0
        %1257 = vmatpush1.msra.mxu0 0.0
        %1258 = vmatprep.subr.mxu0 0.0
        %1259 = vmatpush1.msra.mxu0 0.0
        %1260 = vmatprep.subr.mxu0 0.0
        %1261 = vmatpush1.msra.mxu0 0.0
        %1262 = vmatprep.subr.mxu0 0.0
        %1263 = vmatpush1.msra.mxu0 0.0
        %1264 = vmatprep.subr.mxu0 0.0
        %1265 = vmatpush1.msra.mxu0 0.0
        %1266 = vmatprep.subr.mxu0 0.0
        %1267 = vmatpush1.msra.mxu0 0.0
        %1268 = vmatprep.subr.mxu0 0.0
        %1269 = vmatpush1.msra.mxu0 0.0
        %1270 = vmatprep.subr.mxu0 0.0
        %1271 = vmatpush1.msra.mxu0 0.0
        %1272 = vmatprep.subr.mxu0 0.0
        %1273 = vmatpush1.msra.mxu0 0.0
        %1274 = vmatprep.subr.mxu0 0.0
        %1275 = vmatpush1.msra.mxu0 0.0
        %1276 = vmatprep.subr.mxu0 0.0
        %1277 = vmatpush1.msra.mxu0 0.0
        %1278 = vmatprep.subr.mxu0 0.0
        %1279 = vmatpush1.msra.mxu0 0.0
        %1280 = vmatprep.subr.mxu0 0.0
        %1281 = vmatpush1.msra.mxu0 0.0
        %1282 = vmatprep.subr.mxu0 0.0
        %1283 = vmatpush1.msra.mxu0 0.0
        %1284 = vmatprep.subr.mxu0 0.0
        %1285 = vmatpush1.msra.mxu0 0.0
        %1286 = vmatprep.subr.mxu0 0.0
        %1287 = vmatpush1.msra.mxu0 0.0
        %1288 = vmatprep.subr.mxu0 0.0
        %1289 = vmatpush1.msra.mxu0 0.0
        %1290 = vmatprep.subr.mxu0 0.0
        %1291 = vmatpush1.msra.mxu0 0.0
        %1292 = vmatprep.subr.mxu0 0.0
        %1293 = vmatpush1.msra.mxu0 0.0
        %1294 = vmatprep.subr.mxu0 0.0
        %1295 = vmatpush1.msra.mxu0 0.0
        %1296 = vmatprep.subr.mxu0 0.0
        %1297 = vmatpush1.msra.mxu0 0.0
        %1298 = vmatprep.mubr.f32.mxu0 0.0
        %1299 = vmatmul.mubr.f32.gmra.mrb[0].mxu0 %v1229
        %v1300 = vpop.f32.mrb[0].mxu0
        %v1301 = vadd.f32 0.0, %v1300
        %v1302 = vpop.f32.mrb[0].mxu0
        %v1303 = vadd.f32 0.0, %v1302
        %1304 = vmatprep.mubr.f32.mxu0 0.0
        %1305 = vmatmul.mubr.f32.gmra.mrb[0].mxu0 %v1232
        %v1306 = vpop.f32.mrb[0].mxu0
        %v1307 = vadd.f32 0.0, %v1306
        %v1308 = vpop.f32.mrb[0].mxu0
        %v1309 = vadd.f32 0.0, %v1308
        %1310 = vdwg.mxu0
        %1311 = vmatprep.subr.mxu0 %v305
        %1312 = vmatpush1.msra.mxu0 %v304
        %1313 = vmatprep.subr.mxu0 %v310
        %1314 = vmatpush1.msra.mxu0 %v309
        %1315 = vmatprep.subr.mxu0 %v315
        %1316 = vmatpush1.msra.mxu0 %v314
        %1317 = vmatprep.subr.mxu0 %v320
        %1318 = vmatpush1.msra.mxu0 %v319
        %1319 = vmatprep.subr.mxu0 %v325
        %1320 = vmatpush1.msra.mxu0 %v324
        %1321 = vmatprep.subr.mxu0 %v330
        %1322 = vmatpush1.msra.mxu0 %v329
        %1323 = vmatprep.subr.mxu0 %v335
        %1324 = vmatpush1.msra.mxu0 %v334
        %1325 = vmatprep.subr.mxu0 %v340
        %1326 = vmatpush1.msra.mxu0 %v339
        %1327 = vmatprep.subr.mxu0 0.0
        %1328 = vmatpush1.msra.mxu0 0.0
        %1329 = vmatprep.subr.mxu0 0.0
        %1330 = vmatpush1.msra.mxu0 0.0
        %1331 = vmatprep.subr.mxu0 0.0
        %1332 = vmatpush1.msra.mxu0 0.0
        %1333 = vmatprep.subr.mxu0 0.0
        %1334 = vmatpush1.msra.mxu0 0.0
        %1335 = vmatprep.subr.mxu0 0.0
        %1336 = vmatpush1.msra.mxu0 0.0
        %1337 = vmatprep.subr.mxu0 0.0
        %1338 = vmatpush1.msra.mxu0 0.0
        %1339 = vmatprep.subr.mxu0 0.0
        %1340 = vmatpush1.msra.mxu0 0.0
        %1341 = vmatprep.subr.mxu0 0.0
        %1342 = vmatpush1.msra.mxu0 0.0
        %1343 = vmatprep.subr.mxu0 0.0
        %1344 = vmatpush1.msra.mxu0 0.0
        %1345 = vmatprep.subr.mxu0 0.0
        %1346 = vmatpush1.msra.mxu0 0.0
        %1347 = vmatprep.subr.mxu0 0.0
        %1348 = vmatpush1.msra.mxu0 0.0
        %1349 = vmatprep.subr.mxu0 0.0
        %1350 = vmatpush1.msra.mxu0 0.0
        %1351 = vmatprep.subr.mxu0 0.0
        %1352 = vmatpush1.msra.mxu0 0.0
        %1353 = vmatprep.subr.mxu0 0.0
        %1354 = vmatpush1.msra.mxu0 0.0
        %1355 = vmatprep.subr.mxu0 0.0
        %1356 = vmatpush1.msra.mxu0 0.0
        %1357 = vmatprep.subr.mxu0 0.0
        %1358 = vmatpush1.msra.mxu0 0.0
        %1359 = vmatprep.subr.mxu0 0.0
        %1360 = vmatpush1.msra.mxu0 0.0
        %1361 = vmatprep.subr.mxu0 0.0
        %1362 = vmatpush1.msra.mxu0 0.0
        %1363 = vmatprep.subr.mxu0 0.0
        %1364 = vmatpush1.msra.mxu0 0.0
        %1365 = vmatprep.subr.mxu0 0.0
        %1366 = vmatpush1.msra.mxu0 0.0
        %1367 = vmatprep.subr.mxu0 0.0
        %1368 = vmatpush1.msra.mxu0 0.0
        %1369 = vmatprep.subr.mxu0 0.0
        %1370 = vmatpush1.msra.mxu0 0.0
        %1371 = vmatprep.subr.mxu0 0.0
        %1372 = vmatpush1.msra.mxu0 0.0
        %1373 = vmatprep.subr.mxu0 0.0
        %1374 = vmatpush1.msra.mxu0 0.0
        %1375 = vmatprep.mubr.f32.mxu0 0.0
        %1376 = vmatmul.mubr.f32.gmra.mrb[0].mxu0 %v1229
        %v1377 = vpop.f32.mrb[0].mxu0
        %v1378 = vadd.f32 0.0, %v1377
        %v1379 = vpop.f32.mrb[0].mxu0
        %v1380 = vadd.f32 0.0, %v1379
        %1381 = vmatprep.mubr.f32.mxu0 0.0
        %1382 = vmatmul.mubr.f32.gmra.mrb[0].mxu0 %v1232
        %v1383 = vpop.f32.mrb[0].mxu0
        %v1384 = vadd.f32 0.0, %v1383
        %v1385 = vpop.f32.mrb[0].mxu0
        %v1386 = vadd.f32 0.0, %v1385
        %1387 = vdwg.mxu0
        %1388 = vmatprep.subr.mxu0 0.0
        %1389 = vmatpush1.msra.mxu0 %v306
        %1390 = vmatprep.subr.mxu0 0.0
        %1391 = vmatpush1.msra.mxu0 %v311
        %1392 = vmatprep.subr.mxu0 0.0
        %1393 = vmatpush1.msra.mxu0 %v316
        %1394 = vmatprep.subr.mxu0 0.0
        %1395 = vmatpush1.msra.mxu0 %v321
        %1396 = vmatprep.subr.mxu0 0.0
        %1397 = vmatpush1.msra.mxu0 %v326
        %1398 = vmatprep.subr.mxu0 0.0
        %1399 = vmatpush1.msra.mxu0 %v331
        %1400 = vmatprep.subr.mxu0 0.0
        %1401 = vmatpush1.msra.mxu0 %v336
        %1402 = vmatprep.subr.mxu0 0.0
        %1403 = vmatpush1.msra.mxu0 %v341
        %1404 = vmatprep.subr.mxu0 0.0
        %1405 = vmatpush1.msra.mxu0 0.0
        %1406 = vmatprep.subr.mxu0 0.0
        %1407 = vmatpush1.msra.mxu0 0.0
        %1408 = vmatprep.subr.mxu0 0.0
        %1409 = vmatpush1.msra.mxu0 0.0
        %1410 = vmatprep.subr.mxu0 0.0
        %1411 = vmatpush1.msra.mxu0 0.0
        %1412 = vmatprep.subr.mxu0 0.0
        %1413 = vmatpush1.msra.mxu0 0.0
        %1414 = vmatprep.subr.mxu0 0.0
        %1415 = vmatpush1.msra.mxu0 0.0
        %1416 = vmatprep.subr.mxu0 0.0
        %1417 = vmatpush1.msra.mxu0 0.0
        %1418 = vmatprep.subr.mxu0 0.0
        %1419 = vmatpush1.msra.mxu0 0.0
        %1420 = vmatprep.subr.mxu0 0.0
        %1421 = vmatpush1.msra.mxu0 0.0
        %1422 = vmatprep.subr.mxu0 0.0
        %1423 = vmatpush1.msra.mxu0 0.0
        %1424 = vmatprep.subr.mxu0 0.0
        %1425 = vmatpush1.msra.mxu0 0.0
        %1426 = vmatprep.subr.mxu0 0.0
        %1427 = vmatpush1.msra.mxu0 0.0
        %1428 = vmatprep.subr.mxu0 0.0
        %1429 = vmatpush1.msra.mxu0 0.0
        %1430 = vmatprep.subr.mxu0 0.0
        %1431 = vmatpush1.msra.mxu0 0.0
        %1432 = vmatprep.subr.mxu0 0.0
        %1433 = vmatpush1.msra.mxu0 0.0
        %1434 = vmatprep.subr.mxu0 0.0
        %1435 = vmatpush1.msra.mxu0 0.0
        %1436 = vmatprep.subr.mxu0 0.0
        %1437 = vmatpush1.msra.mxu0 0.0
        %1438 = vmatprep.subr.mxu0 0.0
        %1439 = vmatpush1.msra.mxu0 0.0
        %1440 = vmatprep.subr.mxu0 0.0
        %1441 = vmatpush1.msra.mxu0 0.0
        %1442 = vmatprep.subr.mxu0 0.0
        %1443 = vmatpush1.msra.mxu0 0.0
        %1444 = vmatprep.subr.mxu0 0.0
        %1445 = vmatpush1.msra.mxu0 0.0
        %1446 = vmatprep.subr.mxu0 0.0
        %1447 = vmatpush1.msra.mxu0 0.0
        %1448 = vmatprep.subr.mxu0 0.0
        %1449 = vmatpush1.msra.mxu0 0.0
        %1450 = vmatprep.subr.mxu0 0.0
        %1451 = vmatpush1.msra.mxu0 0.0
        %1452 = vmatprep.mubr.f32.mxu0 0.0
        %1453 = vmatmul.mubr.f32.gmra.mrb[0].mxu0 %v1229
        %v1454 = vpop.f32.mrb[0].mxu0
        %v1455 = vadd.f32 0.0, %v1454
        %v1456 = vpop.f32.mrb[0].mxu0
        %1457 = vmatprep.mubr.f32.mxu0 0.0
        %1458 = vmatmul.mubr.f32.gmra.mrb[0].mxu0 %v1232
        %v1459 = vpop.f32.mrb[0].mxu0
        %v1460 = vadd.f32 0.0, %v1459
        %v1461 = vpop.f32.mrb[0].mxu0
        %1462 = vdwg.mxu0
        %1463 = vmatprep.subr.mxu0 %v1303
        %1464 = vmatpush1.msra.mxu0 %v1301
        %1465 = vmatprep.subr.mxu0 %v1309
        %1466 = vmatpush1.msra.mxu0 %v1307
        %1467 = vmatprep.subr.mxu0 0.0
        %1468 = vmatpush1.msra.mxu0 0.0
        %1469 = vmatprep.subr.mxu0 0.0
        %1470 = vmatpush1.msra.mxu0 0.0
        %1471 = vmatprep.subr.mxu0 0.0
        %1472 = vmatpush1.msra.mxu0 0.0
        %1473 = vmatprep.subr.mxu0 0.0
        %1474 = vmatpush1.msra.mxu0 0.0
        %1475 = vmatprep.subr.mxu0 0.0
        %1476 = vmatpush1.msra.mxu0 0.0
        %1477 = vmatprep.subr.mxu0 0.0
        %1478 = vmatpush1.msra.mxu0 0.0
        %1479 = vmatprep.subr.mxu0 0.0
        %1480 = vmatpush1.msra.mxu0 0.0
        %1481 = vmatprep.subr.mxu0 0.0
        %1482 = vmatpush1.msra.mxu0 0.0
        %1483 = vmatprep.subr.mxu0 0.0
        %1484 = vmatpush1.msra.mxu0 0.0
        %1485 = vmatprep.subr.mxu0 0.0
        %1486 = vmatpush1.msra.mxu0 0.0
        %1487 = vmatprep.subr.mxu0 0.0
        %1488 = vmatpush1.msra.mxu0 0.0
        %1489 = vmatprep.subr.mxu0 0.0
        %1490 = vmatpush1.msra.mxu0 0.0
        %1491 = vmatprep.subr.mxu0 0.0
        %1492 = vmatpush1.msra.mxu0 0.0
        %1493 = vmatprep.subr.mxu0 0.0
        %1494 = vmatpush1.msra.mxu0 0.0
        %1495 = vmatprep.subr.mxu0 0.0
        %1496 = vmatpush1.msra.mxu0 0.0
        %1497 = vmatprep.subr.mxu0 0.0
        %1498 = vmatpush1.msra.mxu0 0.0
        %1499 = vmatprep.subr.mxu0 0.0
        %1500 = vmatpush1.msra.mxu0 0.0
        %1501 = vmatprep.subr.mxu0 0.0
        %1502 = vmatpush1.msra.mxu0 0.0
        %1503 = vmatprep.subr.mxu0 0.0
        %1504 = vmatpush1.msra.mxu0 0.0
        %1505 = vmatprep.subr.mxu0 0.0
        %1506 = vmatpush1.msra.mxu0 0.0
        %1507 = vmatprep.subr.mxu0 0.0
        %1508 = vmatpush1.msra.mxu0 0.0
        %1509 = vmatprep.subr.mxu0 0.0
        %1510 = vmatpush1.msra.mxu0 0.0
        %1511 = vmatprep.subr.mxu0 0.0
        %1512 = vmatpush1.msra.mxu0 0.0
        %1513 = vmatprep.subr.mxu0 0.0
        %1514 = vmatpush1.msra.mxu0 0.0
        %1515 = vmatprep.subr.mxu0 0.0
        %1516 = vmatpush1.msra.mxu0 0.0
        %1517 = vmatprep.subr.mxu0 0.0
        %1518 = vmatpush1.msra.mxu0 0.0
        %1519 = vmatprep.subr.mxu0 0.0
        %1520 = vmatpush1.msra.mxu0 0.0
        %1521 = vmatprep.subr.mxu0 0.0
        %1522 = vmatpush1.msra.mxu0 0.0
        %1523 = vmatprep.subr.mxu0 0.0
        %1524 = vmatpush1.msra.mxu0 0.0
        %1525 = vmatprep.subr.mxu0 0.0
        %1526 = vmatpush1.msra.mxu0 0.0
        %1527 = vmatprep.mubr.f32.mxu0 0.0
        %1528 = vmatmul.mubr.f32.gmra.mrb[0].mxu0 %v582
        %v1529 = vpop.f32.mrb[0].mxu0
        %v1530 = vadd.f32 0.0, %v1529
        %v1531 = vpop.f32.mrb[0].mxu0
        %v1532 = vadd.f32 0.0, %v1531
        %1533 = vmatprep.mubr.f32.mxu0 0.0
        %1534 = vmatmul.mubr.f32.gmra.mrb[0].mxu0 %v585
        %v1535 = vpop.f32.mrb[0].mxu0
        %v1536 = vadd.f32 0.0, %v1535
        %v1537 = vpop.f32.mrb[0].mxu0
        %v1538 = vadd.f32 0.0, %v1537
        %1539 = vmatprep.mubr.f32.mxu0 0.0
        %1540 = vmatmul.mubr.f32.gmra.mrb[0].mxu0 %v588
        %v1541 = vpop.f32.mrb[0].mxu0
        %v1542 = vadd.f32 0.0, %v1541
        %v1543 = vpop.f32.mrb[0].mxu0
        %v1544 = vadd.f32 0.0, %v1543
        %1545 = vmatprep.mubr.f32.mxu0 0.0
        %1546 = vmatmul.mubr.f32.gmra.mrb[0].mxu0 %v591
        %v1547 = vpop.f32.mrb[0].mxu0
        %v1548 = vadd.f32 0.0, %v1547
        %v1549 = vpop.f32.mrb[0].mxu0
        %v1550 = vadd.f32 0.0, %v1549
        %1551 = vmatprep.mubr.f32.mxu0 0.0
        %1552 = vmatmul.mubr.f32.gmra.mrb[0].mxu0 %v594
        %v1553 = vpop.f32.mrb[0].mxu0
        %v1554 = vadd.f32 0.0, %v1553
        %v1555 = vpop.f32.mrb[0].mxu0
        %v1556 = vadd.f32 0.0, %v1555
        %1557 = vmatprep.mubr.f32.mxu0 0.0
        %1558 = vmatmul.mubr.f32.gmra.mrb[0].mxu0 %v597
        %v1559 = vpop.f32.mrb[0].mxu0
        %v1560 = vadd.f32 0.0, %v1559
        %v1561 = vpop.f32.mrb[0].mxu0
        %v1562 = vadd.f32 0.0, %v1561
        %1563 = vmatprep.mubr.f32.mxu0 0.0
        %1564 = vmatmul.mubr.f32.gmra.mrb[0].mxu0 %v600
        %v1565 = vpop.f32.mrb[0].mxu0
        %v1566 = vadd.f32 0.0, %v1565
        %v1567 = vpop.f32.mrb[0].mxu0
        %v1568 = vadd.f32 0.0, %v1567
        %1569 = vmatprep.mubr.f32.mxu0 0.0
        %1570 = vmatmul.mubr.f32.gmra.mrb[0].mxu0 %v603
        %v1571 = vpop.f32.mrb[0].mxu0
        %v1572 = vadd.f32 0.0, %v1571
        %v1573 = vpop.f32.mrb[0].mxu0
        %v1574 = vadd.f32 0.0, %v1573
        %1575 = vmatprep.mubr.f32.mxu0 0.0
        %1576 = vmatmul.mubr.f32.gmra.mrb[0].mxu0 %v606
        %v1577 = vpop.f32.mrb[0].mxu0
        %v1578 = vadd.f32 0.0, %v1577
        %v1579 = vpop.f32.mrb[0].mxu0
        %v1580 = vadd.f32 0.0, %v1579
        %1581 = vmatprep.mubr.f32.mxu0 0.0
        %1582 = vmatmul.mubr.f32.gmra.mrb[0].mxu0 %v609
        %v1583 = vpop.f32.mrb[0].mxu0
        %v1584 = vadd.f32 0.0, %v1583
        %v1585 = vpop.f32.mrb[0].mxu0
        %v1586 = vadd.f32 0.0, %v1585
        %1587 = vmatprep.mubr.f32.mxu0 0.0
        %1588 = vmatmul.mubr.f32.gmra.mrb[0].mxu0 %v612
        %v1589 = vpop.f32.mrb[0].mxu0
        %v1590 = vadd.f32 0.0, %v1589
        %v1591 = vpop.f32.mrb[0].mxu0
        %v1592 = vadd.f32 0.0, %v1591
        %1593 = vmatprep.mubr.f32.mxu0 0.0
        %1594 = vmatmul.mubr.f32.gmra.mrb[0].mxu0 %v615
        %v1595 = vpop.f32.mrb[0].mxu0
        %v1596 = vadd.f32 0.0, %v1595
        %v1597 = vpop.f32.mrb[0].mxu0
        %v1598 = vadd.f32 0.0, %v1597
        %1599 = vmatprep.mubr.f32.mxu0 0.0
        %1600 = vmatmul.mubr.f32.gmra.mrb[0].mxu0 %v618
        %v1601 = vpop.f32.mrb[0].mxu0
        %v1602 = vadd.f32 0.0, %v1601
        %v1603 = vpop.f32.mrb[0].mxu0
        %v1604 = vadd.f32 0.0, %v1603
        %1605 = vmatprep.mubr.f32.mxu0 0.0
        %1606 = vmatmul.mubr.f32.gmra.mrb[0].mxu0 %v621
        %v1607 = vpop.f32.mrb[0].mxu0
        %v1608 = vadd.f32 0.0, %v1607
        %v1609 = vpop.f32.mrb[0].mxu0
        %v1610 = vadd.f32 0.0, %v1609
        %1611 = vmatprep.mubr.f32.mxu0 0.0
        %1612 = vmatmul.mubr.f32.gmra.mrb[0].mxu0 %v624
        %v1613 = vpop.f32.mrb[0].mxu0
        %v1614 = vadd.f32 0.0, %v1613
        %v1615 = vpop.f32.mrb[0].mxu0
        %v1616 = vadd.f32 0.0, %v1615
        %1617 = vmatprep.mubr.f32.mxu0 0.0
        %1618 = vmatmul.mubr.f32.gmra.mrb[0].mxu0 %v627
        %v1619 = vpop.f32.mrb[0].mxu0
        %v1620 = vadd.f32 0.0, %v1619
        %v1621 = vpop.f32.mrb[0].mxu0
        %v1622 = vadd.f32 0.0, %v1621
        %1623 = vmatprep.mubr.f32.mxu0 0.0
        %1624 = vmatmul.mubr.f32.gmra.mrb[0].mxu0 %v630
        %v1625 = vpop.f32.mrb[0].mxu0
        %v1626 = vadd.f32 0.0, %v1625
        %v1627 = vpop.f32.mrb[0].mxu0
        %v1628 = vadd.f32 0.0, %v1627
        %1629 = vmatprep.mubr.f32.mxu0 0.0
        %1630 = vmatmul.mubr.f32.gmra.mrb[0].mxu0 %v633
        %v1631 = vpop.f32.mrb[0].mxu0
        %v1632 = vadd.f32 0.0, %v1631
        %v1633 = vpop.f32.mrb[0].mxu0
        %v1634 = vadd.f32 0.0, %v1633
        %1635 = vdwg.mxu0
        %1636 = vmatprep.subr.mxu0 %v1380
        %1637 = vmatpush1.msra.mxu0 %v1378
        %1638 = vmatprep.subr.mxu0 %v1386
        %1639 = vmatpush1.msra.mxu0 %v1384
        %1640 = vmatprep.subr.mxu0 0.0
        %1641 = vmatpush1.msra.mxu0 0.0
        %1642 = vmatprep.subr.mxu0 0.0
        %1643 = vmatpush1.msra.mxu0 0.0
        %1644 = vmatprep.subr.mxu0 0.0
        %1645 = vmatpush1.msra.mxu0 0.0
        %1646 = vmatprep.subr.mxu0 0.0
        %1647 = vmatpush1.msra.mxu0 0.0
        %1648 = vmatprep.subr.mxu0 0.0
        %1649 = vmatpush1.msra.mxu0 0.0
        %1650 = vmatprep.subr.mxu0 0.0
        %1651 = vmatpush1.msra.mxu0 0.0
        %1652 = vmatprep.subr.mxu0 0.0
        %1653 = vmatpush1.msra.mxu0 0.0
        %1654 = vmatprep.subr.mxu0 0.0
        %1655 = vmatpush1.msra.mxu0 0.0
        %1656 = vmatprep.subr.mxu0 0.0
        %1657 = vmatpush1.msra.mxu0 0.0
        %1658 = vmatprep.subr.mxu0 0.0
        %1659 = vmatpush1.msra.mxu0 0.0
        %1660 = vmatprep.subr.mxu0 0.0
        %1661 = vmatpush1.msra.mxu0 0.0
        %1662 = vmatprep.subr.mxu0 0.0
        %1663 = vmatpush1.msra.mxu0 0.0
        %1664 = vmatprep.subr.mxu0 0.0
        %1665 = vmatpush1.msra.mxu0 0.0
        %1666 = vmatprep.subr.mxu0 0.0
        %1667 = vmatpush1.msra.mxu0 0.0
        %1668 = vmatprep.subr.mxu0 0.0
        %1669 = vmatpush1.msra.mxu0 0.0
        %1670 = vmatprep.subr.mxu0 0.0
        %1671 = vmatpush1.msra.mxu0 0.0
        %1672 = vmatprep.subr.mxu0 0.0
        %1673 = vmatpush1.msra.mxu0 0.0
        %1674 = vmatprep.subr.mxu0 0.0
        %1675 = vmatpush1.msra.mxu0 0.0
        %1676 = vmatprep.subr.mxu0 0.0
        %1677 = vmatpush1.msra.mxu0 0.0
        %1678 = vmatprep.subr.mxu0 0.0
        %1679 = vmatpush1.msra.mxu0 0.0
        %1680 = vmatprep.subr.mxu0 0.0
        %1681 = vmatpush1.msra.mxu0 0.0
        %1682 = vmatprep.subr.mxu0 0.0
        %1683 = vmatpush1.msra.mxu0 0.0
        %1684 = vmatprep.subr.mxu0 0.0
        %1685 = vmatpush1.msra.mxu0 0.0
        %1686 = vmatprep.subr.mxu0 0.0
        %1687 = vmatpush1.msra.mxu0 0.0
        %1688 = vmatprep.subr.mxu0 0.0
        %1689 = vmatpush1.msra.mxu0 0.0
        %1690 = vmatprep.subr.mxu0 0.0
        %1691 = vmatpush1.msra.mxu0 0.0
        %1692 = vmatprep.subr.mxu0 0.0
        %1693 = vmatpush1.msra.mxu0 0.0
        %1694 = vmatprep.subr.mxu0 0.0
        %1695 = vmatpush1.msra.mxu0 0.0
        %1696 = vmatprep.subr.mxu0 0.0
        %1697 = vmatpush1.msra.mxu0 0.0
        %1698 = vmatprep.subr.mxu0 0.0
        %1699 = vmatpush1.msra.mxu0 0.0
        %1700 = vmatprep.mubr.f32.mxu0 0.0
        %1701 = vmatmul.mubr.f32.gmra.mrb[0].mxu0 %v582
        %v1702 = vpop.f32.mrb[0].mxu0
        %v1703 = vadd.f32 0.0, %v1702
        %v1704 = vpop.f32.mrb[0].mxu0
        %v1705 = vadd.f32 0.0, %v1704
        %1706 = vmatprep.mubr.f32.mxu0 0.0
        %1707 = vmatmul.mubr.f32.gmra.mrb[0].mxu0 %v585
        %v1708 = vpop.f32.mrb[0].mxu0
        %v1709 = vadd.f32 0.0, %v1708
        %v1710 = vpop.f32.mrb[0].mxu0
        %v1711 = vadd.f32 0.0, %v1710
        %1712 = vmatprep.mubr.f32.mxu0 0.0
        %1713 = vmatmul.mubr.f32.gmra.mrb[0].mxu0 %v588
        %v1714 = vpop.f32.mrb[0].mxu0
        %v1715 = vadd.f32 0.0, %v1714
        %v1716 = vpop.f32.mrb[0].mxu0
        %v1717 = vadd.f32 0.0, %v1716
        %1718 = vmatprep.mubr.f32.mxu0 0.0
        %1719 = vmatmul.mubr.f32.gmra.mrb[0].mxu0 %v591
        %v1720 = vpop.f32.mrb[0].mxu0
        %v1721 = vadd.f32 0.0, %v1720
        %v1722 = vpop.f32.mrb[0].mxu0
        %v1723 = vadd.f32 0.0, %v1722
        %1724 = vmatprep.mubr.f32.mxu0 0.0
        %1725 = vmatmul.mubr.f32.gmra.mrb[0].mxu0 %v594
        %v1726 = vpop.f32.mrb[0].mxu0
        %v1727 = vadd.f32 0.0, %v1726
        %v1728 = vpop.f32.mrb[0].mxu0
        %v1729 = vadd.f32 0.0, %v1728
        %1730 = vmatprep.mubr.f32.mxu0 0.0
        %1731 = vmatmul.mubr.f32.gmra.mrb[0].mxu0 %v597
        %v1732 = vpop.f32.mrb[0].mxu0
        %v1733 = vadd.f32 0.0, %v1732
        %v1734 = vpop.f32.mrb[0].mxu0
        %v1735 = vadd.f32 0.0, %v1734
        %1736 = vmatprep.mubr.f32.mxu0 0.0
        %1737 = vmatmul.mubr.f32.gmra.mrb[0].mxu0 %v600
        %v1738 = vpop.f32.mrb[0].mxu0
        %v1739 = vadd.f32 0.0, %v1738
        %v1740 = vpop.f32.mrb[0].mxu0
        %v1741 = vadd.f32 0.0, %v1740
        %1742 = vmatprep.mubr.f32.mxu0 0.0
        %1743 = vmatmul.mubr.f32.gmra.mrb[0].mxu0 %v603
        %v1744 = vpop.f32.mrb[0].mxu0
        %v1745 = vadd.f32 0.0, %v1744
        %v1746 = vpop.f32.mrb[0].mxu0
        %v1747 = vadd.f32 0.0, %v1746
        %1748 = vmatprep.mubr.f32.mxu0 0.0
        %1749 = vmatmul.mubr.f32.gmra.mrb[0].mxu0 %v606
        %v1750 = vpop.f32.mrb[0].mxu0
        %v1751 = vadd.f32 0.0, %v1750
        %v1752 = vpop.f32.mrb[0].mxu0
        %v1753 = vadd.f32 0.0, %v1752
        %1754 = vmatprep.mubr.f32.mxu0 0.0
        %1755 = vmatmul.mubr.f32.gmra.mrb[0].mxu0 %v609
        %v1756 = vpop.f32.mrb[0].mxu0
        %v1757 = vadd.f32 0.0, %v1756
        %v1758 = vpop.f32.mrb[0].mxu0
        %v1759 = vadd.f32 0.0, %v1758
        %1760 = vmatprep.mubr.f32.mxu0 0.0
        %1761 = vmatmul.mubr.f32.gmra.mrb[0].mxu0 %v612
        %v1762 = vpop.f32.mrb[0].mxu0
        %v1763 = vadd.f32 0.0, %v1762
        %v1764 = vpop.f32.mrb[0].mxu0
        %v1765 = vadd.f32 0.0, %v1764
        %1766 = vmatprep.mubr.f32.mxu0 0.0
        %1767 = vmatmul.mubr.f32.gmra.mrb[0].mxu0 %v615
        %v1768 = vpop.f32.mrb[0].mxu0
        %v1769 = vadd.f32 0.0, %v1768
        %v1770 = vpop.f32.mrb[0].mxu0
        %v1771 = vadd.f32 0.0, %v1770
        %1772 = vmatprep.mubr.f32.mxu0 0.0
        %1773 = vmatmul.mubr.f32.gmra.mrb[0].mxu0 %v618
        %v1774 = vpop.f32.mrb[0].mxu0
        %v1775 = vadd.f32 0.0, %v1774
        %v1776 = vpop.f32.mrb[0].mxu0
        %v1777 = vadd.f32 0.0, %v1776
        %1778 = vmatprep.mubr.f32.mxu0 0.0
        %1779 = vmatmul.mubr.f32.gmra.mrb[0].mxu0 %v621
        %v1780 = vpop.f32.mrb[0].mxu0
        %v1781 = vadd.f32 0.0, %v1780
        %v1782 = vpop.f32.mrb[0].mxu0
        %v1783 = vadd.f32 0.0, %v1782
        %1784 = vmatprep.mubr.f32.mxu0 0.0
        %1785 = vmatmul.mubr.f32.gmra.mrb[0].mxu0 %v624
        %v1786 = vpop.f32.mrb[0].mxu0
        %v1787 = vadd.f32 0.0, %v1786
        %v1788 = vpop.f32.mrb[0].mxu0
        %v1789 = vadd.f32 0.0, %v1788
        %1790 = vmatprep.mubr.f32.mxu0 0.0
        %1791 = vmatmul.mubr.f32.gmra.mrb[0].mxu0 %v627
        %v1792 = vpop.f32.mrb[0].mxu0
        %v1793 = vadd.f32 0.0, %v1792
        %v1794 = vpop.f32.mrb[0].mxu0
        %v1795 = vadd.f32 0.0, %v1794
        %1796 = vmatprep.mubr.f32.mxu0 0.0
        %1797 = vmatmul.mubr.f32.gmra.mrb[0].mxu0 %v630
        %v1798 = vpop.f32.mrb[0].mxu0
        %v1799 = vadd.f32 0.0, %v1798
        %v1800 = vpop.f32.mrb[0].mxu0
        %v1801 = vadd.f32 0.0, %v1800
        %1802 = vmatprep.mubr.f32.mxu0 0.0
        %1803 = vmatmul.mubr.f32.gmra.mrb[0].mxu0 %v633
        %v1804 = vpop.f32.mrb[0].mxu0
        %v1805 = vadd.f32 0.0, %v1804
        %v1806 = vpop.f32.mrb[0].mxu0
        %v1807 = vadd.f32 0.0, %v1806
        %1808 = vdwg.mxu0
        %1809 = vmatprep.subr.mxu0 0.0
        %1810 = vmatpush1.msra.mxu0 %v1455
        %1811 = vmatprep.subr.mxu0 0.0
        %1812 = vmatpush1.msra.mxu0 %v1460
        %1813 = vmatprep.subr.mxu0 0.0
        %1814 = vmatpush1.msra.mxu0 0.0
        %1815 = vmatprep.subr.mxu0 0.0
        %1816 = vmatpush1.msra.mxu0 0.0
        %1817 = vmatprep.subr.mxu0 0.0
        %1818 = vmatpush1.msra.mxu0 0.0
        %1819 = vmatprep.subr.mxu0 0.0
        %1820 = vmatpush1.msra.mxu0 0.0
        %1821 = vmatprep.subr.mxu0 0.0
        %1822 = vmatpush1.msra.mxu0 0.0
        %1823 = vmatprep.subr.mxu0 0.0
        %1824 = vmatpush1.msra.mxu0 0.0
        %1825 = vmatprep.subr.mxu0 0.0
        %1826 = vmatpush1.msra.mxu0 0.0
        %1827 = vmatprep.subr.mxu0 0.0
        %1828 = vmatpush1.msra.mxu0 0.0
        %1829 = vmatprep.subr.mxu0 0.0
        %1830 = vmatpush1.msra.mxu0 0.0
        %1831 = vmatprep.subr.mxu0 0.0
        %1832 = vmatpush1.msra.mxu0 0.0
        %1833 = vmatprep.subr.mxu0 0.0
        %1834 = vmatpush1.msra.mxu0 0.0
        %1835 = vmatprep.subr.mxu0 0.0
        %1836 = vmatpush1.msra.mxu0 0.0
        %1837 = vmatprep.subr.mxu0 0.0
        %1838 = vmatpush1.msra.mxu0 0.0
        %1839 = vmatprep.subr.mxu0 0.0
        %1840 = vmatpush1.msra.mxu0 0.0
        %1841 = vmatprep.subr.mxu0 0.0
        %1842 = vmatpush1.msra.mxu0 0.0
        %1843 = vmatprep.subr.mxu0 0.0
        %1844 = vmatpush1.msra.mxu0 0.0
        %1845 = vmatprep.subr.mxu0 0.0
        %1846 = vmatpush1.msra.mxu0 0.0
        %1847 = vmatprep.subr.mxu0 0.0
        %1848 = vmatpush1.msra.mxu0 0.0
        %1849 = vmatprep.subr.mxu0 0.0
        %1850 = vmatpush1.msra.mxu0 0.0
        %1851 = vmatprep.subr.mxu0 0.0
        %1852 = vmatpush1.msra.mxu0 0.0
        %1853 = vmatprep.subr.mxu0 0.0
        %1854 = vmatpush1.msra.mxu0 0.0
        %1855 = vmatprep.subr.mxu0 0.0
        %1856 = vmatpush1.msra.mxu0 0.0
        %1857 = vmatprep.subr.mxu0 0.0
        %1858 = vmatpush1.msra.mxu0 0.0
        %1859 = vmatprep.subr.mxu0 0.0
        %1860 = vmatpush1.msra.mxu0 0.0
        %1861 = vmatprep.subr.mxu0 0.0
        %1862 = vmatpush1.msra.mxu0 0.0
        %1863 = vmatprep.subr.mxu0 0.0
        %1864 = vmatpush1.msra.mxu0 0.0
        %1865 = vmatprep.subr.mxu0 0.0
        %1866 = vmatpush1.msra.mxu0 0.0
        %1867 = vmatprep.subr.mxu0 0.0
        %1868 = vmatpush1.msra.mxu0 0.0
        %1869 = vmatprep.subr.mxu0 0.0
        %1870 = vmatpush1.msra.mxu0 0.0
        %1871 = vmatprep.subr.mxu0 0.0
        %1872 = vmatpush1.msra.mxu0 0.0
        %1873 = vmatprep.mubr.f32.mxu0 0.0
        %1874 = vmatmul.mubr.f32.gmra.mrb[0].mxu0 %v582
        %v1875 = vpop.f32.mrb[0].mxu0
        %v1876 = vadd.f32 0.0, %v1875
        %v1877 = vpop.f32.mrb[0].mxu0
        %1878 = vmatprep.mubr.f32.mxu0 0.0
        %1879 = vmatmul.mubr.f32.gmra.mrb[0].mxu0 %v585
        %v1880 = vpop.f32.mrb[0].mxu0
        %v1881 = vadd.f32 0.0, %v1880
        %v1882 = vpop.f32.mrb[0].mxu0
        %1883 = vmatprep.mubr.f32.mxu0 0.0
        %1884 = vmatmul.mubr.f32.gmra.mrb[0].mxu0 %v588
        %v1885 = vpop.f32.mrb[0].mxu0
        %v1886 = vadd.f32 0.0, %v1885
        %v1887 = vpop.f32.mrb[0].mxu0
        %1888 = vmatprep.mubr.f32.mxu0 0.0
        %1889 = vmatmul.mubr.f32.gmra.mrb[0].mxu0 %v591
        %v1890 = vpop.f32.mrb[0].mxu0
        %v1891 = vadd.f32 0.0, %v1890
        %v1892 = vpop.f32.mrb[0].mxu0
        %1893 = vmatprep.mubr.f32.mxu0 0.0
        %1894 = vmatmul.mubr.f32.gmra.mrb[0].mxu0 %v594
        %v1895 = vpop.f32.mrb[0].mxu0
        %v1896 = vadd.f32 0.0, %v1895
        %v1897 = vpop.f32.mrb[0].mxu0
        %1898 = vmatprep.mubr.f32.mxu0 0.0
        %1899 = vmatmul.mubr.f32.gmra.mrb[0].mxu0 %v597
        %v1900 = vpop.f32.mrb[0].mxu0
        %v1901 = vadd.f32 0.0, %v1900
        %v1902 = vpop.f32.mrb[0].mxu0
        %1903 = vmatprep.mubr.f32.mxu0 0.0
        %1904 = vmatmul.mubr.f32.gmra.mrb[0].mxu0 %v600
        %v1905 = vpop.f32.mrb[0].mxu0
        %v1906 = vadd.f32 0.0, %v1905
        %v1907 = vpop.f32.mrb[0].mxu0
        %1908 = vmatprep.mubr.f32.mxu0 0.0
        %1909 = vmatmul.mubr.f32.gmra.mrb[0].mxu0 %v603
        %v1910 = vpop.f32.mrb[0].mxu0
        %v1911 = vadd.f32 0.0, %v1910
        %v1912 = vpop.f32.mrb[0].mxu0
        %1913 = vmatprep.mubr.f32.mxu0 0.0
        %1914 = vmatmul.mubr.f32.gmra.mrb[0].mxu0 %v606
        %v1915 = vpop.f32.mrb[0].mxu0
        %v1916 = vadd.f32 0.0, %v1915
        %v1917 = vpop.f32.mrb[0].mxu0
        %1918 = vmatprep.mubr.f32.mxu0 0.0
        %1919 = vmatmul.mubr.f32.gmra.mrb[0].mxu0 %v609
        %v1920 = vpop.f32.mrb[0].mxu0
        %v1921 = vadd.f32 0.0, %v1920
        %v1922 = vpop.f32.mrb[0].mxu0
        %1923 = vmatprep.mubr.f32.mxu0 0.0
        %1924 = vmatmul.mubr.f32.gmra.mrb[0].mxu0 %v612
        %v1925 = vpop.f32.mrb[0].mxu0
        %v1926 = vadd.f32 0.0, %v1925
        %v1927 = vpop.f32.mrb[0].mxu0
        %1928 = vmatprep.mubr.f32.mxu0 0.0
        %1929 = vmatmul.mubr.f32.gmra.mrb[0].mxu0 %v615
        %v1930 = vpop.f32.mrb[0].mxu0
        %v1931 = vadd.f32 0.0, %v1930
        %v1932 = vpop.f32.mrb[0].mxu0
        %1933 = vmatprep.mubr.f32.mxu0 0.0
        %1934 = vmatmul.mubr.f32.gmra.mrb[0].mxu0 %v618
        %v1935 = vpop.f32.mrb[0].mxu0
        %v1936 = vadd.f32 0.0, %v1935
        %v1937 = vpop.f32.mrb[0].mxu0
        %1938 = vmatprep.mubr.f32.mxu0 0.0
        %1939 = vmatmul.mubr.f32.gmra.mrb[0].mxu0 %v621
        %v1940 = vpop.f32.mrb[0].mxu0
        %v1941 = vadd.f32 0.0, %v1940
        %v1942 = vpop.f32.mrb[0].mxu0
        %1943 = vmatprep.mubr.f32.mxu0 0.0
        %1944 = vmatmul.mubr.f32.gmra.mrb[0].mxu0 %v624
        %v1945 = vpop.f32.mrb[0].mxu0
        %v1946 = vadd.f32 0.0, %v1945
        %v1947 = vpop.f32.mrb[0].mxu0
        %1948 = vmatprep.mubr.f32.mxu0 0.0
        %1949 = vmatmul.mubr.f32.gmra.mrb[0].mxu0 %v627
        %v1950 = vpop.f32.mrb[0].mxu0
        %v1951 = vadd.f32 0.0, %v1950
        %v1952 = vpop.f32.mrb[0].mxu0
        %1953 = vmatprep.mubr.f32.mxu0 0.0
        %1954 = vmatmul.mubr.f32.gmra.mrb[0].mxu0 %v630
        %v1955 = vpop.f32.mrb[0].mxu0
        %v1956 = vadd.f32 0.0, %v1955
        %v1957 = vpop.f32.mrb[0].mxu0
        %1958 = vmatprep.mubr.f32.mxu0 0.0
        %1959 = vmatmul.mubr.f32.gmra.mrb[0].mxu0 %v633
        %v1960 = vpop.f32.mrb[0].mxu0
        %v1961 = vadd.f32 0.0, %v1960
        %v1962 = vpop.f32.mrb[0].mxu0
        %1963 = vdwg.mxu0
        %1964 = vst [vmem:[#allocation3] sm:$0xff] %v1530
        %1965 = vst [vmem:[#allocation3 + $0x8] sm:$0xff] %v1532
        %1966 = vst [vmem:[#allocation3 + $0x10] sm:$0xff] %v1703
        %1967 = vst [vmem:[#allocation3 + $0x18] sm:$0xff] %v1705
        %1968 = vst.msk [vmem:[#allocation3 + $0x20] sm:$0xff] %vm344, %v1876
        %1969 = vst [vmem:[#allocation3 + $0x28] sm:$0xff] %v1536
        %1970 = vst [vmem:[#allocation3 + $0x30] sm:$0xff] %v1538
        %1971 = vst [vmem:[#allocation3 + $0x38] sm:$0xff] %v1709
        %1972 = vst [vmem:[#allocation3 + $0x40] sm:$0xff] %v1711
        %1973 = vst.msk [vmem:[#allocation3 + $0x48] sm:$0xff] %vm344, %v1881
        %1974 = vst [vmem:[#allocation3 + $0x50] sm:$0xff] %v1542
        %1975 = vst [vmem:[#allocation3 + $0x58] sm:$0xff] %v1544
        %1976 = vst [vmem:[#allocation3 + $0x60] sm:$0xff] %v1715
        %1977 = vst [vmem:[#allocation3 + $0x68] sm:$0xff] %v1717
        %1978 = vst.msk [vmem:[#allocation3 + $0x70] sm:$0xff] %vm344, %v1886
        %1979 = vst [vmem:[#allocation3 + $0x78] sm:$0xff] %v1548
        %1980 = vst [vmem:[#allocation3 + $0x80] sm:$0xff] %v1550
        %1981 = vst [vmem:[#allocation3 + $0x88] sm:$0xff] %v1721
        %1982 = vst [vmem:[#allocation3 + $0x90] sm:$0xff] %v1723
        %1983 = vst.msk [vmem:[#allocation3 + $0x98] sm:$0xff] %vm344, %v1891
        %1984 = vst [vmem:[#allocation3 + $0xa0] sm:$0xff] %v1554
        %1985 = vst [vmem:[#allocation3 + $0xa8] sm:$0xff] %v1556
        %1986 = vst [vmem:[#allocation3 + $0xb0] sm:$0xff] %v1727
        %1987 = vst [vmem:[#allocation3 + $0xb8] sm:$0xff] %v1729
        %1988 = vst.msk [vmem:[#allocation3 + $0xc0] sm:$0xff] %vm344, %v1896
        %1989 = vst [vmem:[#allocation3 + $0xc8] sm:$0xff] %v1560
        %1990 = vst [vmem:[#allocation3 + $0xd0] sm:$0xff] %v1562
        %1991 = vst [vmem:[#allocation3 + $0xd8] sm:$0xff] %v1733
        %1992 = vst [vmem:[#allocation3 + $0xe0] sm:$0xff] %v1735
        %1993 = vst.msk [vmem:[#allocation3 + $0xe8] sm:$0xff] %vm344, %v1901
        %1994 = vst [vmem:[#allocation3 + $0xf0] sm:$0xff] %v1566
        %1995 = vst [vmem:[#allocation3 + $0xf8] sm:$0xff] %v1568
        %1996 = vst [vmem:[#allocation3 + $0x100] sm:$0xff] %v1739
        %1997 = vst [vmem:[#allocation3 + $0x108] sm:$0xff] %v1741
        %1998 = vst.msk [vmem:[#allocation3 + $0x110] sm:$0xff] %vm344, %v1906
        %1999 = vst [vmem:[#allocation3 + $0x118] sm:$0xff] %v1572
        %2000 = vst [vmem:[#allocation3 + $0x120] sm:$0xff] %v1574
        %2001 = vst [vmem:[#allocation3 + $0x128] sm:$0xff] %v1745
        %2002 = vst [vmem:[#allocation3 + $0x130] sm:$0xff] %v1747
        %2003 = vst.msk [vmem:[#allocation3 + $0x138] sm:$0xff] %vm344, %v1911
        %2004 = vst [vmem:[#allocation3 + $0x140] sm:$0xff] %v1578
        %2005 = vst [vmem:[#allocation3 + $0x148] sm:$0xff] %v1580
        %2006 = vst [vmem:[#allocation3 + $0x150] sm:$0xff] %v1751
        %2007 = vst [vmem:[#allocation3 + $0x158] sm:$0xff] %v1753
        %2008 = vst.msk [vmem:[#allocation3 + $0x160] sm:$0xff] %vm344, %v1916
        %2009 = vst [vmem:[#allocation3 + $0x168] sm:$0xff] %v1584
        %2010 = vst [vmem:[#allocation3 + $0x170] sm:$0xff] %v1586
        %2011 = vst [vmem:[#allocation3 + $0x178] sm:$0xff] %v1757
        %2012 = vst [vmem:[#allocation3 + $0x180] sm:$0xff] %v1759
        %2013 = vst.msk [vmem:[#allocation3 + $0x188] sm:$0xff] %vm344, %v1921
        %2014 = vst [vmem:[#allocation3 + $0x190] sm:$0xff] %v1590
        %2015 = vst [vmem:[#allocation3 + $0x198] sm:$0xff] %v1592
        %2016 = vst [vmem:[#allocation3 + $0x1a0] sm:$0xff] %v1763
        %2017 = vst [vmem:[#allocation3 + $0x1a8] sm:$0xff] %v1765
        %2018 = vst.msk [vmem:[#allocation3 + $0x1b0] sm:$0xff] %vm344, %v1926
        %2019 = vst [vmem:[#allocation3 + $0x1b8] sm:$0xff] %v1596
        %2020 = vst [vmem:[#allocation3 + $0x1c0] sm:$0xff] %v1598
        %2021 = vst [vmem:[#allocation3 + $0x1c8] sm:$0xff] %v1769
        %2022 = vst [vmem:[#allocation3 + $0x1d0] sm:$0xff] %v1771
        %2023 = vst.msk [vmem:[#allocation3 + $0x1d8] sm:$0xff] %vm344, %v1931
        %2024 = vst [vmem:[#allocation3 + $0x1e0] sm:$0xff] %v1602
        %2025 = vst [vmem:[#allocation3 + $0x1e8] sm:$0xff] %v1604
        %2026 = vst [vmem:[#allocation3 + $0x1f0] sm:$0xff] %v1775
        %2027 = vst [vmem:[#allocation3 + $0x1f8] sm:$0xff] %v1777
        %2028 = vst.msk [vmem:[#allocation3 + $0x200] sm:$0xff] %vm344, %v1936
        %2029 = vst [vmem:[#allocation3 + $0x208] sm:$0xff] %v1608
        %2030 = vst [vmem:[#allocation3 + $0x210] sm:$0xff] %v1610
        %2031 = vst [vmem:[#allocation3 + $0x218] sm:$0xff] %v1781
        %2032 = vst [vmem:[#allocation3 + $0x220] sm:$0xff] %v1783
        %2033 = vst.msk [vmem:[#allocation3 + $0x228] sm:$0xff] %vm344, %v1941
        %2034 = vst [vmem:[#allocation3 + $0x230] sm:$0xff] %v1614
        %2035 = vst [vmem:[#allocation3 + $0x238] sm:$0xff] %v1616
        %2036 = vst [vmem:[#allocation3 + $0x240] sm:$0xff] %v1787
        %2037 = vst [vmem:[#allocation3 + $0x248] sm:$0xff] %v1789
        %2038 = vst.msk [vmem:[#allocation3 + $0x250] sm:$0xff] %vm344, %v1946
        %2039 = vst [vmem:[#allocation3 + $0x258] sm:$0xff] %v1620
        %2040 = vst [vmem:[#allocation3 + $0x260] sm:$0xff] %v1622
        %2041 = vst [vmem:[#allocation3 + $0x268] sm:$0xff] %v1793
        %2042 = vst [vmem:[#allocation3 + $0x270] sm:$0xff] %v1795
        %2043 = vst.msk [vmem:[#allocation3 + $0x278] sm:$0xff] %vm344, %v1951
        %2044 = vst [vmem:[#allocation3 + $0x280] sm:$0xff] %v1626
        %2045 = vst [vmem:[#allocation3 + $0x288] sm:$0xff] %v1628
        %2046 = vst [vmem:[#allocation3 + $0x290] sm:$0xff] %v1799
        %2047 = vst [vmem:[#allocation3 + $0x298] sm:$0xff] %v1801
        %2048 = vst.msk [vmem:[#allocation3 + $0x2a0] sm:$0xff] %vm344, %v1956
        %2049 = vst [vmem:[#allocation3 + $0x2a8] sm:$0xff] %v1632
        %2050 = vst [vmem:[#allocation3 + $0x2b0] sm:$0xff] %v1634
        %2051 = vst [vmem:[#allocation3 + $0x2b8] sm:$0xff] %v1805
        %2052 = vst [vmem:[#allocation3 + $0x2c0] sm:$0xff] %v1807
        %2053 = vst.msk [vmem:[#allocation3 + $0x2c8] sm:$0xff] %vm344, %v1961
      $region36: #{sauvola_multi_window.1} parent=31 // pred_fallthru
        _
      %v2054 = vld [vmem:[%s215] sm:$0xff]
      %v2055 = vld [vmem:[%s215 + $0x8] sm:$0xff]
      // Predicated region
      $region37: #{sauvola_multi_window.1} parent=31 // pred_check
        %p2056 = pneg %p225
      $region38: #{sauvola_multi_window.1} parent=31 // pred_check_branch
        %2058 = sbr.rel (%p2056) target = $region40
      $region39: #{sauvola_multi_window.1} parent=31 // pred_region
        %v2059 = vld [vmem:[#allocation2 + $0x148] sm:$0xf8]
        %v2060 = vld [vmem:[#allocation2 + $0x150] sm:$0xf8]
        %v2061 = vld [vmem:[#allocation2 + $0x170] sm:$0xff]
        %v2062 = vld [vmem:[#allocation2 + $0x178] sm:$0xff]
        %v2063 = vld [vmem:[#allocation2 + $0x198] sm:$0x7]
        %v2064 = vld [vmem:[#allocation2 + $0x1a0] sm:$0x7]
        %v2065 = vld [vmem:[#allocation2 + $0x120] sm:$0xf0]
        %v2066 = vld [vmem:[#allocation2 + $0x128] sm:$0xf0]
        %v2067 = vld [vmem:[#allocation2 + $0x148] sm:$0xff]
        %v2068 = vld [vmem:[#allocation2 + $0x150] sm:$0xff]
        %v2069 = vld [vmem:[#allocation2 + $0x170] sm:$0xf]
        %v2070 = vld [vmem:[#allocation2 + $0x178] sm:$0xf]
        %vm2077 = vcmask 1046528
        %v2078 = vrot.slane %v2065, 1
        %v2079 = vrot.slane %v2067, 1
        %v2080 = vsel %vm2077, %v2078, %v2079
        %v2081 = vrot.slane %v2066, 1
        %v2082 = vrot.slane %v2068, 1
        %v2083 = vsel %vm2077, %v2081, %v2082
        %v2084 = vrot.slane %v2069, 1
        %v2085 = vsel %vm2077, %v2079, %v2084
        %v2086 = vrot.slane %v2070, 1
        %v2087 = vsel %vm2077, %v2082, %v2086
        %v2094 = vsub.f32 %v2059, %v2080
        %v2095 = vsub.f32 %v2060, %v2083
        %v2096 = vsub.f32 %v2061, %v2085
        %v2097 = vsub.f32 %v2062, %v2087
        %v2098 = vsub.f32 %v2063, %v2084
        %v2099 = vsub.f32 %v2064, %v2086
        %v2100 = vld [vmem:[#allocation3 + $0x148] sm:$0xf8]
        %v2101 = vld [vmem:[#allocation3 + $0x150] sm:$0xf8]
        %v2102 = vld [vmem:[#allocation3 + $0x170] sm:$0xff]
        %v2103 = vld [vmem:[#allocation3 + $0x178] sm:$0xff]
        %v2104 = vld [vmem:[#allocation3 + $0x198] sm:$0x7]
        %v2105 = vld [vmem:[#allocation3 + $0x1a0] sm:$0x7]
        %v2106 = vld [vmem:[#allocation3 + $0x120] sm:$0xf0]
        %v2107 = vld [vmem:[#allocation3 + $0x128] sm:$0xf0]
        %v2108 = vld [vmem:[#allocation3 + $0x148] sm:$0xff]
        %v2109 = vld [vmem:[#allocation3 + $0x150] sm:$0xff]
        %v2110 = vld [vmem:[#allocation3 + $0x170] sm:$0xf]
        %v2111 = vld [vmem:[#allocation3 + $0x178] sm:$0xf]
        %v2118 = vrot.slane %v2106, 1
        %v2119 = vrot.slane %v2108, 1
        %v2120 = vsel %vm2077, %v2118, %v2119
        %v2121 = vrot.slane %v2107, 1
        %v2122 = vrot.slane %v2109, 1
        %v2123 = vsel %vm2077, %v2121, %v2122
        %v2124 = vrot.slane %v2110, 1
        %v2125 = vsel %vm2077, %v2119, %v2124
        %v2126 = vrot.slane %v2111, 1
        %v2127 = vsel %vm2077, %v2122, %v2126
        %v2134 = vsub.f32 %v2100, %v2120
        %v2135 = vsub.f32 %v2101, %v2123
        %v2136 = vsub.f32 %v2102, %v2125
        %v2137 = vsub.f32 %v2103, %v2127
        %v2138 = vsub.f32 %v2104, %v2124
        %v2139 = vsub.f32 %v2105, %v2126
        %2146 = vrot.lane.b32.xlu0 %v2094, 28
        %v2147 = vpop.permute.xlu0 %2146
        %2148 = vrot.lane.b32.xlu0 %v2095, 28
        %v2149 = vpop.permute.xlu0 %2148
        %2150 = vrot.lane.b32.xlu0 %v2096, 28
        %v2151 = vpop.permute.xlu0 %2150
        %2152 = vrot.lane.b32.xlu0 %v2097, 28
        %v2153 = vpop.permute.xlu0 %2152
        %2154 = vrot.lane.b32.xlu0 %v2098, 28
        %v2155 = vpop.permute.xlu0 %2154
        %2156 = vrot.lane.b32.xlu0 %v2099, 28
        %v2157 = vpop.permute.xlu0 %2156
        %vm2158 = vcmask 228352
        %v2159 = vsel %vm2158, %v2147, %v2149
        %v2160 = vsel %vm2158, %v2151, %v2153
        %v2161 = vsel %vm2158, %v2155, %v2157
        %v2165 = vsub.f32 %v2095, %v2159
        %v2166 = vsub.f32 %v2097, %v2160
        %v2167 = vsub.f32 %v2099, %v2161
        %2174 = vrot.lane.b32.xlu0 %v2134, 28
        %v2175 = vpop.permute.xlu0 %2174
        %2176 = vrot.lane.b32.xlu0 %v2135, 28
        %v2177 = vpop.permute.xlu0 %2176
        %2178 = vrot.lane.b32.xlu0 %v2136, 28
        %v2179 = vpop.permute.xlu0 %2178
        %2180 = vrot.lane.b32.xlu0 %v2137, 28
        %v2181 = vpop.permute.xlu0 %2180
        %2182 = vrot.lane.b32.xlu0 %v2138, 28
        %v2183 = vpop.permute.xlu0 %2182
        %2184 = vrot.lane.b32.xlu0 %v2139, 28
        %v2185 = vpop.permute.xlu0 %2184
        %v2186 = vsel %vm2158, %v2175, %v2177
        %v2187 = vsel %vm2158, %v2179, %v2181
        %v2188 = vsel %vm2158, %v2183, %v2185
        %v2192 = vsub.f32 %v2135, %v2186
        %v2193 = vsub.f32 %v2137, %v2187
        %v2194 = vsub.f32 %v2139, %v2188
        %vm2197 = vcmask 1042432
        %v2198 = vrot.slane %v2054, 5
        %v2199 = vrot.slane %v2055, 5
        %v2200 = vsel %vm2197, %v2198, %v2199
        %2201 = vrot.lane.b32.xlu0 %v2198, 12
        %v2202 = vpop.permute.xlu0 %2201
        %2203 = vrot.lane.b32.xlu0 %v2200, 12
        %v2204 = vpop.permute.xlu0 %2203
        %2205 = vrot.lane.b32.xlu0 %v2199, 12
        %v2206 = vpop.permute.xlu0 %2205
        %v2210 = vmul.f32 %v2165, %v2202
        %v2211 = vmul.f32 %v2166, %v2204
        %v2212 = vmul.f32 %v2167, %v2206
        %v2213 = vmul.f32 %v2192, %v2202
        %v2214 = vmul.f32 %v2193, %v2204
        %v2215 = vmul.f32 %v2194, %v2206
        %v2216 = vmul.f32 %v2210, %v2210
        %v2217 = vmul.f32 %v2211, %v2211
        %v2218 = vmul.f32 %v2212, %v2212
        %v2219 = vsub.f32 %v2213, %v2216
        %v2220 = vsub.f32 %v2214, %v2217
        %v2221 = vsub.f32 %v2215, %v2218
        %v2222 = vmax.f32 %v2219, 1e-06
        %v2223 = vmax.f32 %v2220, 1e-06
        %v2224 = vmax.f32 %v2221, 1e-06
        %v2225 = vrsqrt.pop %v2222
        %v2226 = vmul.f32 %v2222, %v2225
        %vm2227 = vcmp.eq.f32.partialorder %v2222, inf
        %v2228 = vsel %vm2227, %v2222, %v2226
        %vm2229 = vcmp.eq.f32.partialorder %v2222, 0.0
        %v2230 = vand.u32 %v2222, 2147483648
        %v2231 = vsel %vm2229, %v2230, %v2228
        %v2232 = vrsqrt.pop %v2223
        %v2233 = vmul.f32 %v2223, %v2232
        %vm2234 = vcmp.eq.f32.partialorder %v2223, inf
        %v2235 = vsel %vm2234, %v2223, %v2233
        %vm2236 = vcmp.eq.f32.partialorder %v2223, 0.0
        %v2237 = vand.u32 %v2223, 2147483648
        %v2238 = vsel %vm2236, %v2237, %v2235
        %v2239 = vrsqrt.pop %v2224
        %v2240 = vmul.f32 %v2224, %v2239
        %vm2241 = vcmp.eq.f32.partialorder %v2224, inf
        %v2242 = vsel %vm2241, %v2224, %v2240
        %vm2243 = vcmp.eq.f32.partialorder %v2224, 0.0
        %v2244 = vand.u32 %v2224, 2147483648
        %v2245 = vsel %vm2243, %v2244, %v2242
        %s2246 = sld [smem:[#allocation5]]
        %s2247 = sld [smem:[#allocation6]]
        %v2248 = vstv %s2247
        %v2249 = vmul.f32 %v2231, %v2248
        %v2250 = vmul.f32 %v2238, %v2248
        %v2251 = vmul.f32 %v2245, %v2248
        %v2252 = vstv %s2246
        %v2253 = vadd.f32 %v2252, %v2249
        %v2254 = vadd.f32 %v2252, %v2250
        %v2255 = vadd.f32 %v2252, %v2251
        %v2256 = vmul.f32 %v2210, %v2253
        %v2257 = vmul.f32 %v2211, %v2254
        %v2258 = vmul.f32 %v2212, %v2255
        %2262 = vrot.lane.b32.xlu0 %v2256, 116
        %v2263 = vpop.permute.xlu0 %2262
        %2264 = vrot.lane.b32.xlu0 %v2257, 116
        %v2265 = vpop.permute.xlu0 %2264
        %2266 = vrot.lane.b32.xlu0 %v2258, 116
        %v2267 = vpop.permute.xlu0 %2266
        %vm2271 = vcmask 523267
        %2272 = vst.msk [vmem:[%s224 - $0x3] sm:$0xf8] %vm2271, %v2263
        %vm2273 = vcmask 523264
        %2274 = vst.msk [vmem:[%s224 + $0x5] sm:$0xff] %vm2273, %v2265
        %vm2275 = vcmask 518144
        %2276 = vst.msk [vmem:[%s224 + $0xd] sm:$0x7] %vm2275, %v2267
      $region40: #{sauvola_multi_window.1} parent=31 // pred_fallthru
        _
      %p2277 = scmp.eq.s32.totalorder %s31, 1
      // Predicated region
      $region41: #{sauvola_multi_window.1} parent=31 // pred_check
        %p2278 = pneg %p2277
      $region42: #{sauvola_multi_window.1} parent=31 // pred_check_branch
        %2280 = sbr.rel (%p2278) target = $region44
      $region43: #{sauvola_multi_window.1} parent=31 // pred_region
        %v2281 = vld [vmem:[#allocation2 + $0x148] sm:$0x80]
        %v2282 = vld [vmem:[#allocation2 + $0x150] sm:$0x80]
        %v2283 = vld [vmem:[#allocation2 + $0x170] sm:$0xff]
        %v2284 = vld [vmem:[#allocation2 + $0x178] sm:$0xff]
        %v2285 = vld [vmem:[#allocation2 + $0x198] sm:$0x7f]
        %v2286 = vld [vmem:[#allocation2 + $0x1a0] sm:$0x7f]
        %v2287 = vld [vmem:[#allocation2 + $0x120] sm:$0xff]
        %v2288 = vld [vmem:[#allocation2 + $0x128] sm:$0xff]
        %v2289 = vld [vmem:[#allocation2 + $0x148] sm:$0xff]
        %v2290 = vld [vmem:[#allocation2 + $0x150] sm:$0xff]
        %vm2295 = vcmask 1046528
        %v2296 = vrot.slane %v2287, 1
        %v2297 = vrot.slane %v2288, 1
        %v2298 = vrot.slane %v2289, 1
        %v2299 = vsel %vm2295, %v2296, %v2298
        %v2300 = vrot.slane %v2290, 1
        %v2301 = vsel %vm2295, %v2297, %v2300
        %v2308 = vsub.f32 %v2281, %v2296
        %v2309 = vsub.f32 %v2282, %v2297
        %v2310 = vsub.f32 %v2283, %v2299
        %v2311 = vsub.f32 %v2284, %v2301
        %v2312 = vsub.f32 %v2285, %v2298
        %v2313 = vsub.f32 %v2286, %v2300
        %v2314 = vld [vmem:[#allocation3 + $0x148] sm:$0x80]
        %v2315 = vld [vmem:[#allocation3 + $0x150] sm:$0x80]
        %v2316 = vld [vmem:[#allocation3 + $0x170] sm:$0xff]
        %v2317 = vld [vmem:[#allocation3 + $0x178] sm:$0xff]
        %v2318 = vld [vmem:[#allocation3 + $0x198] sm:$0x7f]
        %v2319 = vld [vmem:[#allocation3 + $0x1a0] sm:$0x7f]
        %v2320 = vld [vmem:[#allocation3 + $0x120] sm:$0xff]
        %v2321 = vld [vmem:[#allocation3 + $0x128] sm:$0xff]
        %v2322 = vld [vmem:[#allocation3 + $0x148] sm:$0xff]
        %v2323 = vld [vmem:[#allocation3 + $0x150] sm:$0xff]
        %v2328 = vrot.slane %v2320, 1
        %v2329 = vrot.slane %v2321, 1
        %v2330 = vrot.slane %v2322, 1
        %v2331 = vsel %vm2295, %v2328, %v2330
        %v2332 = vrot.slane %v2323, 1
        %v2333 = vsel %vm2295, %v2329, %v2332
        %v2340 = vsub.f32 %v2314, %v2328
        %v2341 = vsub.f32 %v2315, %v2329
        %v2342 = vsub.f32 %v2316, %v2331
        %v2343 = vsub.f32 %v2317, %v2333
        %v2344 = vsub.f32 %v2318, %v2330
        %v2345 = vsub.f32 %v2319, %v2332
        %2352 = vrot.lane.b32.xlu0 %v2308, 60
        %v2353 = vpop.permute.xlu0 %2352
        %2354 = vrot.lane.b32.xlu0 %v2309, 60
        %v2355 = vpop.permute.xlu0 %2354
        %2356 = vrot.lane.b32.xlu0 %v2310, 60
        %v2357 = vpop.permute.xlu0 %2356
        %2358 = vrot.lane.b32.xlu0 %v2311, 60
        %v2359 = vpop.permute.xlu0 %2358
        %2360 = vrot.lane.b32.xlu0 %v2312, 60
        %v2361 = vpop.permute.xlu0 %2360
        %2362 = vrot.lane.b32.xlu0 %v2313, 60
        %v2363 = vpop.permute.xlu0 %2362
        %vm2364 = vcmask 490496
        %v2365 = vsel %vm2364, %v2353, %v2355
        %v2366 = vsel %vm2364, %v2357, %v2359
        %v2367 = vsel %vm2364, %v2361, %v2363
        %v2371 = vsub.f32 %v2309, %v2365
        %v2372 = vsub.f32 %v2311, %v2366
        %v2373 = vsub.f32 %v2313, %v2367
        %2380 = vrot.lane.b32.xlu0 %v2340, 60
        %v2381 = vpop.permute.xlu0 %2380
        %2382 = vrot.lane.b32.xlu0 %v2341, 60
        %v2383 = vpop.permute.xlu0 %2382
        %2384 = vrot.lane.b32.xlu0 %v2342, 60
        %v2385 = vpop.permute.xlu0 %2384
        %2386 = vrot.lane.b32.xlu0 %v2343, 60
        %v2387 = vpop.permute.xlu0 %2386
        %2388 = vrot.lane.b32.xlu0 %v2344, 60
        %v2389 = vpop.permute.xlu0 %2388
        %2390 = vrot.lane.b32.xlu0 %v2345, 60
        %v2391 = vpop.permute.xlu0 %2390
        %v2392 = vsel %vm2364, %v2381, %v2383
        %v2393 = vsel %vm2364, %v2385, %v2387
        %v2394 = vsel %vm2364, %v2389, %v2391
        %v2398 = vsub.f32 %v2341, %v2392
        %v2399 = vsub.f32 %v2343, %v2393
        %v2400 = vsub.f32 %v2345, %v2394
        %v2403 = vrot.slane %v2054, 1
        %v2404 = vrot.slane %v2055, 1
        %v2405 = vsel %vm2295, %v2403, %v2404
        %2406 = vrot.lane.b32.xlu0 %v2403, 28
        %v2407 = vpop.permute.xlu0 %2406
        %2408 = vrot.lane.b32.xlu0 %v2405, 28
        %v2409 = vpop.permute.xlu0 %2408
        %2410 = vrot.lane.b32.xlu0 %v2404, 28
        %v2411 = vpop.permute.xlu0 %2410
        %v2415 = vmul.f32 %v2371, %v2407
        %v2416 = vmul.f32 %v2372, %v2409
        %v2417 = vmul.f32 %v2373, %v2411
        %v2418 = vmul.f32 %v2398, %v2407
        %v2419 = vmul.f32 %v2399, %v2409
        %v2420 = vmul.f32 %v2400, %v2411
        %v2421 = vmul.f32 %v2415, %v2415
        %v2422 = vmul.f32 %v2416, %v2416
        %v2423 = vmul.f32 %v2417, %v2417
        %v2424 = vsub.f32 %v2418, %v2421
        %v2425 = vsub.f32 %v2419, %v2422
        %v2426 = vsub.f32 %v2420, %v2423
        %v2427 = vmax.f32 %v2424, 1e-06
        %v2428 = vmax.f32 %v2425, 1e-06
        %v2429 = vmax.f32 %v2426, 1e-06
        %v2430 = vrsqrt.pop %v2427
        %v2431 = vmul.f32 %v2427, %v2430
        %vm2432 = vcmp.eq.f32.partialorder %v2427, inf
        %v2433 = vsel %vm2432, %v2427, %v2431
        %vm2434 = vcmp.eq.f32.partialorder %v2427, 0.0
        %v2435 = vand.u32 %v2427, 2147483648
        %v2436 = vsel %vm2434, %v2435, %v2433
        %v2437 = vrsqrt.pop %v2428
        %v2438 = vmul.f32 %v2428, %v2437
        %vm2439 = vcmp.eq.f32.partialorder %v2428, inf
        %v2440 = vsel %vm2439, %v2428, %v2438
        %vm2441 = vcmp.eq.f32.partialorder %v2428, 0.0
        %v2442 = vand.u32 %v2428, 2147483648
        %v2443 = vsel %vm2441, %v2442, %v2440
        %v2444 = vrsqrt.pop %v2429
        %v2445 = vmul.f32 %v2429, %v2444
        %vm2446 = vcmp.eq.f32.partialorder %v2429, inf
        %v2447 = vsel %vm2446, %v2429, %v2445
        %vm2448 = vcmp.eq.f32.partialorder %v2429, 0.0
        %v2449 = vand.u32 %v2429, 2147483648
        %v2450 = vsel %vm2448, %v2449, %v2447
        %s2451 = sld [smem:[#allocation5 + $0x1]]
        %s2452 = sld [smem:[#allocation6 + $0x1]]
        %v2453 = vstv %s2452
        %v2454 = vmul.f32 %v2436, %v2453
        %v2455 = vmul.f32 %v2443, %v2453
        %v2456 = vmul.f32 %v2450, %v2453
        %v2457 = vstv %s2451
        %v2458 = vadd.f32 %v2457, %v2454
        %v2459 = vadd.f32 %v2457, %v2455
        %v2460 = vadd.f32 %v2457, %v2456
        %v2461 = vmul.f32 %v2415, %v2458
        %v2462 = vmul.f32 %v2416, %v2459
        %v2463 = vmul.f32 %v2417, %v2460
        %2467 = vrot.lane.b32.xlu0 %v2461, 100
        %v2468 = vpop.permute.xlu0 %2467
        %2469 = vrot.lane.b32.xlu0 %v2462, 100
        %v2470 = vpop.permute.xlu0 %2469
        %2471 = vrot.lane.b32.xlu0 %v2463, 100
        %v2472 = vpop.permute.xlu0 %2471
        %vm2476 = vcmask 523271
        %2477 = vst.msk [vmem:[%s224 - $0x7] sm:$0x80] %vm2476, %v2468
        %vm2478 = vcmask 523264
        %2479 = vst.msk [vmem:[%s224 + $0x1] sm:$0xff] %vm2478, %v2470
        %vm2480 = vcmask 522240
        %2481 = vst.msk [vmem:[%s224 + $0x9] sm:$0x7f] %vm2480, %v2472
      $region44: #{sauvola_multi_window.1} parent=31 // pred_fallthru
        _
      %p2482 = scmp.eq.s32.totalorder %s31, 2
      // Predicated region
      $region45: #{sauvola_multi_window.1} parent=31 // pred_check
        %p2483 = pneg %p2482
      $region46: #{sauvola_multi_window.1} parent=31 // pred_check_branch
        %2485 = sbr.rel (%p2483) target = $region48
      $region47: #{sauvola_multi_window.1} parent=31 // pred_region
        %v2486 = vld [vmem:[#allocation2 + $0x170] sm:$0x80]
        %v2487 = vld [vmem:[#allocation2 + $0x178] sm:$0x80]
        %v2488 = vld [vmem:[#allocation2 + $0x198] sm:$0xff]
        %v2489 = vld [vmem:[#allocation2 + $0x1a0] sm:$0xff]
        %v2490 = vld [vmem:[#allocation2 + $0x1c0] sm:$0x7f]
        %v2491 = vld [vmem:[#allocation2 + $0x1c8] sm:$0x7f]
        %v2492 = vld [vmem:[#allocation2 + $0xf8] sm:$0xff]
        %v2493 = vld [vmem:[#allocation2 + $0x100] sm:$0xff]
        %v2494 = vld [vmem:[#allocation2 + $0x120] sm:$0xff]
        %v2495 = vld [vmem:[#allocation2 + $0x128] sm:$0xff]
        %vm2500 = vcmask 1046528
        %v2501 = vrot.slane %v2492, 1
        %v2502 = vrot.slane %v2493, 1
        %v2503 = vrot.slane %v2494, 1
        %v2504 = vsel %vm2500, %v2501, %v2503
        %v2505 = vrot.slane %v2495, 1
        %v2506 = vsel %vm2500, %v2502, %v2505
        %v2513 = vsub.f32 %v2486, %v2501
        %v2514 = vsub.f32 %v2487, %v2502
        %v2515 = vsub.f32 %v2488, %v2504
        %v2516 = vsub.f32 %v2489, %v2506
        %v2517 = vsub.f32 %v2490, %v2503
        %v2518 = vsub.f32 %v2491, %v2505
        %v2519 = vld [vmem:[#allocation3 + $0x170] sm:$0x80]
        %v2520 = vld [vmem:[#allocation3 + $0x178] sm:$0x80]
        %v2521 = vld [vmem:[#allocation3 + $0x198] sm:$0xff]
        %v2522 = vld [vmem:[#allocation3 + $0x1a0] sm:$0xff]
        %v2523 = vld [vmem:[#allocation3 + $0x1c0] sm:$0x7f]
        %v2524 = vld [vmem:[#allocation3 + $0x1c8] sm:$0x7f]
        %v2525 = vld [vmem:[#allocation3 + $0xf8] sm:$0xff]
        %v2526 = vld [vmem:[#allocation3 + $0x100] sm:$0xff]
        %v2527 = vld [vmem:[#allocation3 + $0x120] sm:$0xff]
        %v2528 = vld [vmem:[#allocation3 + $0x128] sm:$0xff]
        %v2533 = vrot.slane %v2525, 1
        %v2534 = vrot.slane %v2526, 1
        %v2535 = vrot.slane %v2527, 1
        %v2536 = vsel %vm2500, %v2533, %v2535
        %v2537 = vrot.slane %v2528, 1
        %v2538 = vsel %vm2500, %v2534, %v2537
        %v2545 = vsub.f32 %v2519, %v2533
        %v2546 = vsub.f32 %v2520, %v2534
        %v2547 = vsub.f32 %v2521, %v2536
        %v2548 = vsub.f32 %v2522, %v2538
        %v2549 = vsub.f32 %v2523, %v2535
        %v2550 = vsub.f32 %v2524, %v2537
        %2554 = vrot.lane.b32.xlu0 %v2513, 124
        %v2555 = vpop.permute.xlu0 %2554
        %2556 = vrot.lane.b32.xlu0 %v2515, 124
        %v2557 = vpop.permute.xlu0 %2556
        %2558 = vrot.lane.b32.xlu0 %v2517, 124
        %v2559 = vpop.permute.xlu0 %2558
        %v2563 = vsub.f32 %v2514, %v2555
        %v2564 = vsub.f32 %v2516, %v2557
        %v2565 = vsub.f32 %v2518, %v2559
        %2569 = vrot.lane.b32.xlu0 %v2545, 124
        %v2570 = vpop.permute.xlu0 %2569
        %2571 = vrot.lane.b32.xlu0 %v2547, 124
        %v2572 = vpop.permute.xlu0 %2571
        %2573 = vrot.lane.b32.xlu0 %v2549, 124
        %v2574 = vpop.permute.xlu0 %2573
        %v2578 = vsub.f32 %v2546, %v2570
        %v2579 = vsub.f32 %v2548, %v2572
        %v2580 = vsub.f32 %v2550, %v2574
        %v2583 = vrot.slane %v2054, 1
        %v2584 = vrot.slane %v2055, 1
        %v2585 = vsel %vm2500, %v2583, %v2584
        %2586 = vrot.lane.b32.xlu0 %v2583, 60
        %v2587 = vpop.permute.xlu0 %2586
        %2588 = vrot.lane.b32.xlu0 %v2585, 60
        %v2589 = vpop.permute.xlu0 %2588
        %2590 = vrot.lane.b32.xlu0 %v2584, 60
        %v2591 = vpop.permute.xlu0 %2590
        %v2595 = vmul.f32 %v2563, %v2587
        %v2596 = vmul.f32 %v2564, %v2589
        %v2597 = vmul.f32 %v2565, %v2591
        %v2598 = vmul.f32 %v2578, %v2587
        %v2599 = vmul.f32 %v2579, %v2589
        %v2600 = vmul.f32 %v2580, %v2591
        %v2601 = vmul.f32 %v2595, %v2595
        %v2602 = vmul.f32 %v2596, %v2596
        %v2603 = vmul.f32 %v2597, %v2597
        %v2604 = vsub.f32 %v2598, %v2601
        %v2605 = vsub.f32 %v2599, %v2602
        %v2606 = vsub.f32 %v2600, %v2603
        %v2607 = vmax.f32 %v2604, 1e-06
        %v2608 = vmax.f32 %v2605, 1e-06
        %v2609 = vmax.f32 %v2606, 1e-06
        %v2610 = vrsqrt.pop %v2607
        %v2611 = vmul.f32 %v2607, %v2610
        %vm2612 = vcmp.eq.f32.partialorder %v2607, inf
        %v2613 = vsel %vm2612, %v2607, %v2611
        %vm2614 = vcmp.eq.f32.partialorder %v2607, 0.0
        %v2615 = vand.u32 %v2607, 2147483648
        %v2616 = vsel %vm2614, %v2615, %v2613
        %v2617 = vrsqrt.pop %v2608
        %v2618 = vmul.f32 %v2608, %v2617
        %vm2619 = vcmp.eq.f32.partialorder %v2608, inf
        %v2620 = vsel %vm2619, %v2608, %v2618
        %vm2621 = vcmp.eq.f32.partialorder %v2608, 0.0
        %v2622 = vand.u32 %v2608, 2147483648
        %v2623 = vsel %vm2621, %v2622, %v2620
        %v2624 = vrsqrt.pop %v2609
        %v2625 = vmul.f32 %v2609, %v2624
        %vm2626 = vcmp.eq.f32.partialorder %v2609, inf
        %v2627 = vsel %vm2626, %v2609, %v2625
        %vm2628 = vcmp.eq.f32.partialorder %v2609, 0.0
        %v2629 = vand.u32 %v2609, 2147483648
        %v2630 = vsel %vm2628, %v2629, %v2627
        %s2631 = sld [smem:[#allocation5 + $0x2]]
        %s2632 = sld [smem:[#allocation6 + $0x2]]
        %v2633 = vstv %s2632
        %v2634 = vmul.f32 %v2616, %v2633
        %v2635 = vmul.f32 %v2623, %v2633
        %v2636 = vmul.f32 %v2630, %v2633
        %v2637 = vstv %s2631
        %v2638 = vadd.f32 %v2637, %v2634
        %v2639 = vadd.f32 %v2637, %v2635
        %v2640 = vadd.f32 %v2637, %v2636
        %v2641 = vmul.f32 %v2595, %v2638
        %v2642 = vmul.f32 %v2596, %v2639
        %v2643 = vmul.f32 %v2597, %v2640
        %2647 = vrot.lane.b32.xlu0 %v2641, 68
        %v2648 = vpop.permute.xlu0 %2647
        %2649 = vrot.lane.b32.xlu0 %v2642, 68
        %v2650 = vpop.permute.xlu0 %2649
        %2651 = vrot.lane.b32.xlu0 %v2643, 68
        %v2652 = vpop.permute.xlu0 %2651
        %vm2656 = vcmask 523271
        %2657 = vst.msk [vmem:[%s224 - $0x7] sm:$0x80] %vm2656, %v2648
        %vm2658 = vcmask 523264
        %2659 = vst.msk [vmem:[%s224 + $0x1] sm:$0xff] %vm2658, %v2650
        %vm2660 = vcmask 522240
        %2661 = vst.msk [vmem:[%s224 + $0x9] sm:$0x7f] %vm2660, %v2652
      $region48: #{sauvola_multi_window.1} parent=31 // pred_fallthru
        _
      %p2662 = scmp.eq.s32.totalorder %s31, 3
      // Predicated region
      $region49: #{sauvola_multi_window.1} parent=31 // pred_check
        %p2663 = pneg %p2662
      $region50: #{sauvola_multi_window.1} parent=31 // pred_check_branch
        %2665 = sbr.rel (%p2663) target = $region52
      $region51: #{sauvola_multi_window.1} parent=31 // pred_region
        %v2666 = vld [vmem:[#allocation2 + $0x1c0] sm:$0x80]
        %v2667 = vld [vmem:[#allocation2 + $0x1c8] sm:$0x80]
        %v2668 = vld [vmem:[#allocation2 + $0x1d0] sm:$0x80]
        %v2669 = vld [vmem:[#allocation2 + $0x1e8] sm:$0xff]
        %v2670 = vld [vmem:[#allocation2 + $0x1f0] sm:$0xff]
        %v2671 = vld [vmem:[#allocation2 + $0x1f8] sm:$0xff]
        %v2672 = vld [vmem:[#allocation2 + $0x210] sm:$0x7f]
        %v2673 = vld [vmem:[#allocation2 + $0x218] sm:$0x7f]
        %v2674 = vld [vmem:[#allocation2 + $0x220] sm:$0x7f]
        %v2675 = vld [vmem:[#allocation2 + $0xa8] sm:$0xff]
        %v2676 = vld [vmem:[#allocation2 + $0xb0] sm:$0xff]
        %v2677 = vld [vmem:[#allocation2 + $0xb8] sm:$0xff]
        %v2678 = vld [vmem:[#allocation2 + $0xd0] sm:$0xff]
        %v2679 = vld [vmem:[#allocation2 + $0xd8] sm:$0xff]
        %v2680 = vld [vmem:[#allocation2 + $0xe0] sm:$0xff]
        %vm2687 = vcmask 1046528
        %v2688 = vrot.slane %v2675, 1
        %v2689 = vrot.slane %v2676, 1
        %v2690 = vrot.slane %v2677, 1
        %v2691 = vrot.slane %v2678, 1
        %v2692 = vsel %vm2687, %v2688, %v2691
        %v2693 = vrot.slane %v2679, 1
        %v2694 = vsel %vm2687, %v2689, %v2693
        %v2695 = vrot.slane %v2680, 1
        %v2696 = vsel %vm2687, %v2690, %v2695
        %v2706 = vsub.f32 %v2666, %v2688
        %v2707 = vsub.f32 %v2667, %v2689
        %v2708 = vsub.f32 %v2668, %v2690
        %v2709 = vsub.f32 %v2669, %v2692
        %v2710 = vsub.f32 %v2670, %v2694
        %v2711 = vsub.f32 %v2671, %v2696
        %v2712 = vsub.f32 %v2672, %v2691
        %v2713 = vsub.f32 %v2673, %v2693
        %v2714 = vsub.f32 %v2674, %v2695
        %v2715 = vld [vmem:[#allocation3 + $0x1c0] sm:$0x80]
        %v2716 = vld [vmem:[#allocation3 + $0x1c8] sm:$0x80]
        %v2717 = vld [vmem:[#allocation3 + $0x1d0] sm:$0x80]
        %v2718 = vld [vmem:[#allocation3 + $0x1e8] sm:$0xff]
        %v2719 = vld [vmem:[#allocation3 + $0x1f0] sm:$0xff]
        %v2720 = vld [vmem:[#allocation3 + $0x1f8] sm:$0xff]
        %v2721 = vld [vmem:[#allocation3 + $0x210] sm:$0x7f]
        %v2722 = vld [vmem:[#allocation3 + $0x218] sm:$0x7f]
        %v2723 = vld [vmem:[#allocation3 + $0x220] sm:$0x7f]
        %v2724 = vld [vmem:[#allocation3 + $0xa8] sm:$0xff]
        %v2725 = vld [vmem:[#allocation3 + $0xb0] sm:$0xff]
        %v2726 = vld [vmem:[#allocation3 + $0xb8] sm:$0xff]
        %v2727 = vld [vmem:[#allocation3 + $0xd0] sm:$0xff]
        %v2728 = vld [vmem:[#allocation3 + $0xd8] sm:$0xff]
        %v2729 = vld [vmem:[#allocation3 + $0xe0] sm:$0xff]
        %v2736 = vrot.slane %v2724, 1
        %v2737 = vrot.slane %v2725, 1
        %v2738 = vrot.slane %v2726, 1
        %v2739 = vrot.slane %v2727, 1
        %v2740 = vsel %vm2687, %v2736, %v2739
        %v2741 = vrot.slane %v2728, 1
        %v2742 = vsel %vm2687, %v2737, %v2741
        %v2743 = vrot.slane %v2729, 1
        %v2744 = vsel %vm2687, %v2738, %v2743
        %v2754 = vsub.f32 %v2715, %v2736
        %v2755 = vsub.f32 %v2716, %v2737
        %v2756 = vsub.f32 %v2717, %v2738
        %v2757 = vsub.f32 %v2718, %v2740
        %v2758 = vsub.f32 %v2719, %v2742
        %v2759 = vsub.f32 %v2720, %v2744
        %v2760 = vsub.f32 %v2721, %v2739
        %v2761 = vsub.f32 %v2722, %v2741
        %v2762 = vsub.f32 %v2723, %v2743
        %2766 = vrot.lane.b32.xlu0 %v2706, 124
        %v2767 = vpop.permute.xlu0 %2766
        %2768 = vrot.lane.b32.xlu0 %v2709, 124
        %v2769 = vpop.permute.xlu0 %2768
        %2770 = vrot.lane.b32.xlu0 %v2712, 124
        %v2771 = vpop.permute.xlu0 %2770
        %v2775 = vsub.f32 %v2707, %v2767
        %v2776 = vsub.f32 %v2708, %v2767
        %v2777 = vsub.f32 %v2710, %v2769
        %v2778 = vsub.f32 %v2711, %v2769
        %v2779 = vsub.f32 %v2713, %v2771
        %v2780 = vsub.f32 %v2714, %v2771
        %2784 = vrot.lane.b32.xlu0 %v2754, 124
        %v2785 = vpop.permute.xlu0 %2784
        %2786 = vrot.lane.b32.xlu0 %v2757, 124
        %v2787 = vpop.permute.xlu0 %2786
        %2788 = vrot.lane.b32.xlu0 %v2760, 124
        %v2789 = vpop.permute.xlu0 %2788
        %v2793 = vsub.f32 %v2755, %v2785
        %v2794 = vsub.f32 %v2756, %v2785
        %v2795 = vsub.f32 %v2758, %v2787
        %v2796 = vsub.f32 %v2759, %v2787
        %v2797 = vsub.f32 %v2761, %v2789
        %v2798 = vsub.f32 %v2762, %v2789
        %v2801 = vrot.slane %v2054, 1
        %v2802 = vrot.slane %v2055, 1
        %v2803 = vsel %vm2687, %v2801, %v2802
        %2804 = vrot.lane.b32.xlu0 %v2801, 124
        %v2805 = vpop.permute.xlu0 %2804
        %2806 = vrot.lane.b32.xlu0 %v2803, 124
        %v2807 = vpop.permute.xlu0 %2806
        %2808 = vrot.lane.b32.xlu0 %v2802, 124
        %v2809 = vpop.permute.xlu0 %2808
        %v2813 = vmul.f32 %v2775, %v2805
        %v2814 = vmul.f32 %v2776, %v2805
        %v2815 = vmul.f32 %v2777, %v2807
        %v2816 = vmul.f32 %v2778, %v2807
        %v2817 = vmul.f32 %v2779, %v2809
        %v2818 = vmul.f32 %v2780, %v2809
        %v2819 = vmul.f32 %v2793, %v2805
        %v2820 = vmul.f32 %v2794, %v2805
        %v2821 = vmul.f32 %v2795, %v2807
        %v2822 = vmul.f32 %v2796, %v2807
        %v2823 = vmul.f32 %v2797, %v2809
        %v2824 = vmul.f32 %v2798, %v2809
        %v2825 = vmul.f32 %v2813, %v2813
        %v2826 = vmul.f32 %v2814, %v2814
        %v2827 = vmul.f32 %v2815, %v2815
        %v2828 = vmul.f32 %v2816, %v2816
        %v2829 = vmul.f32 %v2817, %v2817
        %v2830 = vmul.f32 %v2818, %v2818
        %v2831 = vsub.f32 %v2819, %v2825
        %v2832 = vsub.f32 %v2820, %v2826
        %v2833 = vsub.f32 %v2821, %v2827
        %v2834 = vsub.f32 %v2822, %v2828
        %v2835 = vsub.f32 %v2823, %v2829
        %v2836 = vsub.f32 %v2824, %v2830
        %v2837 = vmax.f32 %v2831, 1e-06
        %v2838 = vmax.f32 %v2832, 1e-06
        %v2839 = vmax.f32 %v2833, 1e-06
        %v2840 = vmax.f32 %v2834, 1e-06
        %v2841 = vmax.f32 %v2835, 1e-06
        %v2842 = vmax.f32 %v2836, 1e-06
        %v2843 = vrsqrt.pop %v2837
        %v2844 = vmul.f32 %v2837, %v2843
        %vm2845 = vcmp.eq.f32.partialorder %v2837, inf
        %v2846 = vsel %vm2845, %v2837, %v2844
        %vm2847 = vcmp.eq.f32.partialorder %v2837, 0.0
        %v2848 = vand.u32 %v2837, 2147483648
        %v2849 = vsel %vm2847, %v2848, %v2846
        %v2850 = vrsqrt.pop %v2838
        %v2851 = vmul.f32 %v2838, %v2850
        %vm2852 = vcmp.eq.f32.partialorder %v2838, inf
        %v2853 = vsel %vm2852, %v2838, %v2851
        %vm2854 = vcmp.eq.f32.partialorder %v2838, 0.0
        %v2855 = vand.u32 %v2838, 2147483648
        %v2856 = vsel %vm2854, %v2855, %v2853
        %v2857 = vrsqrt.pop %v2839
        %v2858 = vmul.f32 %v2839, %v2857
        %vm2859 = vcmp.eq.f32.partialorder %v2839, inf
        %v2860 = vsel %vm2859, %v2839, %v2858
        %vm2861 = vcmp.eq.f32.partialorder %v2839, 0.0
        %v2862 = vand.u32 %v2839, 2147483648
        %v2863 = vsel %vm2861, %v2862, %v2860
        %v2864 = vrsqrt.pop %v2840
        %v2865 = vmul.f32 %v2840, %v2864
        %vm2866 = vcmp.eq.f32.partialorder %v2840, inf
        %v2867 = vsel %vm2866, %v2840, %v2865
        %vm2868 = vcmp.eq.f32.partialorder %v2840, 0.0
        %v2869 = vand.u32 %v2840, 2147483648
        %v2870 = vsel %vm2868, %v2869, %v2867
        %v2871 = vrsqrt.pop %v2841
        %v2872 = vmul.f32 %v2841, %v2871
        %vm2873 = vcmp.eq.f32.partialorder %v2841, inf
        %v2874 = vsel %vm2873, %v2841, %v2872
        %vm2875 = vcmp.eq.f32.partialorder %v2841, 0.0
        %v2876 = vand.u32 %v2841, 2147483648
        %v2877 = vsel %vm2875, %v2876, %v2874
        %v2878 = vrsqrt.pop %v2842
        %v2879 = vmul.f32 %v2842, %v2878
        %vm2880 = vcmp.eq.f32.partialorder %v2842, inf
        %v2881 = vsel %vm2880, %v2842, %v2879
        %vm2882 = vcmp.eq.f32.partialorder %v2842, 0.0
        %v2883 = vand.u32 %v2842, 2147483648
        %v2884 = vsel %vm2882, %v2883, %v2881
        %s2885 = sld [smem:[#allocation5 + $0x3]]
        %s2886 = sld [smem:[#allocation6 + $0x3]]
        %v2887 = vstv %s2886
        %v2888 = vmul.f32 %v2849, %v2887
        %v2889 = vmul.f32 %v2856, %v2887
        %v2890 = vmul.f32 %v2863, %v2887
        %v2891 = vmul.f32 %v2870, %v2887
        %v2892 = vmul.f32 %v2877, %v2887
        %v2893 = vmul.f32 %v2884, %v2887
        %v2894 = vstv %s2885
        %v2895 = vadd.f32 %v2894, %v2888
        %v2896 = vadd.f32 %v2894, %v2889
        %v2897 = vadd.f32 %v2894, %v2890
        %v2898 = vadd.f32 %v2894, %v2891
        %v2899 = vadd.f32 %v2894, %v2892
        %v2900 = vadd.f32 %v2894, %v2893
        %v2901 = vmul.f32 %v2813, %v2895
        %v2902 = vmul.f32 %v2814, %v2896
        %v2903 = vmul.f32 %v2815, %v2897
        %v2904 = vmul.f32 %v2816, %v2898
        %v2905 = vmul.f32 %v2817, %v2899
        %v2906 = vmul.f32 %v2818, %v2900
        %2913 = vrot.lane.b32.xlu0 %v2901, 4
        %v2914 = vpop.permute.xlu0 %2913
        %2915 = vrot.lane.b32.xlu0 %v2902, 4
        %v2916 = vpop.permute.xlu0 %2915
        %2917 = vrot.lane.b32.xlu0 %v2903, 4
        %v2918 = vpop.permute.xlu0 %2917
        %2919 = vrot.lane.b32.xlu0 %v2904, 4
        %v2920 = vpop.permute.xlu0 %2919
        %2921 = vrot.lane.b32.xlu0 %v2905, 4
        %v2922 = vpop.permute.xlu0 %2921
        %2923 = vrot.lane.b32.xlu0 %v2906, 4
        %v2924 = vpop.permute.xlu0 %2923
        %vm2925 = vcmask 31744
        %v2926 = vsel %vm2925, %v2914, %v2916
        %v2927 = vsel %vm2925, %v2918, %v2920
        %v2928 = vsel %vm2925, %v2922, %v2924
        %vm2932 = vcmask 523271
        %2933 = vst.msk [vmem:[%s224 - $0x7] sm:$0x80] %vm2932, %v2926
        %vm2934 = vcmask 523264
        %2935 = vst.msk [vmem:[%s224 + $0x1] sm:$0xff] %vm2934, %v2927
        %vm2936 = vcmask 522240
        %2937 = vst.msk [vmem:[%s224 + $0x9] sm:$0x7f] %vm2936, %v2928
      $region52: #{sauvola_multi_window.1} parent=31 // pred_fallthru
        _
      %p2938 = scmp.eq.s32.totalorder %s31, 4
      // Predicated region
      $region53: #{sauvola_multi_window.1} parent=31 // pred_check
        %p2939 = pneg %p2938
      $region54: #{sauvola_multi_window.1} parent=31 // pred_check_branch
        %2941 = sbr.rel (%p2939) target = $region56
      $region55: #{sauvola_multi_window.1} parent=31 // pred_region
        %v2942 = vld [vmem:[#allocation2 + $0x258] sm:$0x80]
        %v2943 = vld [vmem:[#allocation2 + $0x270] sm:$0x80]
        %v2944 = vld [vmem:[#allocation2 + $0x278] sm:$0x80]
        %v2945 = vld [vmem:[#allocation2 + $0x280] sm:$0xff]
        %v2946 = vld [vmem:[#allocation2 + $0x298] sm:$0xff]
        %v2947 = vld [vmem:[#allocation2 + $0x2a0] sm:$0xff]
        %v2948 = vld [vmem:[#allocation2 + $0x2a8] sm:$0x7f]
        %v2949 = vld [vmem:[#allocation2 + $0x2c0] sm:$0x7f]
        %v2950 = vld [vmem:[#allocation2 + $0x2c8] sm:$0x7f]
        %v2951 = vld [vmem:[#allocation2] sm:$0xff]
        %v2952 = vld [vmem:[#allocation2 + $0x18] sm:$0xff]
        %v2953 = vld [vmem:[#allocation2 + $0x20] sm:$0xff]
        %v2954 = vld [vmem:[#allocation2 + $0x28] sm:$0xff]
        %v2955 = vld [vmem:[#allocation2 + $0x40] sm:$0xff]
        %v2956 = vld [vmem:[#allocation2 + $0x48] sm:$0xff]
        %vm2963 = vcmask 1046528
        %v2964 = vrot.slane %v2951, 1
        %v2965 = vrot.slane %v2952, 1
        %v2966 = vrot.slane %v2953, 1
        %v2967 = vrot.slane %v2954, 1
        %v2968 = vsel %vm2963, %v2964, %v2967
        %v2969 = vrot.slane %v2955, 1
        %v2970 = vsel %vm2963, %v2965, %v2969
        %v2971 = vrot.slane %v2956, 1
        %v2972 = vsel %vm2963, %v2966, %v2971
        %v2982 = vsub.f32 %v2942, %v2964
        %v2983 = vsub.f32 %v2943, %v2965
        %v2984 = vsub.f32 %v2944, %v2966
        %v2985 = vsub.f32 %v2945, %v2968
        %v2986 = vsub.f32 %v2946, %v2970
        %v2987 = vsub.f32 %v2947, %v2972
        %v2988 = vsub.f32 %v2948, %v2967
        %v2989 = vsub.f32 %v2949, %v2969
        %v2990 = vsub.f32 %v2950, %v2971
        %v2991 = vld [vmem:[#allocation3 + $0x258] sm:$0x80]
        %v2992 = vld [vmem:[#allocation3 + $0x270] sm:$0x80]
        %v2993 = vld [vmem:[#allocation3 + $0x278] sm:$0x80]
        %v2994 = vld [vmem:[#allocation3 + $0x280] sm:$0xff]
        %v2995 = vld [vmem:[#allocation3 + $0x298] sm:$0xff]
        %v2996 = vld [vmem:[#allocation3 + $0x2a0] sm:$0xff]
        %v2997 = vld [vmem:[#allocation3 + $0x2a8] sm:$0x7f]
        %v2998 = vld [vmem:[#allocation3 + $0x2c0] sm:$0x7f]
        %v2999 = vld [vmem:[#allocation3 + $0x2c8] sm:$0x7f]
        %v3000 = vld [vmem:[#allocation3] sm:$0xff]
        %v3001 = vld [vmem:[#allocation3 + $0x18] sm:$0xff]
        %v3002 = vld [vmem:[#allocation3 + $0x20] sm:$0xff]
        %v3003 = vld [vmem:[#allocation3 + $0x28] sm:$0xff]
        %v3004 = vld [vmem:[#allocation3 + $0x40] sm:$0xff]
        %v3005 = vld [vmem:[#allocation3 + $0x48] sm:$0xff]
        %v3012 = vrot.slane %v3000, 1
        %v3013 = vrot.slane %v3001, 1
        %v3014 = vrot.slane %v3002, 1
        %v3015 = vrot.slane %v3003, 1
        %v3016 = vsel %vm2963, %v3012, %v3015
        %v3017 = vrot.slane %v3004, 1
        %v3018 = vsel %vm2963, %v3013, %v3017
        %v3019 = vrot.slane %v3005, 1
        %v3020 = vsel %vm2963, %v3014, %v3019
        %v3030 = vsub.f32 %v2991, %v3012
        %v3031 = vsub.f32 %v2992, %v3013
        %v3032 = vsub.f32 %v2993, %v3014
        %v3033 = vsub.f32 %v2994, %v3016
        %v3034 = vsub.f32 %v2995, %v3018
        %v3035 = vsub.f32 %v2996, %v3020
        %v3036 = vsub.f32 %v2997, %v3015
        %v3037 = vsub.f32 %v2998, %v3017
        %v3038 = vsub.f32 %v2999, %v3019
        %3042 = vrot.lane.b32.xlu0 %v2982, 124
        %v3043 = vpop.permute.xlu0 %3042
        %3044 = vrot.lane.b32.xlu0 %v2985, 124
        %v3045 = vpop.permute.xlu0 %3044
        %3046 = vrot.lane.b32.xlu0 %v2988, 124
        %v3047 = vpop.permute.xlu0 %3046
        %v3051 = vsub.f32 %v2983, %v3043
        %v3052 = vsub.f32 %v2984, %v3043
        %v3053 = vsub.f32 %v2986, %v3045
        %v3054 = vsub.f32 %v2987, %v3045
        %v3055 = vsub.f32 %v2989, %v3047
        %v3056 = vsub.f32 %v2990, %v3047
        %3060 = vrot.lane.b32.xlu0 %v3030, 124
        %v3061 = vpop.permute.xlu0 %3060
        %3062 = vrot.lane.b32.xlu0 %v3033, 124
        %v3063 = vpop.permute.xlu0 %3062
        %3064 = vrot.lane.b32.xlu0 %v3036, 124
        %v3065 = vpop.permute.xlu0 %3064
        %v3069 = vsub.f32 %v3031, %v3061
        %v3070 = vsub.f32 %v3032, %v3061
        %v3071 = vsub.f32 %v3034, %v3063
        %v3072 = vsub.f32 %v3035, %v3063
        %v3073 = vsub.f32 %v3037, %v3065
        %v3074 = vsub.f32 %v3038, %v3065
        %v3077 = vrot.slane %v2054, 1
        %v3078 = vrot.slane %v2055, 1
        %v3079 = vsel %vm2963, %v3077, %v3078
        %3080 = vrot.lane.b32.xlu0 %v3077, 124
        %v3081 = vpop.permute.xlu0 %3080
        %3082 = vrot.lane.b32.xlu0 %v3079, 124
        %v3083 = vpop.permute.xlu0 %3082
        %3084 = vrot.lane.b32.xlu0 %v3078, 124
        %v3085 = vpop.permute.xlu0 %3084
        %v3089 = vmul.f32 %v3051, %v3081
        %v3090 = vmul.f32 %v3052, %v3081
        %v3091 = vmul.f32 %v3053, %v3083
        %v3092 = vmul.f32 %v3054, %v3083
        %v3093 = vmul.f32 %v3055, %v3085
        %v3094 = vmul.f32 %v3056, %v3085
        %v3095 = vmul.f32 %v3069, %v3081
        %v3096 = vmul.f32 %v3070, %v3081
        %v3097 = vmul.f32 %v3071, %v3083
        %v3098 = vmul.f32 %v3072, %v3083
        %v3099 = vmul.f32 %v3073, %v3085
        %v3100 = vmul.f32 %v3074, %v3085
        %v3101 = vmul.f32 %v3089, %v3089
        %v3102 = vmul.f32 %v3090, %v3090
        %v3103 = vmul.f32 %v3091, %v3091
        %v3104 = vmul.f32 %v3092, %v3092
        %v3105 = vmul.f32 %v3093, %v3093
        %v3106 = vmul.f32 %v3094, %v3094
        %v3107 = vsub.f32 %v3095, %v3101
        %v3108 = vsub.f32 %v3096, %v3102
        %v3109 = vsub.f32 %v3097, %v3103
        %v3110 = vsub.f32 %v3098, %v3104
        %v3111 = vsub.f32 %v3099, %v3105
        %v3112 = vsub.f32 %v3100, %v3106
        %v3113 = vmax.f32 %v3107, 1e-06
        %v3114 = vmax.f32 %v3108, 1e-06
        %v3115 = vmax.f32 %v3109, 1e-06
        %v3116 = vmax.f32 %v3110, 1e-06
        %v3117 = vmax.f32 %v3111, 1e-06
        %v3118 = vmax.f32 %v3112, 1e-06
        %v3119 = vrsqrt.pop %v3113
        %v3120 = vmul.f32 %v3113, %v3119
        %vm3121 = vcmp.eq.f32.partialorder %v3113, inf
        %v3122 = vsel %vm3121, %v3113, %v3120
        %vm3123 = vcmp.eq.f32.partialorder %v3113, 0.0
        %v3124 = vand.u32 %v3113, 2147483648
        %v3125 = vsel %vm3123, %v3124, %v3122
        %v3126 = vrsqrt.pop %v3114
        %v3127 = vmul.f32 %v3114, %v3126
        %vm3128 = vcmp.eq.f32.partialorder %v3114, inf
        %v3129 = vsel %vm3128, %v3114, %v3127
        %vm3130 = vcmp.eq.f32.partialorder %v3114, 0.0
        %v3131 = vand.u32 %v3114, 2147483648
        %v3132 = vsel %vm3130, %v3131, %v3129
        %v3133 = vrsqrt.pop %v3115
        %v3134 = vmul.f32 %v3115, %v3133
        %vm3135 = vcmp.eq.f32.partialorder %v3115, inf
        %v3136 = vsel %vm3135, %v3115, %v3134
        %vm3137 = vcmp.eq.f32.partialorder %v3115, 0.0
        %v3138 = vand.u32 %v3115, 2147483648
        %v3139 = vsel %vm3137, %v3138, %v3136
        %v3140 = vrsqrt.pop %v3116
        %v3141 = vmul.f32 %v3116, %v3140
        %vm3142 = vcmp.eq.f32.partialorder %v3116, inf
        %v3143 = vsel %vm3142, %v3116, %v3141
        %vm3144 = vcmp.eq.f32.partialorder %v3116, 0.0
        %v3145 = vand.u32 %v3116, 2147483648
        %v3146 = vsel %vm3144, %v3145, %v3143
        %v3147 = vrsqrt.pop %v3117
        %v3148 = vmul.f32 %v3117, %v3147
        %vm3149 = vcmp.eq.f32.partialorder %v3117, inf
        %v3150 = vsel %vm3149, %v3117, %v3148
        %vm3151 = vcmp.eq.f32.partialorder %v3117, 0.0
        %v3152 = vand.u32 %v3117, 2147483648
        %v3153 = vsel %vm3151, %v3152, %v3150
        %v3154 = vrsqrt.pop %v3118
        %v3155 = vmul.f32 %v3118, %v3154
        %vm3156 = vcmp.eq.f32.partialorder %v3118, inf
        %v3157 = vsel %vm3156, %v3118, %v3155
        %vm3158 = vcmp.eq.f32.partialorder %v3118, 0.0
        %v3159 = vand.u32 %v3118, 2147483648
        %v3160 = vsel %vm3158, %v3159, %v3157
        %s3161 = sld [smem:[#allocation5 + $0x4]]
        %s3162 = sld [smem:[#allocation6 + $0x4]]
        %v3163 = vstv %s3162
        %v3164 = vmul.f32 %v3125, %v3163
        %v3165 = vmul.f32 %v3132, %v3163
        %v3166 = vmul.f32 %v3139, %v3163
        %v3167 = vmul.f32 %v3146, %v3163
        %v3168 = vmul.f32 %v3153, %v3163
        %v3169 = vmul.f32 %v3160, %v3163
        %v3170 = vstv %s3161
        %v3171 = vadd.f32 %v3170, %v3164
        %v3172 = vadd.f32 %v3170, %v3165
        %v3173 = vadd.f32 %v3170, %v3166
        %v3174 = vadd.f32 %v3170, %v3167
        %v3175 = vadd.f32 %v3170, %v3168
        %v3176 = vadd.f32 %v3170, %v3169
        %v3177 = vmul.f32 %v3089, %v3171
        %v3178 = vmul.f32 %v3090, %v3172
        %v3179 = vmul.f32 %v3091, %v3173
        %v3180 = vmul.f32 %v3092, %v3174
        %v3181 = vmul.f32 %v3093, %v3175
        %v3182 = vmul.f32 %v3094, %v3176
        %3189 = vrot.lane.b32.xlu0 %v3177, 4
        %v3190 = vpop.permute.xlu0 %3189
        %3191 = vrot.lane.b32.xlu0 %v3178, 4
        %v3192 = vpop.permute.xlu0 %3191
        %3193 = vrot.lane.b32.xlu0 %v3179, 4
        %v3194 = vpop.permute.xlu0 %3193
        %3195 = vrot.lane.b32.xlu0 %v3180, 4
        %v3196 = vpop.permute.xlu0 %3195
        %3197 = vrot.lane.b32.xlu0 %v3181, 4
        %v3198 = vpop.permute.xlu0 %3197
        %3199 = vrot.lane.b32.xlu0 %v3182, 4
        %v3200 = vpop.permute.xlu0 %3199
        %vm3201 = vcmask 31744
        %v3202 = vsel %vm3201, %v3190, %v3192
        %v3203 = vsel %vm3201, %v3194, %v3196
        %v3204 = vsel %vm3201, %v3198, %v3200
        %vm3208 = vcmask 523271
        %3209 = vst.msk [vmem:[%s224 - $0x7] sm:$0x80] %vm3208, %v3202
        %vm3210 = vcmask 523264
        %3211 = vst.msk [vmem:[%s224 + $0x1] sm:$0xff] %vm3210, %v3203
        %vm3212 = vcmask 522240
        %3213 = vst.msk [vmem:[%s224 + $0x9] sm:$0x7f] %vm3212, %v3204
      $region56: #{sauvola_multi_window.1} parent=31 // pred_fallthru
        _
      %p3214 = scmp.lt.s32.totalorder %s30, 1
      %s3215 = scalar_select %p3214, %s30, 1
      %p3216 = scmp.lt.s32.totalorder %s31, 4
      %s3217 = scalar_select %p3216, %s31, 4
      %s3218 = smul.addr %s3217, 2
      %s3219 = smul.addr %s3215, 10
      %s3220 = sadd.s32 %s3218, %s3219
      %s3221 = smul.addr %s3220, 8
      %s3222 = scalar_lea.vmem %s5, %s3221
      // Predicated region
      $region57: #{sauvola_multi_window.1} parent=31 // pred_check
        %p3223 = pneg %p131
      $region58: #{sauvola_multi_window.1} parent=31 // pred_check_branch
        %3225 = sbr.rel (%p3223) target = $region60
      $region59: #{sauvola_multi_window.1} parent=31 // pred_region
        _
      $region60: #{sauvola_multi_window.1} parent=31 // pred_fallthru
        _
    $region32: #{sauvola_multi_window.1} parent=5 // pred_fallthru
      _
    %p3226 = scmp.le.s32.totalorder 2, %s21
    // Predicated region
    $region61: #{sauvola_multi_window.1} parent=5 // pred_check
      %p3227 = pneg %p3226
    $region62: #{sauvola_multi_window.1} parent=5 // pred_check_branch
      %3229 = sbr.rel (%p3227) target = $region64
    $region63: #{sauvola_multi_window.1} parent=5 // pred_region
      %s3230 = ssub.s32 %s21, 2
      // Predicated region
      $region65: #{sauvola_multi_window.1} parent=63 // pred_check
        %p3231 = pneg %p137
      $region66: #{sauvola_multi_window.1} parent=63 // pred_check_branch
        %3233 = sbr.rel (%p3231) target = $region68
      $region67: #{sauvola_multi_window.1} parent=63 // pred_region
        %p3234 = scmp.lt.s32.totalorder %s32, 1
        %s3235 = scalar_select %p3234, %s32, 1
        %p3236 = scmp.lt.s32.totalorder %s33, 4
        %s3237 = scalar_select %p3236, %s33, 4
        %s3238 = smul.addr %s3237, 2
        %s3239 = smul.addr %s3235, 10
        %s3240 = sadd.s32 %s3238, %s3239
        %s3241 = smul.addr %s3240, 8
        %s3242 = scalar_lea.vmem %s5, %s3241
      $region68: #{sauvola_multi_window.1} parent=63 // pred_fallthru
        _
    $region64: #{sauvola_multi_window.1} parent=5 // pred_fallthru
      _
  $region6: #{sauvola_multi_window.1} parent=0 // loop_footer
    %s25 = sadd.s32 1, %s21
  $region7: #{sauvola_multi_window.1} parent=0 // loop_footer_branch
    %20 = sbr.rel target = $region3
  $region8: #{sauvola_multi_window.1} parent=0 // loop_exit
    _

</llo_original>
